<compile_context>
chip_gen: v5e
topology: v5e:2x2
jax: 0.10.0
libtpu: 0.0.40
codegen_flags: <defaults>
</compile_context>

<pallas_src>
import functools

import jax
import jax.numpy as jnp
from jax import lax
from jax.experimental import pallas as pl
from jax.experimental.pallas import tpu as pltpu

EPS = 1e-5
MXU_DTYPE = jnp.bfloat16   # MXU operand dtype (f32 accumulation)
ACT_DTYPE = jnp.bfloat16   # HBM dtype of intermediate activations y1/y2/y3


# ---------------------------------------------------------------------------
# small helpers
# ---------------------------------------------------------------------------
@functools.lru_cache(maxsize=None)
def _vmem_limit_bytes():
    cap = 128 * 1024 * 1024
    try:
        cap = int(pltpu.get_tpu_info().vmem_capacity_bytes)
    except Exception:
        pass
    if cap <= 64 * 1024 * 1024:        # v7x: 64 MiB physical -> leave headroom
        return (3 * cap) // 4
    return 64 * 1024 * 1024            # v5e / v6e: 128 MiB physical


def _compiler_params(grid_rank):
    return pltpu.CompilerParams(
        dimension_semantics=("parallel",) * grid_rank,
        vmem_limit_bytes=_vmem_limit_bytes(),
    )


def _row_tile(m, cin, cout, target=None):
    """Row-tile (multiple of 8) and grid length (cdiv) for (M, C) kernels."""
    if target is None:
        # HBM-bound kernels want multi-MiB blocks; aim ~2 MiB of f32 rows.
        target = max(1024, (2 * 1024 * 1024) // (4 * max(cin, cout, 1)))
    tm = min(target, m)
    if tm >= m:
        return m, 1                    # single full-extent block (always legal)
    tm = max(8, (tm // 8) * 8)         # sublane aligned
    return tm, pl.cdiv(m, tm)


def _h_block(h, w_img, target):
    """Largest divisor of H <= target whose flat row-block (TH*W) is 8-aligned."""
    t = min(target, h)
    for c in range(t, 0, -1):
        if h % c == 0 and (c * w_img) % 8 == 0:
            return c
    return h


def _emit_partial_stats(y, ps_ref):
    """Write per-tile (sum, sum of squares) of f32 y into a (1, 2, C) block."""
    s1 = jnp.sum(y, axis=0, keepdims=True)
    s2 = jnp.sum(y * y, axis=0, keepdims=True)
    ps_ref[...] = jnp.concatenate([s1, s2], axis=0)[None]


def _mask_tail_rows(y, m_total, tm):
    """Zero rows >= m_total (garbage from a partial last block) before stats."""
    rows = pl.program_id(0) * tm + lax.broadcasted_iota(jnp.int32, (tm, 1), 0)
    return jnp.where(rows < m_total, y, 0.0)


# ---------------------------------------------------------------------------
# kernels 1/3: conv1x1 (optionally preceded by folded BN+ReLU) + partial stats
# ---------------------------------------------------------------------------
def _conv1x1_stats_kernel(x_ref, w_ref, y_ref, ps_ref, *, m_total, tm):
    y = jnp.dot(x_ref[...].astype(MXU_DTYPE), w_ref[...],
                preferred_element_type=jnp.float32)
    y_ref[...] = y.astype(y_ref.dtype)
    if m_total % tm != 0:
        y = _mask_tail_rows(y, m_total, tm)
    _emit_partial_stats(y, ps_ref)


def _bnrelu_conv1x1_stats_kernel(x_ref, w_ref, s_ref, t_ref, y_ref, ps_ref,
                                 *, m_total, tm):
    x = jnp.maximum(x_ref[...].astype(jnp.float32) * s_ref[...] + t_ref[...], 0.0)
    y = jnp.dot(x.astype(MXU_DTYPE), w_ref[...],
                preferred_element_type=jnp.float32)
    y_ref[...] = y.astype(y_ref.dtype)
    if m_total % tm != 0:
        y = _mask_tail_rows(y, m_total, tm)
    _emit_partial_stats(y, ps_ref)


def conv1x1_stats(x_flat, w, scale=None, shift=None, *, tm_target=None):
    """y = [bn_relu](x) @ w, row-tiled; returns (bf16 y, per-tile stats)."""
    M, Cin = x_flat.shape
    Cout = w.shape[-1]
    tm, num_tiles = _row_tile(M, Cin, Cout, tm_target)
    pre = scale is not None

    in_specs = [pl.BlockSpec((tm, Cin), lambda i: (i, 0)),
                pl.BlockSpec((Cin, Cout), lambda i: (0, 0))]
    args = [x_flat, w.astype(MXU_DTYPE)]
    if pre:
        in_specs += [pl.BlockSpec((1, Cin), lambda i: (0, 0)),
                     pl.BlockSpec((1, Cin), lambda i: (0, 0))]
        args += [scale, shift]

    kernel = functools.partial(
        _bnrelu_conv1x1_stats_kernel if pre else _conv1x1_stats_kernel,
        m_total=M, tm=tm)

    cost = pl.CostEstimate(
        flops=2 * M * Cin * Cout, transcendentals=0,
        bytes_accessed=M * (4 * Cin + 2 * Cout) + 2 * Cin * Cout)

    # TODO(synk): bump x_flat's BlockSpec to pipeline_mode=pl.Buffered(3) if
    # DMAs remain exposed at large M.
    y, ps = pl.pallas_call(
        kernel,
        out_shape=(jax.ShapeDtypeStruct((M, Cout), ACT_DTYPE),
                   jax.ShapeDtypeStruct((num_tiles, 2, Cout), jnp.float32)),
        grid=(num_tiles,),
        in_specs=in_specs,
        out_specs=(pl.BlockSpec((tm, Cout), lambda i: (i, 0)),
                   pl.BlockSpec((1, 2, Cout), lambda i: (i, 0, 0))),
        compiler_params=_compiler_params(1),
        cost_estimate=cost,
    )(*args)
    return y, ps


# ---------------------------------------------------------------------------
# kernel 2: folded BN+ReLU -> conv3x3 (pad=1, stride=1) via im2col matmul
# ---------------------------------------------------------------------------
def _bnrelu_conv3x3_stats_kernel(top_ref, mid_ref, bot_ref, w_ref, s_ref, t_ref,
                                 y_ref, ps_ref, xp_ref, *, th, wd, nh):
    cin = s_ref.shape[-1]
    j = pl.program_id(1)
    s = s_ref[...]
    t = t_ref[...]

    def bn_relu(v):
        return jnp.maximum(v.astype(jnp.float32) * s + t, 0.0)

    x_mid = bn_relu(mid_ref[...][0])                     # (TH, W, Cin) f32
    x_top = bn_relu(top_ref[...][0])                     # (1,  W, Cin)
    x_bot = bn_relu(bot_ref[...][0])                     # (1,  W, Cin)
    x_top = jnp.where(j == 0, 0.0, x_top)                # image top boundary
    x_bot = jnp.where(j == nh - 1, 0.0, x_bot)           # image bottom boundary

    # Halo buffer: zero only the 1-px border columns; interior + halo rows are
    # fully rewritten every step (safe under "parallel" semantics).
    zcol = jnp.zeros((th + 2, 1, cin), jnp.float32)
    xp_ref[:, 0:1, :] = zcol
    xp_ref[:, wd + 1:wd + 2, :] = zcol
    xp_ref[0:1, 1:wd + 1, :] = x_top
    xp_ref[th + 1:th + 2, 1:wd + 1, :] = x_bot
    xp_ref[1:th + 1, 1:wd + 1, :] = x_mid

    # im2col: 9 shifted taps -> one (TH*W, 9*Cin) bf16 operand, one MXU matmul.
    taps = []
    for kh in range(3):
        for kw in range(3):
            taps.append(xp_ref[kh:kh + th, kw:kw + wd, :]
                        .reshape(th * wd, cin).astype(MXU_DTYPE))
    patches = jnp.concatenate(taps, axis=1)              # (TH*W, 9*Cin)
    y = jnp.dot(patches, w_ref[...], preferred_element_type=jnp.float32)

    y_ref[...] = y.astype(y_ref.dtype)                   # flat (TH*W, Cout)
    _emit_partial_stats(y, ps_ref)


def conv3x3_stats(x_flat, w, scale, shift, *, n, h, w_img, th_target=8):
    """3x3 / stride 1 / pad 1 conv of bn_relu(x); grid over (batch, H-blocks)."""
    cin = x_flat.shape[-1]
    cout = w.shape[-1]
    x = x_flat.reshape(n, h, w_img, cin)
    th = _h_block(h, w_img, th_target)
    nh = h // th
    M = n * h * w_img

    kernel = functools.partial(_bnrelu_conv3x3_stats_kernel, th=th, wd=w_img, nh=nh)
    cost = pl.CostEstimate(
        flops=2 * 9 * M * cin * cout, transcendentals=0,
        bytes_accessed=2 * M * (cin + cout) + 2 * 9 * cin * cout)

    y, ps = pl.pallas_call(
        kernel,
        out_shape=(jax.ShapeDtypeStruct((M, cout), ACT_DTYPE),
                   jax.ShapeDtypeStruct((n * nh, 2, cout), jnp.float32)),
        grid=(n, nh),
        in_specs=[
            # 1-row halo above (clamped; masked in-kernel at the image top)
            pl.BlockSpec((1, 1, w_img, cin),
                         lambda bi, bj: (bi, jnp.maximum(bj * th - 1, 0), 0, 0)),
            # the TH-row block itself
            pl.BlockSpec((1, th, w_img, cin), lambda bi, bj: (bi, bj, 0, 0)),
            # 1-row halo below (clamped; masked in-kernel at the image bottom)
            pl.BlockSpec((1, 1, w_img, cin),
                         lambda bi, bj: (bi, jnp.minimum(bj * th + th, h - 1), 0, 0)),
            pl.BlockSpec((9 * cin, cout), lambda bi, bj: (0, 0)),
            pl.BlockSpec((1, cin), lambda bi, bj: (0, 0)),
            pl.BlockSpec((1, cin), lambda bi, bj: (0, 0)),
        ],
        out_specs=(pl.BlockSpec((th * w_img, cout), lambda bi, bj: (bi * nh + bj, 0)),
                   pl.BlockSpec((1, 2, cout), lambda bi, bj: (bi * nh + bj, 0, 0))),
        scratch_shapes=[pltpu.VMEM((th + 2, w_img + 2, cin), jnp.float32)],
        compiler_params=_compiler_params(2),
        cost_estimate=cost,
    )(x, x, x, w.reshape(9 * cin, cout).astype(MXU_DTYPE), scale, shift)
    return y, ps


# ---------------------------------------------------------------------------
# kernel 4: folded BN3 + residual add + ReLU (elementwise epilogue)
# ---------------------------------------------------------------------------
def _bn_add_relu_kernel(y_ref, id_ref, s_ref, t_ref, o_ref):
    o_ref[...] = jnp.maximum(
        y_ref[...].astype(jnp.float32) * s_ref[...] + t_ref[...] + id_ref[...], 0.0)


def bn_add_relu(y_flat, identity_flat, scale, shift, *, tm_target=None):
    M, C = y_flat.shape
    tm, num_tiles = _row_tile(M, C, C, tm_target)
    cost = pl.CostEstimate(flops=3 * M * C, transcendentals=0,
                           bytes_accessed=(2 + 4 + 4) * M * C)
    return pl.pallas_call(
        _bn_add_relu_kernel,
        out_shape=jax.ShapeDtypeStruct((M, C), jnp.float32),
        grid=(num_tiles,),
        in_specs=[pl.BlockSpec((tm, C), lambda i: (i, 0)),
                  pl.BlockSpec((tm, C), lambda i: (i, 0)),
                  pl.BlockSpec((1, C), lambda i: (0, 0)),
                  pl.BlockSpec((1, C), lambda i: (0, 0))],
        out_specs=pl.BlockSpec((tm, C), lambda i: (i, 0)),
        compiler_params=_compiler_params(1),
        cost_estimate=cost,
    )(y_flat, identity_flat, scale, shift)


# ---------------------------------------------------------------------------
# BN statistics finalization / affine fold (tiny (2,C) work, plain JAX)
# ---------------------------------------------------------------------------
def _fold_bn(ps, m_total, gamma, beta):
    s1 = jnp.sum(ps[:, 0, :], axis=0)
    s2 = jnp.sum(ps[:, 1, :], axis=0)
    mu = s1 / m_total
    var = s2 / m_total - mu * mu
    scale = gamma.reshape(-1) * lax.rsqrt(var + EPS)
    shift = beta.reshape(-1) - mu * scale
    return scale.reshape(1, -1), shift.reshape(1, -1)


# ---------------------------------------------------------------------------
# Bottleneck forward (glue + Pallas kernels)
# ---------------------------------------------------------------------------
def bottleneck_forward(x_nchw, params, *, tm_target=None, th_target=8):
    N, Cin, H, W = x_nchw.shape
    width = params["w1"].shape[1]
    cout = params["w3"].shape[1]
    assert cout == Cin, "identity residual requires inplanes == planes*expansion"

    M = N * H * W
    x_flat = jnp.transpose(x_nchw, (0, 2, 3, 1)).reshape(M, Cin)   # NHWC rows

    # stage 1: conv1 (1x1) + BN1 partial stats
    y1, ps1 = conv1x1_stats(x_flat, params["w1"], tm_target=tm_target)
    s1, t1 = _fold_bn(ps1, M, params["g1"], params["b1"])

    # stage 2: BN1+ReLU folded into conv2 (3x3, im2col matmul) + BN2 stats
    y2, ps2 = conv3x3_stats(y1, params["w2"], s1, t1,
                            n=N, h=H, w_img=W, th_target=th_target)
    s2, t2 = _fold_bn(ps2, M, params["g2"], params["b2"])

    # stage 3: BN2+ReLU folded into conv3 (1x1) + BN3 partial stats
    y3, ps3 = conv1x1_stats(y2, params["w3"], s2, t2, tm_target=tm_target)
    s3, t3 = _fold_bn(ps3, M, params["g3"], params["b3"])

    # stage 4: BN3 + residual add + ReLU
    out = bn_add_relu(y3, x_flat, s3, t3, tm_target=tm_target)
    return jnp.transpose(out.reshape(N, H, W, cout), (0, 3, 1, 2))  # -> NCHW


# ---------------------------------------------------------------------------
# pure-JAX reference (same precision policy -> tight self-check)
# ---------------------------------------------------------------------------
def bottleneck_reference(x_nchw, params):
    dn = ("NHWC", "HWIO", "NHWC")

    def conv(h, w, padding):
        return lax.conv_general_dilated(
            h.astype(MXU_DTYPE), w.astype(MXU_DTYPE), (1, 1), padding,
            dimension_numbers=dn, preferred_element_type=jnp.float32)

    def fold(y, gamma, beta):
        mu = jnp.mean(y, axis=(0, 1, 2))
        var = jnp.mean(y * y, axis=(0, 1, 2)) - mu * mu
        scale = gamma.reshape(-1) * lax.rsqrt(var + EPS)
        shift = beta.reshape(-1) - mu * scale
        return scale, shift

    def quant(y):                       # intermediates live in HBM as bf16
        return y.astype(ACT_DTYPE).astype(jnp.float32)

    x = jnp.transpose(x_nchw, (0, 2, 3, 1))
    y1 = conv(x, params["w1"][None, None], "VALID")
    s1, t1 = fold(y1, params["g1"], params["b1"])
    h1 = jnp.maximum(quant(y1) * s1 + t1, 0.0)
    y2 = conv(h1, params["w2"], "SAME")
    s2, t2 = fold(y2, params["g2"], params["b2"])
    h2 = jnp.maximum(quant(y2) * s2 + t2, 0.0)
    y3 = conv(h2, params["w3"][None, None], "VALID")
    s3, t3 = fold(y3, params["g3"], params["b3"])
    out = jnp.maximum(quant(y3) * s3 + t3 + x, 0.0)
    return jnp.transpose(out, (0, 3, 1, 2))


# ---------------------------------------------------------------------------
def make_params(key, inplanes, planes, base_width=64, groups=1):
    expansion = 4
    width = int(planes * (base_width / 64.0)) * groups
    cout = planes * expansion
    ks = jax.random.split(key, 9)
    return {
        # conv weights stored in matmul layout: (Cin, Cout) / (3,3,Cin,Cout)
        "w1": 0.1 * jax.random.normal(ks[0], (inplanes, width), jnp.float32),
        "w2": 0.1 * jax.random.normal(ks[1], (3, 3, width, width), jnp.float32),
        "w3": 0.1 * jax.random.normal(ks[2], (width, cout), jnp.float32),
        "g1": 1.0 + 0.1 * jax.random.normal(ks[3], (1, width), jnp.float32),
        "b1": 0.1 * jax.random.normal(ks[4], (1, width), jnp.float32),
        "g2": 1.0 + 0.1 * jax.random.normal(ks[5], (1, width), jnp.float32),
        "b2": 0.1 * jax.random.normal(ks[6], (1, width), jnp.float32),
        "g3": 1.0 + 0.1 * jax.random.normal(ks[7], (1, cout), jnp.float32),
        "b3": 0.1 * jax.random.normal(ks[8], (1, cout), jnp.float32),
    }


if __name__ == "__main__":
    # Bottleneck(inplanes=16, planes=4): width=4, out channels=16, stride=1,
    # downsample=None (identity residual is valid).
    N, inplanes, planes, H, W = 2, 16, 4, 16, 16
    key = jax.random.PRNGKey(0)
    kx, kp = jax.random.split(key)
    x = jax.random.normal(kx, (N, inplanes, H, W), jnp.float32)   # NCHW
    params = make_params(kp, inplanes, planes)

    # Small tiles so the demo exercises multi-step grids (M=512 -> 4 row tiles;
    # conv3x3 grid (N=2, H/TH=2)).  At real sizes use the auto defaults.
    fwd = jax.jit(functools.partial(bottleneck_forward, tm_target=128, th_target=8))
    out = jax.block_until_ready(fwd(x, params))
    ref = jax.block_until_ready(bottleneck_reference(x, params))

    assert out.shape == (N, planes * 4, H, W)
    max_err = float(jnp.max(jnp.abs(out - ref)))
    assert jnp.allclose(out, ref, rtol=2e-3, atol=2e-3), max_err
    print("KERNEL_OK")
</pallas_src>

<mosaic_0001>
module attributes {stable_mosaic.version = 11 : i64} {
  func.func @_conv1x1_stats_kernel(%arg0: i32, %arg1: memref<128x16xf32, #tpu.memory_space<vmem>>, %arg2: memref<16x4xbf16, #tpu.memory_space<vmem>>, %arg3: memref<128x4xbf16, #tpu.memory_space<vmem>>, %arg4: memref<1x2x4xf32, #tpu.memory_space<vmem>>) attributes {dimension_semantics = [#tpu.dimension_semantics<parallel>], iteration_bounds = array<i64: 4>, scalar_prefetch = 0 : i64, scratch_operands = 0 : i64, tpu.core_type = #tpu.core_type<tc>, window_params = [{transform_indices = @transform_0, window_bounds = array<i64: 128, 16>}, {pipeline_mode = #tpu.pipeline_mode<synchronous>, transform_indices = @transform_1, window_bounds = array<i64: 16, 4>}, {transform_indices = @transform_2, window_bounds = array<i64: 128, 4>}, {transform_indices = @transform_3, window_bounds = array<i64: 1, 2, 4>}]} {
    %c0 = arith.constant 0 : index
    %c0_0 = arith.constant 0 : index
    %0 = vector.load %arg1[%c0, %c0_0] : memref<128x16xf32, #tpu.memory_space<vmem>>, vector<128x16xf32>
    %1 = arith.truncf %0 : vector<128x16xf32> to vector<128x16xbf16>
    %c0_1 = arith.constant 0 : index
    %c0_2 = arith.constant 0 : index
    %2 = vector.load %arg2[%c0_1, %c0_2] : memref<16x4xbf16, #tpu.memory_space<vmem>>, vector<16x4xbf16>
    %cst = arith.constant dense<0.000000e+00> : vector<128x4xf32>
    %3 = tpu.matmul %1, %2, %cst {dimension_numbers = #tpu.dot_dimension_numbers<[1], [0], [0], [1], [0, 0, 1, 1], [], []>} : vector<128x16xbf16>, vector<16x4xbf16>, vector<128x4xf32> -> vector<128x4xf32>
    %4 = arith.truncf %3 : vector<128x4xf32> to vector<128x4xbf16>
    %c0_3 = arith.constant 0 : index
    %c0_4 = arith.constant 0 : index
    %5 = vector.load %arg3[%c0_3, %c0_4] : memref<128x4xbf16, #tpu.memory_space<vmem>>, vector<128x4xbf16>
    tpu.vector_store %arg3[%c0_3, %c0_4], %4 {strides = array<i32>} : memref<128x4xbf16, #tpu.memory_space<vmem>>, vector<128x4xbf16>,
    %cst_5 = arith.constant dense<0.000000e+00> : vector<4xf32>
    %6 = vector.multi_reduction <add>, %3, %cst_5 [0] : vector<128x4xf32> to vector<4xf32>
    %7 = vector.shape_cast %6 : vector<4xf32> to vector<1x4xf32>
    %8 = arith.mulf %3, %3 : vector<128x4xf32>
    %cst_6 = arith.constant dense<0.000000e+00> : vector<4xf32>
    %9 = vector.multi_reduction <add>, %8, %cst_6 [0] : vector<128x4xf32> to vector<4xf32>
    %10 = vector.shape_cast %9 : vector<4xf32> to vector<1x4xf32>
    %11 = tpu.concatenate %7, %10 in 0 : vector<1x4xf32>, vector<1x4xf32> -> vector<2x4xf32>
    %12 = vector.shape_cast %11 : vector<2x4xf32> to vector<1x2x4xf32>
    %c0_7 = arith.constant 0 : index
    %c0_8 = arith.constant 0 : index
    %c0_9 = arith.constant 0 : index
    %13 = vector.load %arg4[%c0_7, %c0_8, %c0_9] : memref<1x2x4xf32, #tpu.memory_space<vmem>>, vector<1x2x4xf32>
    tpu.vector_store %arg4[%c0_7, %c0_8, %c0_9], %12 {strides = array<i32>} : memref<1x2x4xf32, #tpu.memory_space<vmem>>, vector<1x2x4xf32>,
    return
  }
  func.func @transform_0(%arg0: i32) -> (i32, i32) {
    %c0_i32 = arith.constant 0 : i32
    %c0_i32_0 = arith.constant 0 : i32
    return %arg0, %c0_i32 : i32, i32
  }
  func.func @transform_1(%arg0: i32) -> (i32, i32) {
    %c0_i32 = arith.constant 0 : i32
    %c0_i32_0 = arith.constant 0 : i32
    %c0_i32_1 = arith.constant 0 : i32
    return %c0_i32, %c0_i32_0 : i32, i32
  }
  func.func @transform_2(%arg0: i32) -> (i32, i32) {
    %c0_i32 = arith.constant 0 : i32
    %c0_i32_0 = arith.constant 0 : i32
    return %arg0, %c0_i32 : i32, i32
  }
  func.func @transform_3(%arg0: i32) -> (i32, i32, i32) {
    %c0_i32 = arith.constant 0 : i32
    %c0_i32_0 = arith.constant 0 : i32
    %c0_i32_1 = arith.constant 0 : i32
    return %arg0, %c0_i32, %c0_i32_0 : i32, i32, i32
  }
}

module attributes {stable_mosaic.version = 11 : i64} {
  func.func @_bnrelu_conv1x1_stats_kernel(%arg0: i32, %arg1: memref<128x4xbf16, #tpu.memory_space<vmem>>, %arg2: memref<4x16xbf16, #tpu.memory_space<vmem>>, %arg3: memref<1x4xf32, #tpu.memory_space<vmem>>, %arg4: memref<1x4xf32, #tpu.memory_space<vmem>>, %arg5: memref<128x16xbf16, #tpu.memory_space<vmem>>, %arg6: memref<1x2x16xf32, #tpu.memory_space<vmem>>) attributes {dimension_semantics = [#tpu.dimension_semantics<parallel>], iteration_bounds = array<i64: 4>, scalar_prefetch = 0 : i64, scratch_operands = 0 : i64, tpu.core_type = #tpu.core_type<tc>, window_params = [{transform_indices = @transform_0, window_bounds = array<i64: 128, 4>}, {pipeline_mode = #tpu.pipeline_mode<synchronous>, transform_indices = @transform_1, window_bounds = array<i64: 4, 16>}, {pipeline_mode = #tpu.pipeline_mode<synchronous>, transform_indices = @transform_2, window_bounds = array<i64: 1, 4>}, {pipeline_mode = #tpu.pipeline_mode<synchronous>, transform_indices = @transform_3, window_bounds = array<i64: 1, 4>}, {transform_indices = @transform_4, window_bounds = array<i64: 128, 16>}, {transform_indices = @transform_5, window_bounds = array<i64: 1, 2, 16>}]} {
    %c0 = arith.constant 0 : index
    %c0_0 = arith.constant 0 : index
    %0 = vector.load %arg1[%c0, %c0_0] : memref<128x4xbf16, #tpu.memory_space<vmem>>, vector<128x4xbf16>
    %1 = arith.extf %0 : vector<128x4xbf16> to vector<128x4xf32>
    %c0_1 = arith.constant 0 : index
    %c0_2 = arith.constant 0 : index
    %2 = vector.load %arg3[%c0_1, %c0_2] : memref<1x4xf32, #tpu.memory_space<vmem>>, vector<1x4xf32>
    %3 = vector.broadcast %2 : vector<1x4xf32> to vector<128x4xf32>
    %4 = arith.mulf %1, %3 : vector<128x4xf32>
    %c0_3 = arith.constant 0 : index
    %c0_4 = arith.constant 0 : index
    %5 = vector.load %arg4[%c0_3, %c0_4] : memref<1x4xf32, #tpu.memory_space<vmem>>, vector<1x4xf32>
    %6 = vector.broadcast %5 : vector<1x4xf32> to vector<128x4xf32>
    %7 = arith.addf %4, %6 : vector<128x4xf32>
    %cst = arith.constant 0.000000e+00 : f32
    %8 = vector.broadcast %cst : f32 to vector<128x4xf32>
    %9 = arith.maximumf %7, %8 : vector<128x4xf32>
    %10 = arith.truncf %9 : vector<128x4xf32> to vector<128x4xbf16>
    %c0_5 = arith.constant 0 : index
    %c0_6 = arith.constant 0 : index
    %11 = vector.load %arg2[%c0_5, %c0_6] : memref<4x16xbf16, #tpu.memory_space<vmem>>, vector<4x16xbf16>
    %cst_7 = arith.constant dense<0.000000e+00> : vector<128x16xf32>
    %12 = tpu.matmul %10, %11, %cst_7 {dimension_numbers = #tpu.dot_dimension_numbers<[1], [0], [0], [1], [0, 0, 1, 1], [], []>} : vector<128x4xbf16>, vector<4x16xbf16>, vector<128x16xf32> -> vector<128x16xf32>
    %13 = arith.truncf %12 : vector<128x16xf32> to vector<128x16xbf16>
    %c0_8 = arith.constant 0 : index
    %c0_9 = arith.constant 0 : index
    %14 = vector.load %arg5[%c0_8, %c0_9] : memref<128x16xbf16, #tpu.memory_space<vmem>>, vector<128x16xbf16>
    tpu.vector_store %arg5[%c0_8, %c0_9], %13 {strides = array<i32>} : memref<128x16xbf16, #tpu.memory_space<vmem>>, vector<128x16xbf16>,
    %cst_10 = arith.constant dense<0.000000e+00> : vector<16xf32>
    %15 = vector.multi_reduction <add>, %12, %cst_10 [0] : vector<128x16xf32> to vector<16xf32>
    %16 = vector.shape_cast %15 : vector<16xf32> to vector<1x16xf32>
    %17 = arith.mulf %12, %12 : vector<128x16xf32>
    %cst_11 = arith.constant dense<0.000000e+00> : vector<16xf32>
    %18 = vector.multi_reduction <add>, %17, %cst_11 [0] : vector<128x16xf32> to vector<16xf32>
    %19 = vector.shape_cast %18 : vector<16xf32> to vector<1x16xf32>
    %20 = tpu.concatenate %16, %19 in 0 : vector<1x16xf32>, vector<1x16xf32> -> vector<2x16xf32>
    %21 = vector.shape_cast %20 : vector<2x16xf32> to vector<1x2x16xf32>
    %c0_12 = arith.constant 0 : index
    %c0_13 = arith.constant 0 : index
    %c0_14 = arith.constant 0 : index
    %22 = vector.load %arg6[%c0_12, %c0_13, %c0_14] : memref<1x2x16xf32, #tpu.memory_space<vmem>>, vector<1x2x16xf32>
    tpu.vector_store %arg6[%c0_12, %c0_13, %c0_14], %21 {strides = array<i32>} : memref<1x2x16xf32, #tpu.memory_space<vmem>>, vector<1x2x16xf32>,
    return
  }
  func.func @transform_0(%arg0: i32) -> (i32, i32) {
    %c0_i32 = arith.constant 0 : i32
    %c0_i32_0 = arith.constant 0 : i32
    return %arg0, %c0_i32 : i32, i32
  }
  func.func @transform_1(%arg0: i32) -> (i32, i32) {
    %c0_i32 = arith.constant 0 : i32
    %c0_i32_0 = arith.constant 0 : i32
    %c0_i32_1 = arith.constant 0 : i32
    return %c0_i32, %c0_i32_0 : i32, i32
  }
  func.func @transform_2(%arg0: i32) -> (i32, i32) {
    %c0_i32 = arith.constant 0 : i32
    %c0_i32_0 = arith.constant 0 : i32
    %c0_i32_1 = arith.constant 0 : i32
    return %c0_i32, %c0_i32_0 : i32, i32
  }
  func.func @transform_3(%arg0: i32) -> (i32, i32) {
    %c0_i32 = arith.constant 0 : i32
    %c0_i32_0 = arith.constant 0 : i32
    %c0_i32_1 = arith.constant 0 : i32
    return %c0_i32, %c0_i32_0 : i32, i32
  }
  func.func @transform_4(%arg0: i32) -> (i32, i32) {
    %c0_i32 = arith.constant 0 : i32
    %c0_i32_0 = arith.constant 0 : i32
    return %arg0, %c0_i32 : i32, i32
  }
  func.func @transform_5(%arg0: i32) -> (i32, i32, i32) {
    %c0_i32 = arith.constant 0 : i32
    %c0_i32_0 = arith.constant 0 : i32
    %c0_i32_1 = arith.constant 0 : i32
    return %arg0, %c0_i32, %c0_i32_0 : i32, i32, i32
  }
}

module attributes {stable_mosaic.version = 11 : i64} {
  func.func @_bnrelu_conv3x3_stats_kernel(%arg0: i32, %arg1: i32, %arg2: memref<1x1x16x4xbf16, #tpu.memory_space<vmem>>, %arg3: memref<1x8x16x4xbf16, #tpu.memory_space<vmem>>, %arg4: memref<1x1x16x4xbf16, #tpu.memory_space<vmem>>, %arg5: memref<36x4xbf16, #tpu.memory_space<vmem>>, %arg6: memref<1x4xf32, #tpu.memory_space<vmem>>, %arg7: memref<1x4xf32, #tpu.memory_space<vmem>>, %arg8: memref<128x4xbf16, #tpu.memory_space<vmem>>, %arg9: memref<1x2x4xf32, #tpu.memory_space<vmem>>, %arg10: memref<10x18x4xf32, #tpu.memory_space<vmem>>) attributes {dimension_semantics = [#tpu.dimension_semantics<parallel>, #tpu.dimension_semantics<parallel>], iteration_bounds = array<i64: 2, 2>, scalar_prefetch = 0 : i64, scratch_operands = 1 : i64, tpu.core_type = #tpu.core_type<tc>, window_params = [{transform_indices = @transform_0, window_bounds = array<i64: 1, 1, 16, 4>}, {transform_indices = @transform_1, window_bounds = array<i64: 1, 8, 16, 4>}, {transform_indices = @transform_2, window_bounds = array<i64: 1, 1, 16, 4>}, {pipeline_mode = #tpu.pipeline_mode<synchronous>, transform_indices = @transform_3, window_bounds = array<i64: 36, 4>}, {pipeline_mode = #tpu.pipeline_mode<synchronous>, transform_indices = @transform_4, window_bounds = array<i64: 1, 4>}, {pipeline_mode = #tpu.pipeline_mode<synchronous>, transform_indices = @transform_5, window_bounds = array<i64: 1, 4>}, {transform_indices = @transform_6, window_bounds = array<i64: 128, 4>}, {transform_indices = @transform_7, window_bounds = array<i64: 1, 2, 4>}]} {
    %c0 = arith.constant 0 : index
    %c0_0 = arith.constant 0 : index
    %0 = vector.load %arg6[%c0, %c0_0] : memref<1x4xf32, #tpu.memory_space<vmem>>, vector<1x4xf32>
    %c0_1 = arith.constant 0 : index
    %c0_2 = arith.constant 0 : index
    %1 = vector.load %arg7[%c0_1, %c0_2] : memref<1x4xf32, #tpu.memory_space<vmem>>, vector<1x4xf32>
    %c0_3 = arith.constant 0 : index
    %c0_4 = arith.constant 0 : index
    %c0_5 = arith.constant 0 : index
    %c0_6 = arith.constant 0 : index
    %2 = vector.load %arg3[%c0_3, %c0_4, %c0_5, %c0_6] : memref<1x8x16x4xbf16, #tpu.memory_space<vmem>>, vector<1x8x16x4xbf16>
    %3 = vector.shape_cast %2 : vector<1x8x16x4xbf16> to vector<8x16x4xbf16>
    %4 = arith.extf %3 : vector<8x16x4xbf16> to vector<8x16x4xf32>
    %5 = vector.shape_cast %0 : vector<1x4xf32> to vector<1x1x4xf32>
    %6 = vector.broadcast %5 : vector<1x1x4xf32> to vector<8x16x4xf32>
    %7 = arith.mulf %4, %6 : vector<8x16x4xf32>
    %8 = vector.shape_cast %1 : vector<1x4xf32> to vector<1x1x4xf32>
    %9 = vector.broadcast %8 : vector<1x1x4xf32> to vector<8x16x4xf32>
    %10 = arith.addf %7, %9 : vector<8x16x4xf32>
    %cst = arith.constant 0.000000e+00 : f32
    %11 = vector.broadcast %cst : f32 to vector<8x16x4xf32>
    %12 = arith.maximumf %10, %11 : vector<8x16x4xf32>
    %c0_7 = arith.constant 0 : index
    %c0_8 = arith.constant 0 : index
    %c0_9 = arith.constant 0 : index
    %c0_10 = arith.constant 0 : index
    %13 = vector.load %arg2[%c0_7, %c0_8, %c0_9, %c0_10] : memref<1x1x16x4xbf16, #tpu.memory_space<vmem>>, vector<1x1x16x4xbf16>
    %14 = vector.shape_cast %13 : vector<1x1x16x4xbf16> to vector<1x16x4xbf16>
    %15 = arith.extf %14 : vector<1x16x4xbf16> to vector<1x16x4xf32>
    %16 = vector.shape_cast %0 : vector<1x4xf32> to vector<1x1x4xf32>
    %17 = vector.broadcast %16 : vector<1x1x4xf32> to vector<1x16x4xf32>
    %18 = arith.mulf %15, %17 : vector<1x16x4xf32>
    %19 = vector.shape_cast %1 : vector<1x4xf32> to vector<1x1x4xf32>
    %20 = vector.broadcast %19 : vector<1x1x4xf32> to vector<1x16x4xf32>
    %21 = arith.addf %18, %20 : vector<1x16x4xf32>
    %cst_11 = arith.constant 0.000000e+00 : f32
    %22 = vector.broadcast %cst_11 : f32 to vector<1x16x4xf32>
    %23 = arith.maximumf %21, %22 : vector<1x16x4xf32>
    %c0_12 = arith.constant 0 : index
    %c0_13 = arith.constant 0 : index
    %c0_14 = arith.constant 0 : index
    %c0_15 = arith.constant 0 : index
    %24 = vector.load %arg4[%c0_12, %c0_13, %c0_14, %c0_15] : memref<1x1x16x4xbf16, #tpu.memory_space<vmem>>, vector<1x1x16x4xbf16>
    %25 = vector.shape_cast %24 : vector<1x1x16x4xbf16> to vector<1x16x4xbf16>
    %26 = arith.extf %25 : vector<1x16x4xbf16> to vector<1x16x4xf32>
    %27 = vector.shape_cast %0 : vector<1x4xf32> to vector<1x1x4xf32>
    %28 = vector.broadcast %27 : vector<1x1x4xf32> to vector<1x16x4xf32>
    %29 = arith.mulf %26, %28 : vector<1x16x4xf32>
    %30 = vector.shape_cast %1 : vector<1x4xf32> to vector<1x1x4xf32>
    %31 = vector.broadcast %30 : vector<1x1x4xf32> to vector<1x16x4xf32>
    %32 = arith.addf %29, %31 : vector<1x16x4xf32>
    %cst_16 = arith.constant 0.000000e+00 : f32
    %33 = vector.broadcast %cst_16 : f32 to vector<1x16x4xf32>
    %34 = arith.maximumf %32, %33 : vector<1x16x4xf32>
    %c0_i32 = arith.constant 0 : i32
    %35 = arith.cmpi eq, %arg1, %c0_i32 : i32
    %cst_17 = arith.constant 0.000000e+00 : f32
    %36 = vector.broadcast %cst_17 : f32 to vector<1x16x4xf32>
    %37 = arith.select %35, %36, %23 : vector<1x16x4xf32>
    %c1_i32 = arith.constant 1 : i32
    %38 = arith.cmpi eq, %arg1, %c1_i32 : i32
    %cst_18 = arith.constant 0.000000e+00 : f32
    %39 = vector.broadcast %cst_18 : f32 to vector<1x16x4xf32>
    %40 = arith.select %38, %39, %34 : vector<1x16x4xf32>
    %cst_19 = arith.constant 0.000000e+00 : f32
    %41 = vector.broadcast %cst_19 : f32 to vector<10x1x4xf32>
    %c0_20 = arith.constant 0 : index
    %c0_21 = arith.constant 0 : index
    %c0_22 = arith.constant 0 : index
    %42 = vector.load %arg10[%c0_20, %c0_21, %c0_22] : memref<10x18x4xf32, #tpu.memory_space<vmem>>, vector<10x1x4xf32>
    tpu.vector_store %arg10[%c0_20, %c0_21, %c0_22], %41 {strides = array<i32>} : memref<10x18x4xf32, #tpu.memory_space<vmem>>, vector<10x1x4xf32>,
    %c0_23 = arith.constant 0 : index
    %c17 = arith.constant 17 : index
    %c0_24 = arith.constant 0 : index
    %43 = vector.load %arg10[%c0_23, %c17, %c0_24] : memref<10x18x4xf32, #tpu.memory_space<vmem>>, vector<10x1x4xf32>
    tpu.vector_store %arg10[%c0_23, %c17, %c0_24], %41 {strides = array<i32>} : memref<10x18x4xf32, #tpu.memory_space<vmem>>, vector<10x1x4xf32>,
    %c0_25 = arith.constant 0 : index
    %c1 = arith.constant 1 : index
    %c0_26 = arith.constant 0 : index
    %44 = vector.load %arg10[%c0_25, %c1, %c0_26] : memref<10x18x4xf32, #tpu.memory_space<vmem>>, vector<1x16x4xf32>
    tpu.vector_store %arg10[%c0_25, %c1, %c0_26], %37 {strides = array<i32>} : memref<10x18x4xf32, #tpu.memory_space<vmem>>, vector<1x16x4xf32>,
    %c9 = arith.constant 9 : index
    %c1_27 = arith.constant 1 : index
    %c0_28 = arith.constant 0 : index
    %45 = vector.load %arg10[%c9, %c1_27, %c0_28] : memref<10x18x4xf32, #tpu.memory_space<vmem>>, vector<1x16x4xf32>
    tpu.vector_store %arg10[%c9, %c1_27, %c0_28], %40 {strides = array<i32>} : memref<10x18x4xf32, #tpu.memory_space<vmem>>, vector<1x16x4xf32>,
    %c1_29 = arith.constant 1 : index
    %c1_30 = arith.constant 1 : index
    %c0_31 = arith.constant 0 : index
    %46 = vector.load %arg10[%c1_29, %c1_30, %c0_31] : memref<10x18x4xf32, #tpu.memory_space<vmem>>, vector<8x16x4xf32>
    tpu.vector_store %arg10[%c1_29, %c1_30, %c0_31], %12 {strides = array<i32>} : memref<10x18x4xf32, #tpu.memory_space<vmem>>, vector<8x16x4xf32>,
    %c0_32 = arith.constant 0 : index
    %c0_33 = arith.constant 0 : index
    %c0_34 = arith.constant 0 : index
    %47 = vector.load %arg10[%c0_32, %c0_33, %c0_34] : memref<10x18x4xf32, #tpu.memory_space<vmem>>, vector<8x16x4xf32>
    %48 = vector.shape_cast %47 : vector<8x16x4xf32> to vector<128x4xf32>
    %49 = arith.truncf %48 : vector<128x4xf32> to vector<128x4xbf16>
    %c0_35 = arith.constant 0 : index
    %c1_36 = arith.constant 1 : index
    %c0_37 = arith.constant 0 : index
    %50 = vector.load %arg10[%c0_35, %c1_36, %c0_37] : memref<10x18x4xf32, #tpu.memory_space<vmem>>, vector<8x16x4xf32>
    %51 = vector.shape_cast %50 : vector<8x16x4xf32> to vector<128x4xf32>
    %52 = arith.truncf %51 : vector<128x4xf32> to vector<128x4xbf16>
    %c0_38 = arith.constant 0 : index
    %c2 = arith.constant 2 : index
    %c0_39 = arith.constant 0 : index
    %53 = vector.load %arg10[%c0_38, %c2, %c0_39] : memref<10x18x4xf32, #tpu.memory_space<vmem>>, vector<8x16x4xf32>
    %54 = vector.shape_cast %53 : vector<8x16x4xf32> to vector<128x4xf32>
    %55 = arith.truncf %54 : vector<128x4xf32> to vector<128x4xbf16>
    %c1_40 = arith.constant 1 : index
    %c0_41 = arith.constant 0 : index
    %c0_42 = arith.constant 0 : index
    %56 = vector.load %arg10[%c1_40, %c0_41, %c0_42] : memref<10x18x4xf32, #tpu.memory_space<vmem>>, vector<8x16x4xf32>
    %57 = vector.shape_cast %56 : vector<8x16x4xf32> to vector<128x4xf32>
    %58 = arith.truncf %57 : vector<128x4xf32> to vector<128x4xbf16>
    %c1_43 = arith.constant 1 : index
    %c1_44 = arith.constant 1 : index
    %c0_45 = arith.constant 0 : index
    %59 = vector.load %arg10[%c1_43, %c1_44, %c0_45] : memref<10x18x4xf32, #tpu.memory_space<vmem>>, vector<8x16x4xf32>
    %60 = vector.shape_cast %59 : vector<8x16x4xf32> to vector<128x4xf32>
    %61 = arith.truncf %60 : vector<128x4xf32> to vector<128x4xbf16>
    %c1_46 = arith.constant 1 : index
    %c2_47 = arith.constant 2 : index
    %c0_48 = arith.constant 0 : index
    %62 = vector.load %arg10[%c1_46, %c2_47, %c0_48] : memref<10x18x4xf32, #tpu.memory_space<vmem>>, vector<8x16x4xf32>
    %63 = vector.shape_cast %62 : vector<8x16x4xf32> to vector<128x4xf32>
    %64 = arith.truncf %63 : vector<128x4xf32> to vector<128x4xbf16>
    %c2_49 = arith.constant 2 : index
    %c0_50 = arith.constant 0 : index
    %c0_51 = arith.constant 0 : index
    %65 = vector.load %arg10[%c2_49, %c0_50, %c0_51] : memref<10x18x4xf32, #tpu.memory_space<vmem>>, vector<8x16x4xf32>
    %66 = vector.shape_cast %65 : vector<8x16x4xf32> to vector<128x4xf32>
    %67 = arith.truncf %66 : vector<128x4xf32> to vector<128x4xbf16>
    %c2_52 = arith.constant 2 : index
    %c1_53 = arith.constant 1 : index
    %c0_54 = arith.constant 0 : index
    %68 = vector.load %arg10[%c2_52, %c1_53, %c0_54] : memref<10x18x4xf32, #tpu.memory_space<vmem>>, vector<8x16x4xf32>
    %69 = vector.shape_cast %68 : vector<8x16x4xf32> to vector<128x4xf32>
    %70 = arith.truncf %69 : vector<128x4xf32> to vector<128x4xbf16>
    %c2_55 = arith.constant 2 : index
    %c2_56 = arith.constant 2 : index
    %c0_57 = arith.constant 0 : index
    %71 = vector.load %arg10[%c2_55, %c2_56, %c0_57] : memref<10x18x4xf32, #tpu.memory_space<vmem>>, vector<8x16x4xf32>
    %72 = vector.shape_cast %71 : vector<8x16x4xf32> to vector<128x4xf32>
    %73 = arith.truncf %72 : vector<128x4xf32> to vector<128x4xbf16>
    %74 = tpu.concatenate %49, %52, %55, %58, %61, %64, %67, %70, %73 in 1 : vector<128x4xbf16>, vector<128x4xbf16>, vector<128x4xbf16>, vector<128x4xbf16>, vector<128x4xbf16>, vector<128x4xbf16>, vector<128x4xbf16>, vector<128x4xbf16>, vector<128x4xbf16> -> vector<128x36xbf16>
    %c0_58 = arith.constant 0 : index
    %c0_59 = arith.constant 0 : index
    %75 = vector.load %arg5[%c0_58, %c0_59] : memref<36x4xbf16, #tpu.memory_space<vmem>>, vector<36x4xbf16>
    %cst_60 = arith.constant dense<0.000000e+00> : vector<128x4xf32>
    %76 = tpu.matmul %74, %75, %cst_60 {dimension_numbers = #tpu.dot_dimension_numbers<[1], [0], [0], [1], [0, 0, 1, 1], [], []>} : vector<128x36xbf16>, vector<36x4xbf16>, vector<128x4xf32> -> vector<128x4xf32>
    %77 = arith.truncf %76 : vector<128x4xf32> to vector<128x4xbf16>
    %c0_61 = arith.constant 0 : index
    %c0_62 = arith.constant 0 : index
    %78 = vector.load %arg8[%c0_61, %c0_62] : memref<128x4xbf16, #tpu.memory_space<vmem>>, vector<128x4xbf16>
    tpu.vector_store %arg8[%c0_61, %c0_62], %77 {strides = array<i32>} : memref<128x4xbf16, #tpu.memory_space<vmem>>, vector<128x4xbf16>,
    %cst_63 = arith.constant dense<0.000000e+00> : vector<4xf32>
    %79 = vector.multi_reduction <add>, %76, %cst_63 [0] : vector<128x4xf32> to vector<4xf32>
    %80 = vector.shape_cast %79 : vector<4xf32> to vector<1x4xf32>
    %81 = arith.mulf %76, %76 : vector<128x4xf32>
    %cst_64 = arith.constant dense<0.000000e+00> : vector<4xf32>
    %82 = vector.multi_reduction <add>, %81, %cst_64 [0] : vector<128x4xf32> to vector<4xf32>
    %83 = vector.shape_cast %82 : vector<4xf32> to vector<1x4xf32>
    %84 = tpu.concatenate %80, %83 in 0 : vector<1x4xf32>, vector<1x4xf32> -> vector<2x4xf32>
    %85 = vector.shape_cast %84 : vector<2x4xf32> to vector<1x2x4xf32>
    %c0_65 = arith.constant 0 : index
    %c0_66 = arith.constant 0 : index
    %c0_67 = arith.constant 0 : index
    %86 = vector.load %arg9[%c0_65, %c0_66, %c0_67] : memref<1x2x4xf32, #tpu.memory_space<vmem>>, vector<1x2x4xf32>
    tpu.vector_store %arg9[%c0_65, %c0_66, %c0_67], %85 {strides = array<i32>} : memref<1x2x4xf32, #tpu.memory_space<vmem>>, vector<1x2x4xf32>,
    return
  }
  func.func @transform_0(%arg0: i32, %arg1: i32) -> (i32, i32, i32, i32) {
    %c8_i32 = arith.constant 8 : i32
    %0 = arith.muli %arg1, %c8_i32 : i32
    %c1_i32 = arith.constant 1 : i32
    %1 = arith.subi %0, %c1_i32 : i32
    %c0_i32 = arith.constant 0 : i32
    %2 = arith.maxsi %1, %c0_i32 : i32
    %c0_i32_0 = arith.constant 0 : i32
    %c0_i32_1 = arith.constant 0 : i32
    %c0_i32_2 = arith.constant 0 : i32
    return %arg0, %2, %c0_i32_0, %c0_i32_1 : i32, i32, i32, i32
  }
  func.func @transform_1(%arg0: i32, %arg1: i32) -> (i32, i32, i32, i32) {
    %c0_i32 = arith.constant 0 : i32
    %c0_i32_0 = arith.constant 0 : i32
    %c0_i32_1 = arith.constant 0 : i32
    return %arg0, %arg1, %c0_i32, %c0_i32_0 : i32, i32, i32, i32
  }
  func.func @transform_2(%arg0: i32, %arg1: i32) -> (i32, i32, i32, i32) {
    %c8_i32 = arith.constant 8 : i32
    %0 = arith.muli %arg1, %c8_i32 : i32
    %c8_i32_0 = arith.constant 8 : i32
    %1 = arith.addi %0, %c8_i32_0 : i32
    %c15_i32 = arith.constant 15 : i32
    %2 = arith.minsi %1, %c15_i32 : i32
    %c0_i32 = arith.constant 0 : i32
    %c0_i32_1 = arith.constant 0 : i32
    %c0_i32_2 = arith.constant 0 : i32
    return %arg0, %2, %c0_i32, %c0_i32_1 : i32, i32, i32, i32
  }
  func.func @transform_3(%arg0: i32, %arg1: i32) -> (i32, i32) {
    %c0_i32 = arith.constant 0 : i32
    %c0_i32_0 = arith.constant 0 : i32
    %c0_i32_1 = arith.constant 0 : i32
    return %c0_i32, %c0_i32_0 : i32, i32
  }
  func.func @transform_4(%arg0: i32, %arg1: i32) -> (i32, i32) {
    %c0_i32 = arith.constant 0 : i32
    %c0_i32_0 = arith.constant 0 : i32
    %c0_i32_1 = arith.constant 0 : i32
    return %c0_i32, %c0_i32_0 : i32, i32
  }
  func.func @transform_5(%arg0: i32, %arg1: i32) -> (i32, i32) {
    %c0_i32 = arith.constant 0 : i32
    %c0_i32_0 = arith.constant 0 : i32
    %c0_i32_1 = arith.constant 0 : i32
    return %c0_i32, %c0_i32_0 : i32, i32
  }
  func.func @transform_6(%arg0: i32, %arg1: i32) -> (i32, i32) {
    %c2_i32 = arith.constant 2 : i32
    %0 = arith.muli %arg0, %c2_i32 : i32
    %1 = arith.addi %0, %arg1 : i32
    %c0_i32 = arith.constant 0 : i32
    %c0_i32_0 = arith.constant 0 : i32
    return %1, %c0_i32 : i32, i32
  }
  func.func @transform_7(%arg0: i32, %arg1: i32) -> (i32, i32, i32) {
    %c2_i32 = arith.constant 2 : i32
    %0 = arith.muli %arg0, %c2_i32 : i32
    %1 = arith.addi %0, %arg1 : i32
    %c0_i32 = arith.constant 0 : i32
    %c0_i32_0 = arith.constant 0 : i32
    %c0_i32_1 = arith.constant 0 : i32
    return %1, %c0_i32, %c0_i32_0 : i32, i32, i32
  }
}

module attributes {stable_mosaic.version = 11 : i64} {
  func.func @_bn_add_relu_kernel(%arg0: i32, %arg1: memref<128x16xbf16, #tpu.memory_space<vmem>>, %arg2: memref<128x16xf32, #tpu.memory_space<vmem>>, %arg3: memref<1x16xf32, #tpu.memory_space<vmem>>, %arg4: memref<1x16xf32, #tpu.memory_space<vmem>>, %arg5: memref<128x16xf32, #tpu.memory_space<vmem>>) attributes {dimension_semantics = [#tpu.dimension_semantics<parallel>], iteration_bounds = array<i64: 4>, scalar_prefetch = 0 : i64, scratch_operands = 0 : i64, tpu.core_type = #tpu.core_type<tc>, window_params = [{transform_indices = @transform_0, window_bounds = array<i64: 128, 16>}, {transform_indices = @transform_1, window_bounds = array<i64: 128, 16>}, {pipeline_mode = #tpu.pipeline_mode<synchronous>, transform_indices = @transform_2, window_bounds = array<i64: 1, 16>}, {pipeline_mode = #tpu.pipeline_mode<synchronous>, transform_indices = @transform_3, window_bounds = array<i64: 1, 16>}, {transform_indices = @transform_4, window_bounds = array<i64: 128, 16>}]} {
    %c0 = arith.constant 0 : index
    %c0_0 = arith.constant 0 : index
    %0 = vector.load %arg1[%c0, %c0_0] : memref<128x16xbf16, #tpu.memory_space<vmem>>, vector<128x16xbf16>
    %1 = arith.extf %0 : vector<128x16xbf16> to vector<128x16xf32>
    %c0_1 = arith.constant 0 : index
    %c0_2 = arith.constant 0 : index
    %2 = vector.load %arg3[%c0_1, %c0_2] : memref<1x16xf32, #tpu.memory_space<vmem>>, vector<1x16xf32>
    %3 = vector.broadcast %2 : vector<1x16xf32> to vector<128x16xf32>
    %4 = arith.mulf %1, %3 : vector<128x16xf32>
    %c0_3 = arith.constant 0 : index
    %c0_4 = arith.constant 0 : index
    %5 = vector.load %arg4[%c0_3, %c0_4] : memref<1x16xf32, #tpu.memory_space<vmem>>, vector<1x16xf32>
    %6 = vector.broadcast %5 : vector<1x16xf32> to vector<128x16xf32>
    %7 = arith.addf %4, %6 : vector<128x16xf32>
    %c0_5 = arith.constant 0 : index
    %c0_6 = arith.constant 0 : index
    %8 = vector.load %arg2[%c0_5, %c0_6] : memref<128x16xf32, #tpu.memory_space<vmem>>, vector<128x16xf32>
    %9 = arith.addf %7, %8 : vector<128x16xf32>
    %cst = arith.constant 0.000000e+00 : f32
    %10 = vector.broadcast %cst : f32 to vector<128x16xf32>
    %11 = arith.maximumf %9, %10 : vector<128x16xf32>
    %c0_7 = arith.constant 0 : index
    %c0_8 = arith.constant 0 : index
    %12 = vector.load %arg5[%c0_7, %c0_8] : memref<128x16xf32, #tpu.memory_space<vmem>>, vector<128x16xf32>
    tpu.vector_store %arg5[%c0_7, %c0_8], %11 {strides = array<i32>} : memref<128x16xf32, #tpu.memory_space<vmem>>, vector<128x16xf32>,
    return
  }
  func.func @transform_0(%arg0: i32) -> (i32, i32) {
    %c0_i32 = arith.constant 0 : i32
    %c0_i32_0 = arith.constant 0 : i32
    return %arg0, %c0_i32 : i32, i32
  }
  func.func @transform_1(%arg0: i32) -> (i32, i32) {
    %c0_i32 = arith.constant 0 : i32
    %c0_i32_0 = arith.constant 0 : i32
    return %arg0, %c0_i32 : i32, i32
  }
  func.func @transform_2(%arg0: i32) -> (i32, i32) {
    %c0_i32 = arith.constant 0 : i32
    %c0_i32_0 = arith.constant 0 : i32
    %c0_i32_1 = arith.constant 0 : i32
    return %c0_i32, %c0_i32_0 : i32, i32
  }
  func.func @transform_3(%arg0: i32) -> (i32, i32) {
    %c0_i32 = arith.constant 0 : i32
    %c0_i32_0 = arith.constant 0 : i32
    %c0_i32_1 = arith.constant 0 : i32
    return %c0_i32, %c0_i32_0 : i32, i32
  }
  func.func @transform_4(%arg0: i32) -> (i32, i32) {
    %c0_i32 = arith.constant 0 : i32
    %c0_i32_0 = arith.constant 0 : i32
    return %arg0, %c0_i32 : i32, i32
  }
}

</mosaic_0001>

<llo_original>
// kernel: bottleneck_forward.6
$region0: #{bottleneck_forward.6}
  #allocation0 [shape = 'u32[]', space=smem, size = 0x4, offset = 0x4, fixed_abs, tag = 'smem constant byte address 0x4 - core index']
  #allocation1 [shape = 'u32[72,128]{1,0:T(1,128)}', space=vmem, size = 0x9000, scoped, tag = 'internal scratch']
  %s0 = inlined_call_operand.vmem [shape: bf16[512,4], index: 0, kind: input, shape index: {}]
  %s1 = inlined_call_operand.vmem [shape: bf16[4,16], index: 1, kind: input, shape index: {}]
  %s2 = inlined_call_operand.vmem [shape: f32[1,4], index: 2, kind: input, shape index: {}]
  %s3 = inlined_call_operand.vmem [shape: f32[1,4], index: 3, kind: input, shape index: {}]
  %s4 = inlined_call_operand.vmem [shape: bf16[512,16], index: 4, kind: output, shape index: {0}]
  %s5 = inlined_call_operand.vmem [shape: f32[4,2,16], index: 5, kind: output, shape index: {1}]
  %6 = xla_tuple %s4, %s5
  %s7 = sld [smem:[#allocation0]]
  $region57: #{bottleneck_forward.6} parent=0
    _
  %s9 = ssub.s32 1, %s7
  %s10 = scalar_select 0, %s9, %s7
  loop: start=0, step=1, limit=6
  $region2: #{bottleneck_forward.6} parent=0 // loop_pre_header
    _
  $region3: #{bottleneck_forward.6} parent=0 // loop_header
    %s12 = sphi 0, %s16
    %p13 = scmp.ge.s32.totalorder %s12, 6
    %s22 = sphi 0, %s24
    %s25 = sphi 0, %s22
    %s26 = sphi 0, %s25
    %s42 = sphi 0, %s26
    %s46 = sphi 0, %s46
    %s48 = sphi 0, %s46
    %s49 = sphi 0, %s48
    %s63 = sphi 0, %s49
    %s67 = sphi 0, %s67
    %s69 = sphi 0, %s67
    %s70 = sphi 0, %s69
    %s84 = sphi 0, %s70
    %s88 = sphi 0, %s88
    %s90 = sphi 0, %s88
    %s91 = sphi 0, %s90
    %s105 = sphi 0, %s91
    %s111 = sphi 0, %s113
    %s114 = sphi 0, %s111
    %s115 = sphi 0, %s114
    %s131 = sphi 0, %s115
    %s137 = sphi 0, %s139
    %s140 = sphi 0, %s137
    %s141 = sphi 0, %s140
    %s157 = sphi 0, %s141
  $region4: #{bottleneck_forward.6} parent=0 // loop_header_branch
    %15 = sbr.rel (%p13) target = $region8
  $region5: #{bottleneck_forward.6} parent=0 // loop_body
    %s17 = ssub.s32 %s12, 1
    %s18 = ssub.s32 %s12, 2
    %s19 = sadd.s32 %s12, 1
    %s20 = ssub.s32 %s12, %s19
    %p21 = scmp.eq.s32.totalorder %s20, 0
    %s23 = sadd.s32 %s22, 1
    %s24 = scalar_select %p21, %s22, %s23
    %p27 = pneg %p21
    %p28 = scmp.eq.s32.totalorder %s12, 3
    %p29 = por %p27, %p28
    %p30 = scmp.ne.s32.totalorder %s22, %s25
    %p31 = scmp.eq.s32.totalorder %s12, 0
    %p32 = por %p30, %p31
    %p33 = scmp.ne.s32.totalorder %s22, %s25
    %p34 = scmp.eq.s32.totalorder %s17, 3
    %p35 = por %p33, %p34
    %p36 = scmp.ne.s32.totalorder %s25, %s26
    %p37 = scmp.eq.s32.totalorder %s17, 0
    %p38 = por %p36, %p37
    %p39 = scmp.ne.s32.totalorder %s25, %s26
    %p40 = scmp.eq.s32.totalorder %s18, 3
    %p41 = por %p39, %p40
    %p43 = scmp.ne.s32.totalorder %s26, %s42
    %p44 = scmp.eq.s32.totalorder %s18, 0
    %p45 = por %p43, %p44
    %s47 = sadd.s32 %s46, 1
    %p50 = scmp.eq.s32.totalorder %s12, 3
    %p51 = scmp.ne.s32.totalorder %s46, %s48
    %p52 = scmp.eq.s32.totalorder %s12, 0
    %p53 = por %p51, %p52
    %p54 = scmp.ne.s32.totalorder %s46, %s48
    %p55 = scmp.eq.s32.totalorder %s17, 3
    %p56 = por %p54, %p55
    %p57 = scmp.ne.s32.totalorder %s48, %s49
    %p58 = scmp.eq.s32.totalorder %s17, 0
    %p59 = por %p57, %p58
    %p60 = scmp.ne.s32.totalorder %s48, %s49
    %p61 = scmp.eq.s32.totalorder %s18, 3
    %p62 = por %p60, %p61
    %p64 = scmp.ne.s32.totalorder %s49, %s63
    %p65 = scmp.eq.s32.totalorder %s18, 0
    %p66 = por %p64, %p65
    %s68 = sadd.s32 %s67, 1
    %p71 = scmp.eq.s32.totalorder %s12, 3
    %p72 = scmp.ne.s32.totalorder %s67, %s69
    %p73 = scmp.eq.s32.totalorder %s12, 0
    %p74 = por %p72, %p73
    %p75 = scmp.ne.s32.totalorder %s67, %s69
    %p76 = scmp.eq.s32.totalorder %s17, 3
    %p77 = por %p75, %p76
    %p78 = scmp.ne.s32.totalorder %s69, %s70
    %p79 = scmp.eq.s32.totalorder %s17, 0
    %p80 = por %p78, %p79
    %p81 = scmp.ne.s32.totalorder %s69, %s70
    %p82 = scmp.eq.s32.totalorder %s18, 3
    %p83 = por %p81, %p82
    %p85 = scmp.ne.s32.totalorder %s70, %s84
    %p86 = scmp.eq.s32.totalorder %s18, 0
    %p87 = por %p85, %p86
    %s89 = sadd.s32 %s88, 1
    %p92 = scmp.eq.s32.totalorder %s12, 3
    %p93 = scmp.ne.s32.totalorder %s88, %s90
    %p94 = scmp.eq.s32.totalorder %s12, 0
    %p95 = por %p93, %p94
    %p96 = scmp.ne.s32.totalorder %s88, %s90
    %p97 = scmp.eq.s32.totalorder %s17, 3
    %p98 = por %p96, %p97
    %p99 = scmp.ne.s32.totalorder %s90, %s91
    %p100 = scmp.eq.s32.totalorder %s17, 0
    %p101 = por %p99, %p100
    %p102 = scmp.ne.s32.totalorder %s90, %s91
    %p103 = scmp.eq.s32.totalorder %s18, 3
    %p104 = por %p102, %p103
    %p106 = scmp.ne.s32.totalorder %s91, %s105
    %p107 = scmp.eq.s32.totalorder %s18, 0
    %p108 = por %p106, %p107
    %s109 = ssub.s32 %s12, %s19
    %p110 = scmp.eq.s32.totalorder %s109, 0
    %s112 = sadd.s32 %s111, 1
    %s113 = scalar_select %p110, %s111, %s112
    %p116 = pneg %p110
    %p117 = scmp.eq.s32.totalorder %s12, 3
    %p118 = por %p116, %p117
    %p119 = scmp.ne.s32.totalorder %s111, %s114
    %p120 = scmp.eq.s32.totalorder %s12, 0
    %p121 = por %p119, %p120
    %p122 = scmp.ne.s32.totalorder %s111, %s114
    %p123 = scmp.eq.s32.totalorder %s17, 3
    %p124 = por %p122, %p123
    %p125 = scmp.ne.s32.totalorder %s114, %s115
    %p126 = scmp.eq.s32.totalorder %s17, 0
    %p127 = por %p125, %p126
    %p128 = scmp.ne.s32.totalorder %s114, %s115
    %p129 = scmp.eq.s32.totalorder %s18, 3
    %p130 = por %p128, %p129
    %p132 = scmp.ne.s32.totalorder %s115, %s131
    %p133 = scmp.eq.s32.totalorder %s18, 0
    %p134 = por %p132, %p133
    %s135 = ssub.s32 %s12, %s19
    %p136 = scmp.eq.s32.totalorder %s135, 0
    %s138 = sadd.s32 %s137, 1
    %s139 = scalar_select %p136, %s137, %s138
    %p142 = pneg %p136
    %p143 = scmp.eq.s32.totalorder %s12, 3
    %p144 = por %p142, %p143
    %p145 = scmp.ne.s32.totalorder %s137, %s140
    %p146 = scmp.eq.s32.totalorder %s12, 0
    %p147 = por %p145, %p146
    %p148 = scmp.ne.s32.totalorder %s137, %s140
    %p149 = scmp.eq.s32.totalorder %s17, 3
    %p150 = por %p148, %p149
    %p151 = scmp.ne.s32.totalorder %s140, %s141
    %p152 = scmp.eq.s32.totalorder %s17, 0
    %p153 = por %p151, %p152
    %p154 = scmp.ne.s32.totalorder %s140, %s141
    %p155 = scmp.eq.s32.totalorder %s18, 3
    %p156 = por %p154, %p155
    %p158 = scmp.ne.s32.totalorder %s141, %s157
    %p159 = scmp.eq.s32.totalorder %s18, 0
    %p160 = por %p158, %p159
    %p161 = scmp.le.s32.totalorder 1, %s12
    %p162 = scmp.lt.s32.totalorder %s12, 5
    %p163 = pnand %p161, %p162
    %p164 = pneg %p163
    // Predicated region
    $region9: #{bottleneck_forward.6} parent=5 // pred_check
      _
    $region10: #{bottleneck_forward.6} parent=5 // pred_check_branch
      %166 = sbr.rel (%p163) target = $region12
    $region11: #{bottleneck_forward.6} parent=5 // pred_region
      %s167 = ssub.s32 %s12, 1
      // Predicated region
      $region13: #{bottleneck_forward.6} parent=11 // pred_check
        %p168 = pneg %p59
      $region14: #{bottleneck_forward.6} parent=11 // pred_check_branch
        %170 = sbr.rel (%p168) target = $region16
      $region15: #{bottleneck_forward.6} parent=11 // pred_region
        _
      $region16: #{bottleneck_forward.6} parent=11 // pred_fallthru
        _
      // Predicated region
      $region17: #{bottleneck_forward.6} parent=11 // pred_check
        %p171 = pneg %p80
      $region18: #{bottleneck_forward.6} parent=11 // pred_check_branch
        %173 = sbr.rel (%p171) target = $region20
      $region19: #{bottleneck_forward.6} parent=11 // pred_region
        _
      $region20: #{bottleneck_forward.6} parent=11 // pred_fallthru
        _
      // Predicated region
      $region21: #{bottleneck_forward.6} parent=11 // pred_check
        %p174 = pneg %p101
      $region22: #{bottleneck_forward.6} parent=11 // pred_check_branch
        %176 = sbr.rel (%p174) target = $region24
      $region23: #{bottleneck_forward.6} parent=11 // pred_region
        _
      $region24: #{bottleneck_forward.6} parent=11 // pred_fallthru
        _
    $region12: #{bottleneck_forward.6} parent=5 // pred_fallthru
      _
    %p177 = scmp.lt.s32.totalorder %s12, 4
    // Predicated region
    $region25: #{bottleneck_forward.6} parent=5 // pred_check
      %p178 = pneg %p177
    $region26: #{bottleneck_forward.6} parent=5 // pred_check_branch
      %180 = sbr.rel (%p178) target = $region28
    $region27: #{bottleneck_forward.6} parent=5 // pred_region
      // Predicated region
      $region29: #{bottleneck_forward.6} parent=27 // pred_check
        %p181 = pneg %p32
      $region30: #{bottleneck_forward.6} parent=27 // pred_check_branch
        %183 = sbr.rel (%p181) target = $region32
      $region31: #{bottleneck_forward.6} parent=27 // pred_region
        %s184 = smul.u32 16, %s12
        %p185 = scmp.lt.s32.totalorder %s184, 63
        %s186 = scalar_select %p185, %s184, 63
        %s187 = smul.addr %s186, 4
        %s188 = scalar_lea.vmem %s0, %s187
        %s189 = smul.u32 16, %s12
      $region32: #{bottleneck_forward.6} parent=27 // pred_fallthru
        _
    $region28: #{bottleneck_forward.6} parent=5 // pred_fallthru
      _
    %p190 = scmp.le.s32.totalorder 1, %s12
    %p191 = scmp.lt.s32.totalorder %s12, 5
    %p192 = pnand %p190, %p191
    %p193 = pneg %p192
    // Predicated region
    $region33: #{bottleneck_forward.6} parent=5 // pred_check
      _
    $region34: #{bottleneck_forward.6} parent=5 // pred_check_branch
      %195 = sbr.rel (%p192) target = $region36
    $region35: #{bottleneck_forward.6} parent=5 // pred_region
      %s196 = ssub.s32 %s12, 1
      %s197 = smul.u32 16, %s17
      %p198 = scmp.lt.s32.totalorder %s197, 63
      %s199 = scalar_select %p198, %s197, 63
      %s200 = smul.addr %s199, 4
      %s201 = scalar_lea.vmem %s0, %s200
      %p202 = pneg %p38
      %p203 = pneg %p35
      %p204 = pneg %p59
      %p205 = pneg %p56
      %p206 = pneg %p80
      %p207 = pneg %p77
      %p208 = pneg %p101
      %p209 = pneg %p98
      %p210 = pneg %p127
      %p211 = pneg %p124
      %s212 = smul.u32 16, %s17
      %p213 = scmp.lt.s32.totalorder %s212, 63
      %s214 = scalar_select %p213, %s212, 63
      %s215 = smul.addr %s214, 4
      %s216 = scalar_lea.vmem %s4, %s215
      %p217 = pneg %p153
      %p218 = pneg %p150
      %p219 = scmp.lt.s32.totalorder %s17, 3
      %s220 = scalar_select %p219, %s17, 3
      %s221 = smul.addr %s220, 2
      %s222 = scalar_lea.vmem %s5, %s221
      %s223 = smul.u32 16, %s17
      %p224 = scmp.lt.s32.totalorder %s223, 63
      %s225 = scalar_select %p224, %s223, 63
      %s226 = smul.addr %s225, 4
      %s227 = scalar_lea.vmem %s0, %s226
      %s228 = smul.u32 16, %s17
      %s229 = smul.u32 16, %s17
      %p230 = scmp.lt.s32.totalorder %s229, 63
      %s231 = scalar_select %p230, %s229, 63
      %s232 = smul.addr %s231, 4
      %s233 = scalar_lea.vmem %s4, %s232
      %s234 = smul.u32 16, %s17
      %p235 = scmp.lt.s32.totalorder %s17, 3
      %s236 = scalar_select %p235, %s17, 3
      %s237 = smul.addr %s236, 2
      %s238 = scalar_lea.vmem %s5, %s237
      %v240 = vld [vmem:[%s227] sm:$0xf]
      %v241 = vld [vmem:[%s227 + $0x4] sm:$0xf]
      %v242 = vld [vmem:[%s227 + $0x8] sm:$0xf]
      %v243 = vld [vmem:[%s227 + $0xc] sm:$0xf]
      %v244 = vld [vmem:[%s227 + $0x10] sm:$0xf]
      %v245 = vld [vmem:[%s227 + $0x14] sm:$0xf]
      %v246 = vld [vmem:[%s227 + $0x18] sm:$0xf]
      %v247 = vld [vmem:[%s227 + $0x1c] sm:$0xf]
      %v248 = vld [vmem:[%s227 + $0x20] sm:$0xf]
      %v249 = vld [vmem:[%s227 + $0x24] sm:$0xf]
      %v250 = vld [vmem:[%s227 + $0x28] sm:$0xf]
      %v251 = vld [vmem:[%s227 + $0x2c] sm:$0xf]
      %v252 = vld [vmem:[%s227 + $0x30] sm:$0xf]
      %v253 = vld [vmem:[%s227 + $0x34] sm:$0xf]
      %v254 = vld [vmem:[%s227 + $0x38] sm:$0xf]
      %v255 = vld [vmem:[%s227 + $0x3c] sm:$0xf]
      %v256 = vunpack.c.l.bf16 %v240
      %v257 = vunpack.c.l.bf16 %v241
      %v258 = vunpack.c.l.bf16 %v242
      %v259 = vunpack.c.l.bf16 %v243
      %v260 = vunpack.c.l.bf16 %v244
      %v261 = vunpack.c.l.bf16 %v245
      %v262 = vunpack.c.l.bf16 %v246
      %v263 = vunpack.c.l.bf16 %v247
      %v264 = vunpack.c.l.bf16 %v248
      %v265 = vunpack.c.l.bf16 %v249
      %v266 = vunpack.c.l.bf16 %v250
      %v267 = vunpack.c.l.bf16 %v251
      %v268 = vunpack.c.l.bf16 %v252
      %v269 = vunpack.c.l.bf16 %v253
      %v270 = vunpack.c.l.bf16 %v254
      %v271 = vunpack.c.l.bf16 %v255
      %v272 = vld [vmem:[%s2] sm:$0x1]
      %v274 = vperm.slane %v272, 0
      %v276 = vmul.f32 %v256, %v274
      %v277 = vmul.f32 %v257, %v274
      %v278 = vmul.f32 %v258, %v274
      %v279 = vmul.f32 %v259, %v274
      %v280 = vmul.f32 %v260, %v274
      %v281 = vmul.f32 %v261, %v274
      %v282 = vmul.f32 %v262, %v274
      %v283 = vmul.f32 %v263, %v274
      %v284 = vmul.f32 %v264, %v274
      %v285 = vmul.f32 %v265, %v274
      %v286 = vmul.f32 %v266, %v274
      %v287 = vmul.f32 %v267, %v274
      %v288 = vmul.f32 %v268, %v274
      %v289 = vmul.f32 %v269, %v274
      %v290 = vmul.f32 %v270, %v274
      %v291 = vmul.f32 %v271, %v274
      %v292 = vld [vmem:[%s3] sm:$0x1]
      %v294 = vperm.slane %v292, 0
      %v296 = vadd.f32 %v276, %v294
      %v297 = vadd.f32 %v277, %v294
      %v298 = vadd.f32 %v278, %v294
      %v299 = vadd.f32 %v279, %v294
      %v300 = vadd.f32 %v280, %v294
      %v301 = vadd.f32 %v281, %v294
      %v302 = vadd.f32 %v282, %v294
      %v303 = vadd.f32 %v283, %v294
      %v304 = vadd.f32 %v284, %v294
      %v305 = vadd.f32 %v285, %v294
      %v306 = vadd.f32 %v286, %v294
      %v307 = vadd.f32 %v287, %v294
      %v308 = vadd.f32 %v288, %v294
      %v309 = vadd.f32 %v289, %v294
      %v310 = vadd.f32 %v290, %v294
      %v311 = vadd.f32 %v291, %v294
      %v312 = vmax.f32 %v296, 0.0
      %v313 = vmax.f32 %v297, 0.0
      %v314 = vmax.f32 %v298, 0.0
      %v315 = vmax.f32 %v299, 0.0
      %v316 = vmax.f32 %v300, 0.0
      %v317 = vmax.f32 %v301, 0.0
      %v318 = vmax.f32 %v302, 0.0
      %v319 = vmax.f32 %v303, 0.0
      %v320 = vmax.f32 %v304, 0.0
      %v321 = vmax.f32 %v305, 0.0
      %v322 = vmax.f32 %v306, 0.0
      %v323 = vmax.f32 %v307, 0.0
      %v324 = vmax.f32 %v308, 0.0
      %v325 = vmax.f32 %v309, 0.0
      %v326 = vmax.f32 %v310, 0.0
      %v327 = vmax.f32 %v311, 0.0
      %v328 = vpack.c.bf16 %v313, %v312
      %v329 = vpack.c.bf16 %v315, %v314
      %v330 = vpack.c.bf16 %v317, %v316
      %v331 = vpack.c.bf16 %v319, %v318
      %v332 = vpack.c.bf16 %v321, %v320
      %v333 = vpack.c.bf16 %v323, %v322
      %v334 = vpack.c.bf16 %v325, %v324
      %v335 = vpack.c.bf16 %v327, %v326
      %v336 = vld [vmem:[%s1] sm:$0x3]
      %vm337 = vcmask 31744
      %v339 = vsel %vm337, %v328, 0
      %v342 = vsel %vm337, %v329, 0
      %v345 = vsel %vm337, %v330, 0
      %v348 = vsel %vm337, %v331, 0
      %v351 = vsel %vm337, %v332, 0
      %v354 = vsel %vm337, %v333, 0
      %v357 = vsel %vm337, %v334, 0
      %v360 = vsel %vm337, %v335, 0
      %vm362 = vcmask 1041408
      %v364 = vsel %vm362, %v336, 0
      %366 = vmatpush.bf16.msra.mxu0 0
      %367 = vmatpush.bf16.msra.mxu0 0
      %368 = vmatpush.bf16.msra.mxu0 0
      %369 = vmatpush.bf16.msra.mxu0 0
      %370 = vmatpush.bf16.msra.mxu0 0
      %371 = vmatpush.bf16.msra.mxu0 0
      %372 = vmatpush.bf16.msra.mxu0 0
      %373 = vmatpush.bf16.msra.mxu0 %v364
      %374 = vmatmul.bf16.gmra.mxu0 %v339
      %v375 = vpop.f32.mrf.mxu0
      %v376 = vadd.f32 0.0, %v375
      %v377 = vpop.f32.mrf.mxu0
      %v378 = vadd.f32 0.0, %v377
      %379 = vmatmul.bf16.gmra.mxu0 %v342
      %v380 = vpop.f32.mrf.mxu0
      %v381 = vadd.f32 0.0, %v380
      %v382 = vpop.f32.mrf.mxu0
      %v383 = vadd.f32 0.0, %v382
      %384 = vmatmul.bf16.gmra.mxu0 %v345
      %v385 = vpop.f32.mrf.mxu0
      %v386 = vadd.f32 0.0, %v385
      %v387 = vpop.f32.mrf.mxu0
      %v388 = vadd.f32 0.0, %v387
      %389 = vmatmul.bf16.gmra.mxu0 %v348
      %v390 = vpop.f32.mrf.mxu0
      %v391 = vadd.f32 0.0, %v390
      %v392 = vpop.f32.mrf.mxu0
      %v393 = vadd.f32 0.0, %v392
      %394 = vmatmul.bf16.gmra.mxu0 %v351
      %v395 = vpop.f32.mrf.mxu0
      %v396 = vadd.f32 0.0, %v395
      %v397 = vpop.f32.mrf.mxu0
      %v398 = vadd.f32 0.0, %v397
      %399 = vmatmul.bf16.gmra.mxu0 %v354
      %v400 = vpop.f32.mrf.mxu0
      %v401 = vadd.f32 0.0, %v400
      %v402 = vpop.f32.mrf.mxu0
      %v403 = vadd.f32 0.0, %v402
      %404 = vmatmul.bf16.gmra.mxu0 %v357
      %v405 = vpop.f32.mrf.mxu0
      %v406 = vadd.f32 0.0, %v405
      %v407 = vpop.f32.mrf.mxu0
      %v408 = vadd.f32 0.0, %v407
      %409 = vmatmul.bf16.gmra.mxu0 %v360
      %v410 = vpop.f32.mrf.mxu0
      %v411 = vadd.f32 0.0, %v410
      %v412 = vpop.f32.mrf.mxu0
      %v413 = vadd.f32 0.0, %v412
      %414 = vdwg.mxu0
      %v415 = vpack.c.bf16 %v376, %v376
      %v416 = vpack.c.bf16 %v378, %v378
      %v417 = vpack.c.bf16 %v381, %v381
      %v418 = vpack.c.bf16 %v383, %v383
      %v419 = vpack.c.bf16 %v386, %v386
      %v420 = vpack.c.bf16 %v388, %v388
      %v421 = vpack.c.bf16 %v391, %v391
      %v422 = vpack.c.bf16 %v393, %v393
      %v423 = vpack.c.bf16 %v396, %v396
      %v424 = vpack.c.bf16 %v398, %v398
      %v425 = vpack.c.bf16 %v401, %v401
      %v426 = vpack.c.bf16 %v403, %v403
      %v427 = vpack.c.bf16 %v406, %v406
      %v428 = vpack.c.bf16 %v408, %v408
      %v429 = vpack.c.bf16 %v411, %v411
      %v430 = vpack.c.bf16 %v413, %v413
      %vm431 = vcmask 125952
      %432 = vst.msk [vmem:[%s233] sm:$0xf] %vm431, %v415
      %433 = vst.msk [vmem:[%s233 + $0x4] sm:$0xf] %vm431, %v416
      %434 = vst.msk [vmem:[%s233 + $0x8] sm:$0xf] %vm431, %v417
      %435 = vst.msk [vmem:[%s233 + $0xc] sm:$0xf] %vm431, %v418
      %436 = vst.msk [vmem:[%s233 + $0x10] sm:$0xf] %vm431, %v419
      %437 = vst.msk [vmem:[%s233 + $0x14] sm:$0xf] %vm431, %v420
      %438 = vst.msk [vmem:[%s233 + $0x18] sm:$0xf] %vm431, %v421
      %439 = vst.msk [vmem:[%s233 + $0x1c] sm:$0xf] %vm431, %v422
      %440 = vst.msk [vmem:[%s233 + $0x20] sm:$0xf] %vm431, %v423
      %441 = vst.msk [vmem:[%s233 + $0x24] sm:$0xf] %vm431, %v424
      %442 = vst.msk [vmem:[%s233 + $0x28] sm:$0xf] %vm431, %v425
      %443 = vst.msk [vmem:[%s233 + $0x2c] sm:$0xf] %vm431, %v426
      %444 = vst.msk [vmem:[%s233 + $0x30] sm:$0xf] %vm431, %v427
      %445 = vst.msk [vmem:[%s233 + $0x34] sm:$0xf] %vm431, %v428
      %446 = vst.msk [vmem:[%s233 + $0x38] sm:$0xf] %vm431, %v429
      %447 = vst.msk [vmem:[%s233 + $0x3c] sm:$0xf] %vm431, %v430
      %vm448 = vcmask 130048
      %v449 = vsel %vm448, %v376, 0.0
      %v450 = vsel %vm448, %v378, 0.0
      %v451 = vadd.f32 %v449, %v450
      %v452 = vsel %vm448, %v381, 0.0
      %v453 = vadd.f32 %v451, %v452
      %v454 = vsel %vm448, %v383, 0.0
      %v455 = vadd.f32 %v453, %v454
      %v456 = vsel %vm448, %v386, 0.0
      %v457 = vadd.f32 %v455, %v456
      %v458 = vsel %vm448, %v388, 0.0
      %v459 = vadd.f32 %v457, %v458
      %v460 = vsel %vm448, %v391, 0.0
      %v461 = vadd.f32 %v459, %v460
      %v462 = vsel %vm448, %v393, 0.0
      %v463 = vadd.f32 %v461, %v462
      %v464 = vsel %vm448, %v396, 0.0
      %v465 = vadd.f32 %v463, %v464
      %v466 = vsel %vm448, %v398, 0.0
      %v467 = vadd.f32 %v465, %v466
      %v468 = vsel %vm448, %v401, 0.0
      %v469 = vadd.f32 %v467, %v468
      %v470 = vsel %vm448, %v403, 0.0
      %v471 = vadd.f32 %v469, %v470
      %v472 = vsel %vm448, %v406, 0.0
      %v473 = vadd.f32 %v471, %v472
      %v474 = vsel %vm448, %v408, 0.0
      %v475 = vadd.f32 %v473, %v474
      %v476 = vsel %vm448, %v411, 0.0
      %v477 = vadd.f32 %v475, %v476
      %v478 = vsel %vm448, %v413, 0.0
      %v479 = vadd.f32 %v477, %v478
      %v480 = vrot.slane %v479, 4
      %v481 = vadd.f32 %v479, %v480
      %v482 = vrot.slane %v481, 2
      %v483 = vadd.f32 %v481, %v482
      %v484 = vrot.slane %v483, 1
      %v485 = vadd.f32 %v483, %v484
      %v486 = vmul.f32 %v376, %v376
      %v487 = vmul.f32 %v378, %v378
      %v488 = vmul.f32 %v381, %v381
      %v489 = vmul.f32 %v383, %v383
      %v490 = vmul.f32 %v386, %v386
      %v491 = vmul.f32 %v388, %v388
      %v492 = vmul.f32 %v391, %v391
      %v493 = vmul.f32 %v393, %v393
      %v494 = vmul.f32 %v396, %v396
      %v495 = vmul.f32 %v398, %v398
      %v496 = vmul.f32 %v401, %v401
      %v497 = vmul.f32 %v403, %v403
      %v498 = vmul.f32 %v406, %v406
      %v499 = vmul.f32 %v408, %v408
      %v500 = vmul.f32 %v411, %v411
      %v501 = vmul.f32 %v413, %v413
      %v502 = vsel %vm448, %v486, 0.0
      %v503 = vsel %vm448, %v487, 0.0
      %v504 = vadd.f32 %v502, %v503
      %v505 = vsel %vm448, %v488, 0.0
      %v506 = vadd.f32 %v504, %v505
      %v507 = vsel %vm448, %v489, 0.0
      %v508 = vadd.f32 %v506, %v507
      %v509 = vsel %vm448, %v490, 0.0
      %v510 = vadd.f32 %v508, %v509
      %v511 = vsel %vm448, %v491, 0.0
      %v512 = vadd.f32 %v510, %v511
      %v513 = vsel %vm448, %v492, 0.0
      %v514 = vadd.f32 %v512, %v513
      %v515 = vsel %vm448, %v493, 0.0
      %v516 = vadd.f32 %v514, %v515
      %v517 = vsel %vm448, %v494, 0.0
      %v518 = vadd.f32 %v516, %v517
      %v519 = vsel %vm448, %v495, 0.0
      %v520 = vadd.f32 %v518, %v519
      %v521 = vsel %vm448, %v496, 0.0
      %v522 = vadd.f32 %v520, %v521
      %v523 = vsel %vm448, %v497, 0.0
      %v524 = vadd.f32 %v522, %v523
      %v525 = vsel %vm448, %v498, 0.0
      %v526 = vadd.f32 %v524, %v525
      %v527 = vsel %vm448, %v499, 0.0
      %v528 = vadd.f32 %v526, %v527
      %v529 = vsel %vm448, %v500, 0.0
      %v530 = vadd.f32 %v528, %v529
      %v531 = vsel %vm448, %v501, 0.0
      %v532 = vadd.f32 %v530, %v531
      %v533 = vrot.slane %v532, 4
      %v534 = vadd.f32 %v532, %v533
      %v535 = vrot.slane %v534, 2
      %v536 = vadd.f32 %v534, %v535
      %v537 = vrot.slane %v536, 1
      %v538 = vadd.f32 %v536, %v537
      %vm539 = vcmask 1040384
      %v540 = vsel %vm539, %v485, %v538
      %vm541 = vcmask 123904
      %542 = vst.msk [vmem:[%s238] sm:$0x3] %vm541, %v540
      %s543 = smul.u32 16, %s17
      %p544 = scmp.lt.s32.totalorder %s543, 63
      %s545 = scalar_select %p544, %s543, 63
      %s546 = smul.addr %s545, 4
      %s547 = scalar_lea.vmem %s4, %s546
      %p548 = scmp.lt.s32.totalorder %s17, 3
      %s549 = scalar_select %p548, %s17, 3
      %s550 = smul.addr %s549, 2
      %s551 = scalar_lea.vmem %s5, %s550
      // Predicated region
      $region37: #{bottleneck_forward.6} parent=35 // pred_check
        %p552 = pneg %p124
      $region38: #{bottleneck_forward.6} parent=35 // pred_check_branch
        %554 = sbr.rel (%p552) target = $region40
      $region39: #{bottleneck_forward.6} parent=35 // pred_region
        %s555 = smul.u32 16, %s17
      $region40: #{bottleneck_forward.6} parent=35 // pred_fallthru
        _
      // Predicated region
      $region41: #{bottleneck_forward.6} parent=35 // pred_check
        %p556 = pneg %p150
      $region42: #{bottleneck_forward.6} parent=35 // pred_check_branch
        %558 = sbr.rel (%p556) target = $region44
      $region43: #{bottleneck_forward.6} parent=35 // pred_region
        _
      $region44: #{bottleneck_forward.6} parent=35 // pred_fallthru
        _
    $region36: #{bottleneck_forward.6} parent=5 // pred_fallthru
      _
    %p559 = scmp.le.s32.totalorder 2, %s12
    // Predicated region
    $region45: #{bottleneck_forward.6} parent=5 // pred_check
      %p560 = pneg %p559
    $region46: #{bottleneck_forward.6} parent=5 // pred_check_branch
      %562 = sbr.rel (%p560) target = $region48
    $region47: #{bottleneck_forward.6} parent=5 // pred_region
      %s563 = ssub.s32 %s12, 2
      // Predicated region
      $region49: #{bottleneck_forward.6} parent=47 // pred_check
        %p564 = pneg %p130
      $region50: #{bottleneck_forward.6} parent=47 // pred_check_branch
        %566 = sbr.rel (%p564) target = $region52
      $region51: #{bottleneck_forward.6} parent=47 // pred_region
        %s567 = smul.u32 16, %s18
        %p568 = scmp.lt.s32.totalorder %s567, 63
        %s569 = scalar_select %p568, %s567, 63
        %s570 = smul.addr %s569, 4
        %s571 = scalar_lea.vmem %s4, %s570
      $region52: #{bottleneck_forward.6} parent=47 // pred_fallthru
        _
      // Predicated region
      $region53: #{bottleneck_forward.6} parent=47 // pred_check
        %p572 = pneg %p156
      $region54: #{bottleneck_forward.6} parent=47 // pred_check_branch
        %574 = sbr.rel (%p572) target = $region56
      $region55: #{bottleneck_forward.6} parent=47 // pred_region
        %p575 = scmp.lt.s32.totalorder %s18, 3
        %s576 = scalar_select %p575, %s18, 3
        %s577 = smul.addr %s576, 2
        %s578 = scalar_lea.vmem %s5, %s577
      $region56: #{bottleneck_forward.6} parent=47 // pred_fallthru
        _
    $region48: #{bottleneck_forward.6} parent=5 // pred_fallthru
      _
  $region6: #{bottleneck_forward.6} parent=0 // loop_footer
    %s16 = sadd.s32 1, %s12
  $region7: #{bottleneck_forward.6} parent=0 // loop_footer_branch
    %11 = sbr.rel target = $region3
  $region8: #{bottleneck_forward.6} parent=0 // loop_exit
    _

// kernel: bottleneck_forward.4
$region0: #{bottleneck_forward.4}
  #allocation0 [shape = 'u32[]', space=smem, size = 0x4, offset = 0x4, fixed_abs, tag = 'smem constant byte address 0x4 - core index']
  #allocation1 [shape = 'u32[72,128]{1,0:T(1,128)}', space=vmem, size = 0x9000, scoped, tag = 'internal scratch']
  %s0 = inlined_call_operand.vmem [shape: f32[512,16], index: 0, kind: input, shape index: {}]
  %s1 = inlined_call_operand.vmem [shape: bf16[16,4], index: 1, kind: input, shape index: {}]
  %s2 = inlined_call_operand.vmem [shape: bf16[512,4], index: 2, kind: output, shape index: {0}]
  %s3 = inlined_call_operand.vmem [shape: f32[4,2,4], index: 3, kind: output, shape index: {1}]
  %4 = xla_tuple %s2, %s3
  %s5 = sld [smem:[#allocation0]]
  $region49: #{bottleneck_forward.4} parent=0
    _
  %s7 = ssub.s32 1, %s5
  %s8 = scalar_select 0, %s7, %s5
  loop: start=0, step=1, limit=6
  $region2: #{bottleneck_forward.4} parent=0 // loop_pre_header
    _
  $region3: #{bottleneck_forward.4} parent=0 // loop_header
    %s10 = sphi 0, %s14
    %p11 = scmp.ge.s32.totalorder %s10, 6
    %s20 = sphi 0, %s22
    %s23 = sphi 0, %s20
    %s24 = sphi 0, %s23
    %s40 = sphi 0, %s24
    %s44 = sphi 0, %s44
    %s46 = sphi 0, %s44
    %s47 = sphi 0, %s46
    %s61 = sphi 0, %s47
    %s67 = sphi 0, %s69
    %s70 = sphi 0, %s67
    %s71 = sphi 0, %s70
    %s87 = sphi 0, %s71
    %s93 = sphi 0, %s95
    %s96 = sphi 0, %s93
    %s97 = sphi 0, %s96
    %s113 = sphi 0, %s97
  $region4: #{bottleneck_forward.4} parent=0 // loop_header_branch
    %13 = sbr.rel (%p11) target = $region8
  $region5: #{bottleneck_forward.4} parent=0 // loop_body
    %s15 = ssub.s32 %s10, 1
    %s16 = ssub.s32 %s10, 2
    %s17 = sadd.s32 %s10, 1
    %s18 = ssub.s32 %s10, %s17
    %p19 = scmp.eq.s32.totalorder %s18, 0
    %s21 = sadd.s32 %s20, 1
    %s22 = scalar_select %p19, %s20, %s21
    %p25 = pneg %p19
    %p26 = scmp.eq.s32.totalorder %s10, 3
    %p27 = por %p25, %p26
    %p28 = scmp.ne.s32.totalorder %s20, %s23
    %p29 = scmp.eq.s32.totalorder %s10, 0
    %p30 = por %p28, %p29
    %p31 = scmp.ne.s32.totalorder %s20, %s23
    %p32 = scmp.eq.s32.totalorder %s15, 3
    %p33 = por %p31, %p32
    %p34 = scmp.ne.s32.totalorder %s23, %s24
    %p35 = scmp.eq.s32.totalorder %s15, 0
    %p36 = por %p34, %p35
    %p37 = scmp.ne.s32.totalorder %s23, %s24
    %p38 = scmp.eq.s32.totalorder %s16, 3
    %p39 = por %p37, %p38
    %p41 = scmp.ne.s32.totalorder %s24, %s40
    %p42 = scmp.eq.s32.totalorder %s16, 0
    %p43 = por %p41, %p42
    %s45 = sadd.s32 %s44, 1
    %p48 = scmp.eq.s32.totalorder %s10, 3
    %p49 = scmp.ne.s32.totalorder %s44, %s46
    %p50 = scmp.eq.s32.totalorder %s10, 0
    %p51 = por %p49, %p50
    %p52 = scmp.ne.s32.totalorder %s44, %s46
    %p53 = scmp.eq.s32.totalorder %s15, 3
    %p54 = por %p52, %p53
    %p55 = scmp.ne.s32.totalorder %s46, %s47
    %p56 = scmp.eq.s32.totalorder %s15, 0
    %p57 = por %p55, %p56
    %p58 = scmp.ne.s32.totalorder %s46, %s47
    %p59 = scmp.eq.s32.totalorder %s16, 3
    %p60 = por %p58, %p59
    %p62 = scmp.ne.s32.totalorder %s47, %s61
    %p63 = scmp.eq.s32.totalorder %s16, 0
    %p64 = por %p62, %p63
    %s65 = ssub.s32 %s10, %s17
    %p66 = scmp.eq.s32.totalorder %s65, 0
    %s68 = sadd.s32 %s67, 1
    %s69 = scalar_select %p66, %s67, %s68
    %p72 = pneg %p66
    %p73 = scmp.eq.s32.totalorder %s10, 3
    %p74 = por %p72, %p73
    %p75 = scmp.ne.s32.totalorder %s67, %s70
    %p76 = scmp.eq.s32.totalorder %s10, 0
    %p77 = por %p75, %p76
    %p78 = scmp.ne.s32.totalorder %s67, %s70
    %p79 = scmp.eq.s32.totalorder %s15, 3
    %p80 = por %p78, %p79
    %p81 = scmp.ne.s32.totalorder %s70, %s71
    %p82 = scmp.eq.s32.totalorder %s15, 0
    %p83 = por %p81, %p82
    %p84 = scmp.ne.s32.totalorder %s70, %s71
    %p85 = scmp.eq.s32.totalorder %s16, 3
    %p86 = por %p84, %p85
    %p88 = scmp.ne.s32.totalorder %s71, %s87
    %p89 = scmp.eq.s32.totalorder %s16, 0
    %p90 = por %p88, %p89
    %s91 = ssub.s32 %s10, %s17
    %p92 = scmp.eq.s32.totalorder %s91, 0
    %s94 = sadd.s32 %s93, 1
    %s95 = scalar_select %p92, %s93, %s94
    %p98 = pneg %p92
    %p99 = scmp.eq.s32.totalorder %s10, 3
    %p100 = por %p98, %p99
    %p101 = scmp.ne.s32.totalorder %s93, %s96
    %p102 = scmp.eq.s32.totalorder %s10, 0
    %p103 = por %p101, %p102
    %p104 = scmp.ne.s32.totalorder %s93, %s96
    %p105 = scmp.eq.s32.totalorder %s15, 3
    %p106 = por %p104, %p105
    %p107 = scmp.ne.s32.totalorder %s96, %s97
    %p108 = scmp.eq.s32.totalorder %s15, 0
    %p109 = por %p107, %p108
    %p110 = scmp.ne.s32.totalorder %s96, %s97
    %p111 = scmp.eq.s32.totalorder %s16, 3
    %p112 = por %p110, %p111
    %p114 = scmp.ne.s32.totalorder %s97, %s113
    %p115 = scmp.eq.s32.totalorder %s16, 0
    %p116 = por %p114, %p115
    %p117 = scmp.le.s32.totalorder 1, %s10
    %p118 = scmp.lt.s32.totalorder %s10, 5
    %p119 = pnand %p117, %p118
    %p120 = pneg %p119
    // Predicated region
    $region9: #{bottleneck_forward.4} parent=5 // pred_check
      _
    $region10: #{bottleneck_forward.4} parent=5 // pred_check_branch
      %122 = sbr.rel (%p119) target = $region12
    $region11: #{bottleneck_forward.4} parent=5 // pred_region
      %s123 = ssub.s32 %s10, 1
      // Predicated region
      $region13: #{bottleneck_forward.4} parent=11 // pred_check
        %p124 = pneg %p57
      $region14: #{bottleneck_forward.4} parent=11 // pred_check_branch
        %126 = sbr.rel (%p124) target = $region16
      $region15: #{bottleneck_forward.4} parent=11 // pred_region
        _
      $region16: #{bottleneck_forward.4} parent=11 // pred_fallthru
        _
    $region12: #{bottleneck_forward.4} parent=5 // pred_fallthru
      _
    %p127 = scmp.lt.s32.totalorder %s10, 4
    // Predicated region
    $region17: #{bottleneck_forward.4} parent=5 // pred_check
      %p128 = pneg %p127
    $region18: #{bottleneck_forward.4} parent=5 // pred_check_branch
      %130 = sbr.rel (%p128) target = $region20
    $region19: #{bottleneck_forward.4} parent=5 // pred_region
      // Predicated region
      $region21: #{bottleneck_forward.4} parent=19 // pred_check
        %p131 = pneg %p30
      $region22: #{bottleneck_forward.4} parent=19 // pred_check_branch
        %133 = sbr.rel (%p131) target = $region24
      $region23: #{bottleneck_forward.4} parent=19 // pred_region
        %s134 = smul.u32 16, %s10
        %p135 = scmp.lt.s32.totalorder %s134, 63
        %s136 = scalar_select %p135, %s134, 63
        %s137 = smul.addr %s136, 8
        %s138 = scalar_lea.vmem %s0, %s137
        %s139 = smul.u32 16, %s10
      $region24: #{bottleneck_forward.4} parent=19 // pred_fallthru
        _
    $region20: #{bottleneck_forward.4} parent=5 // pred_fallthru
      _
    %p140 = scmp.le.s32.totalorder 1, %s10
    %p141 = scmp.lt.s32.totalorder %s10, 5
    %p142 = pnand %p140, %p141
    %p143 = pneg %p142
    // Predicated region
    $region25: #{bottleneck_forward.4} parent=5 // pred_check
      _
    $region26: #{bottleneck_forward.4} parent=5 // pred_check_branch
      %145 = sbr.rel (%p142) target = $region28
    $region27: #{bottleneck_forward.4} parent=5 // pred_region
      %s146 = ssub.s32 %s10, 1
      %s147 = smul.u32 16, %s15
      %p148 = scmp.lt.s32.totalorder %s147, 63
      %s149 = scalar_select %p148, %s147, 63
      %s150 = smul.addr %s149, 8
      %s151 = scalar_lea.vmem %s0, %s150
      %p152 = pneg %p36
      %p153 = pneg %p33
      %p154 = pneg %p57
      %p155 = pneg %p54
      %p156 = pneg %p83
      %p157 = pneg %p80
      %s158 = smul.u32 16, %s15
      %p159 = scmp.lt.s32.totalorder %s158, 63
      %s160 = scalar_select %p159, %s158, 63
      %s161 = smul.addr %s160, 4
      %s162 = scalar_lea.vmem %s2, %s161
      %p163 = pneg %p109
      %p164 = pneg %p106
      %p165 = scmp.lt.s32.totalorder %s15, 3
      %s166 = scalar_select %p165, %s15, 3
      %s167 = smul.addr %s166, 2
      %s168 = scalar_lea.vmem %s3, %s167
      %s169 = smul.u32 16, %s15
      %p170 = scmp.lt.s32.totalorder %s169, 63
      %s171 = scalar_select %p170, %s169, 63
      %s172 = smul.addr %s171, 8
      %s173 = scalar_lea.vmem %s0, %s172
      %s174 = smul.u32 16, %s15
      %s175 = smul.u32 16, %s15
      %p176 = scmp.lt.s32.totalorder %s175, 63
      %s177 = scalar_select %p176, %s175, 63
      %s178 = smul.addr %s177, 4
      %s179 = scalar_lea.vmem %s2, %s178
      %s180 = smul.u32 16, %s15
      %p181 = scmp.lt.s32.totalorder %s15, 3
      %s182 = scalar_select %p181, %s15, 3
      %s183 = smul.addr %s182, 2
      %s184 = scalar_lea.vmem %s3, %s183
      %v186 = vld [vmem:[%s173] sm:$0xff]
      %v187 = vld [vmem:[%s173 + $0x8] sm:$0xff]
      %v188 = vld [vmem:[%s173 + $0x10] sm:$0xff]
      %v189 = vld [vmem:[%s173 + $0x18] sm:$0xff]
      %v190 = vld [vmem:[%s173 + $0x20] sm:$0xff]
      %v191 = vld [vmem:[%s173 + $0x28] sm:$0xff]
      %v192 = vld [vmem:[%s173 + $0x30] sm:$0xff]
      %v193 = vld [vmem:[%s173 + $0x38] sm:$0xff]
      %v194 = vld [vmem:[%s173 + $0x40] sm:$0xff]
      %v195 = vld [vmem:[%s173 + $0x48] sm:$0xff]
      %v196 = vld [vmem:[%s173 + $0x50] sm:$0xff]
      %v197 = vld [vmem:[%s173 + $0x58] sm:$0xff]
      %v198 = vld [vmem:[%s173 + $0x60] sm:$0xff]
      %v199 = vld [vmem:[%s173 + $0x68] sm:$0xff]
      %v200 = vld [vmem:[%s173 + $0x70] sm:$0xff]
      %v201 = vld [vmem:[%s173 + $0x78] sm:$0xff]
      %v202 = vpack.c.bf16 %v187, %v186
      %v203 = vpack.c.bf16 %v189, %v188
      %v204 = vpack.c.bf16 %v191, %v190
      %v205 = vpack.c.bf16 %v193, %v192
      %v206 = vpack.c.bf16 %v195, %v194
      %v207 = vpack.c.bf16 %v197, %v196
      %v208 = vpack.c.bf16 %v199, %v198
      %v209 = vpack.c.bf16 %v201, %v200
      %v210 = vld [vmem:[%s1] sm:$0xf]
      %v211 = vld [vmem:[%s1 + $0x4] sm:$0xf]
      %v214 = vunpack.c.l.b16 %v210
      %v215 = vunpack.c.l.b16 %v211
      %v216 = vpack.c.b16 %v215, %v214
      %vm218 = vcmask 130048
      %v220 = vsel %vm218, %v202, 0
      %v223 = vsel %vm218, %v203, 0
      %v226 = vsel %vm218, %v204, 0
      %v229 = vsel %vm218, %v205, 0
      %v232 = vsel %vm218, %v206, 0
      %v235 = vsel %vm218, %v207, 0
      %v238 = vsel %vm218, %v208, 0
      %v241 = vsel %vm218, %v209, 0
      %243 = vmatpush.bf16.msra.mxu0 0
      %244 = vmatpush.bf16.msra.mxu0 0
      %245 = vmatpush.bf16.msra.mxu0 0
      %246 = vmatpush.bf16.msra.mxu0 0
      %247 = vmatpush.bf16.msra.mxu0 0
      %248 = vmatpush.bf16.msra.mxu0 0
      %249 = vmatpush.bf16.msra.mxu0 0
      %250 = vmatpush.bf16.msra.mxu0 %v216
      %251 = vmatmul.bf16.gmra.mxu0 %v220
      %v252 = vpop.f32.mrf.mxu0
      %v253 = vadd.f32 0.0, %v252
      %v254 = vpop.f32.mrf.mxu0
      %v255 = vadd.f32 0.0, %v254
      %256 = vmatmul.bf16.gmra.mxu0 %v223
      %v257 = vpop.f32.mrf.mxu0
      %v258 = vadd.f32 0.0, %v257
      %v259 = vpop.f32.mrf.mxu0
      %v260 = vadd.f32 0.0, %v259
      %261 = vmatmul.bf16.gmra.mxu0 %v226
      %v262 = vpop.f32.mrf.mxu0
      %v263 = vadd.f32 0.0, %v262
      %v264 = vpop.f32.mrf.mxu0
      %v265 = vadd.f32 0.0, %v264
      %266 = vmatmul.bf16.gmra.mxu0 %v229
      %v267 = vpop.f32.mrf.mxu0
      %v268 = vadd.f32 0.0, %v267
      %v269 = vpop.f32.mrf.mxu0
      %v270 = vadd.f32 0.0, %v269
      %271 = vmatmul.bf16.gmra.mxu0 %v232
      %v272 = vpop.f32.mrf.mxu0
      %v273 = vadd.f32 0.0, %v272
      %v274 = vpop.f32.mrf.mxu0
      %v275 = vadd.f32 0.0, %v274
      %276 = vmatmul.bf16.gmra.mxu0 %v235
      %v277 = vpop.f32.mrf.mxu0
      %v278 = vadd.f32 0.0, %v277
      %v279 = vpop.f32.mrf.mxu0
      %v280 = vadd.f32 0.0, %v279
      %281 = vmatmul.bf16.gmra.mxu0 %v238
      %v282 = vpop.f32.mrf.mxu0
      %v283 = vadd.f32 0.0, %v282
      %v284 = vpop.f32.mrf.mxu0
      %v285 = vadd.f32 0.0, %v284
      %286 = vmatmul.bf16.gmra.mxu0 %v241
      %v287 = vpop.f32.mrf.mxu0
      %v288 = vadd.f32 0.0, %v287
      %v289 = vpop.f32.mrf.mxu0
      %v290 = vadd.f32 0.0, %v289
      %291 = vdwg.mxu0
      %v292 = vpack.c.bf16 %v253, %v253
      %v293 = vpack.c.bf16 %v255, %v255
      %v294 = vpack.c.bf16 %v258, %v258
      %v295 = vpack.c.bf16 %v260, %v260
      %v296 = vpack.c.bf16 %v263, %v263
      %v297 = vpack.c.bf16 %v265, %v265
      %v298 = vpack.c.bf16 %v268, %v268
      %v299 = vpack.c.bf16 %v270, %v270
      %v300 = vpack.c.bf16 %v273, %v273
      %v301 = vpack.c.bf16 %v275, %v275
      %v302 = vpack.c.bf16 %v278, %v278
      %v303 = vpack.c.bf16 %v280, %v280
      %v304 = vpack.c.bf16 %v283, %v283
      %v305 = vpack.c.bf16 %v285, %v285
      %v306 = vpack.c.bf16 %v288, %v288
      %v307 = vpack.c.bf16 %v290, %v290
      %vm308 = vcmask 27648
      %309 = vst.msk [vmem:[%s179] sm:$0xf] %vm308, %v292
      %310 = vst.msk [vmem:[%s179 + $0x4] sm:$0xf] %vm308, %v293
      %311 = vst.msk [vmem:[%s179 + $0x8] sm:$0xf] %vm308, %v294
      %312 = vst.msk [vmem:[%s179 + $0xc] sm:$0xf] %vm308, %v295
      %313 = vst.msk [vmem:[%s179 + $0x10] sm:$0xf] %vm308, %v296
      %314 = vst.msk [vmem:[%s179 + $0x14] sm:$0xf] %vm308, %v297
      %315 = vst.msk [vmem:[%s179 + $0x18] sm:$0xf] %vm308, %v298
      %316 = vst.msk [vmem:[%s179 + $0x1c] sm:$0xf] %vm308, %v299
      %317 = vst.msk [vmem:[%s179 + $0x20] sm:$0xf] %vm308, %v300
      %318 = vst.msk [vmem:[%s179 + $0x24] sm:$0xf] %vm308, %v301
      %319 = vst.msk [vmem:[%s179 + $0x28] sm:$0xf] %vm308, %v302
      %320 = vst.msk [vmem:[%s179 + $0x2c] sm:$0xf] %vm308, %v303
      %321 = vst.msk [vmem:[%s179 + $0x30] sm:$0xf] %vm308, %v304
      %322 = vst.msk [vmem:[%s179 + $0x34] sm:$0xf] %vm308, %v305
      %323 = vst.msk [vmem:[%s179 + $0x38] sm:$0xf] %vm308, %v306
      %324 = vst.msk [vmem:[%s179 + $0x3c] sm:$0xf] %vm308, %v307
      %vm325 = vcmask 31744
      %v326 = vsel %vm325, %v253, 0.0
      %v327 = vsel %vm325, %v255, 0.0
      %v328 = vadd.f32 %v326, %v327
      %v329 = vsel %vm325, %v258, 0.0
      %v330 = vadd.f32 %v328, %v329
      %v331 = vsel %vm325, %v260, 0.0
      %v332 = vadd.f32 %v330, %v331
      %v333 = vsel %vm325, %v263, 0.0
      %v334 = vadd.f32 %v332, %v333
      %v335 = vsel %vm325, %v265, 0.0
      %v336 = vadd.f32 %v334, %v335
      %v337 = vsel %vm325, %v268, 0.0
      %v338 = vadd.f32 %v336, %v337
      %v339 = vsel %vm325, %v270, 0.0
      %v340 = vadd.f32 %v338, %v339
      %v341 = vsel %vm325, %v273, 0.0
      %v342 = vadd.f32 %v340, %v341
      %v343 = vsel %vm325, %v275, 0.0
      %v344 = vadd.f32 %v342, %v343
      %v345 = vsel %vm325, %v278, 0.0
      %v346 = vadd.f32 %v344, %v345
      %v347 = vsel %vm325, %v280, 0.0
      %v348 = vadd.f32 %v346, %v347
      %v349 = vsel %vm325, %v283, 0.0
      %v350 = vadd.f32 %v348, %v349
      %v351 = vsel %vm325, %v285, 0.0
      %v352 = vadd.f32 %v350, %v351
      %v353 = vsel %vm325, %v288, 0.0
      %v354 = vadd.f32 %v352, %v353
      %v355 = vsel %vm325, %v290, 0.0
      %v356 = vadd.f32 %v354, %v355
      %v357 = vrot.slane %v356, 4
      %v358 = vadd.f32 %v356, %v357
      %v359 = vrot.slane %v358, 2
      %v360 = vadd.f32 %v358, %v359
      %v361 = vrot.slane %v360, 1
      %v362 = vadd.f32 %v360, %v361
      %v363 = vmul.f32 %v253, %v253
      %v364 = vmul.f32 %v255, %v255
      %v365 = vmul.f32 %v258, %v258
      %v366 = vmul.f32 %v260, %v260
      %v367 = vmul.f32 %v263, %v263
      %v368 = vmul.f32 %v265, %v265
      %v369 = vmul.f32 %v268, %v268
      %v370 = vmul.f32 %v270, %v270
      %v371 = vmul.f32 %v273, %v273
      %v372 = vmul.f32 %v275, %v275
      %v373 = vmul.f32 %v278, %v278
      %v374 = vmul.f32 %v280, %v280
      %v375 = vmul.f32 %v283, %v283
      %v376 = vmul.f32 %v285, %v285
      %v377 = vmul.f32 %v288, %v288
      %v378 = vmul.f32 %v290, %v290
      %v379 = vsel %vm325, %v363, 0.0
      %v380 = vsel %vm325, %v364, 0.0
      %v381 = vadd.f32 %v379, %v380
      %v382 = vsel %vm325, %v365, 0.0
      %v383 = vadd.f32 %v381, %v382
      %v384 = vsel %vm325, %v366, 0.0
      %v385 = vadd.f32 %v383, %v384
      %v386 = vsel %vm325, %v367, 0.0
      %v387 = vadd.f32 %v385, %v386
      %v388 = vsel %vm325, %v368, 0.0
      %v389 = vadd.f32 %v387, %v388
      %v390 = vsel %vm325, %v369, 0.0
      %v391 = vadd.f32 %v389, %v390
      %v392 = vsel %vm325, %v370, 0.0
      %v393 = vadd.f32 %v391, %v392
      %v394 = vsel %vm325, %v371, 0.0
      %v395 = vadd.f32 %v393, %v394
      %v396 = vsel %vm325, %v372, 0.0
      %v397 = vadd.f32 %v395, %v396
      %v398 = vsel %vm325, %v373, 0.0
      %v399 = vadd.f32 %v397, %v398
      %v400 = vsel %vm325, %v374, 0.0
      %v401 = vadd.f32 %v399, %v400
      %v402 = vsel %vm325, %v375, 0.0
      %v403 = vadd.f32 %v401, %v402
      %v404 = vsel %vm325, %v376, 0.0
      %v405 = vadd.f32 %v403, %v404
      %v406 = vsel %vm325, %v377, 0.0
      %v407 = vadd.f32 %v405, %v406
      %v408 = vsel %vm325, %v378, 0.0
      %v409 = vadd.f32 %v407, %v408
      %v410 = vrot.slane %v409, 4
      %v411 = vadd.f32 %v409, %v410
      %v412 = vrot.slane %v411, 2
      %v413 = vadd.f32 %v411, %v412
      %v414 = vrot.slane %v413, 1
      %v415 = vadd.f32 %v413, %v414
      %vm416 = vcmask 1040384
      %v417 = vsel %vm416, %v362, %v415
      %vm418 = vcmask 25600
      %419 = vst.msk [vmem:[%s184] sm:$0x3] %vm418, %v417
      %s420 = smul.u32 16, %s15
      %p421 = scmp.lt.s32.totalorder %s420, 63
      %s422 = scalar_select %p421, %s420, 63
      %s423 = smul.addr %s422, 4
      %s424 = scalar_lea.vmem %s2, %s423
      %p425 = scmp.lt.s32.totalorder %s15, 3
      %s426 = scalar_select %p425, %s15, 3
      %s427 = smul.addr %s426, 2
      %s428 = scalar_lea.vmem %s3, %s427
      // Predicated region
      $region29: #{bottleneck_forward.4} parent=27 // pred_check
        %p429 = pneg %p80
      $region30: #{bottleneck_forward.4} parent=27 // pred_check_branch
        %431 = sbr.rel (%p429) target = $region32
      $region31: #{bottleneck_forward.4} parent=27 // pred_region
        %s432 = smul.u32 16, %s15
      $region32: #{bottleneck_forward.4} parent=27 // pred_fallthru
        _
      // Predicated region
      $region33: #{bottleneck_forward.4} parent=27 // pred_check
        %p433 = pneg %p106
      $region34: #{bottleneck_forward.4} parent=27 // pred_check_branch
        %435 = sbr.rel (%p433) target = $region36
      $region35: #{bottleneck_forward.4} parent=27 // pred_region
        _
      $region36: #{bottleneck_forward.4} parent=27 // pred_fallthru
        _
    $region28: #{bottleneck_forward.4} parent=5 // pred_fallthru
      _
    %p436 = scmp.le.s32.totalorder 2, %s10
    // Predicated region
    $region37: #{bottleneck_forward.4} parent=5 // pred_check
      %p437 = pneg %p436
    $region38: #{bottleneck_forward.4} parent=5 // pred_check_branch
      %439 = sbr.rel (%p437) target = $region40
    $region39: #{bottleneck_forward.4} parent=5 // pred_region
      %s440 = ssub.s32 %s10, 2
      // Predicated region
      $region41: #{bottleneck_forward.4} parent=39 // pred_check
        %p441 = pneg %p86
      $region42: #{bottleneck_forward.4} parent=39 // pred_check_branch
        %443 = sbr.rel (%p441) target = $region44
      $region43: #{bottleneck_forward.4} parent=39 // pred_region
        %s444 = smul.u32 16, %s16
        %p445 = scmp.lt.s32.totalorder %s444, 63
        %s446 = scalar_select %p445, %s444, 63
        %s447 = smul.addr %s446, 4
        %s448 = scalar_lea.vmem %s2, %s447
      $region44: #{bottleneck_forward.4} parent=39 // pred_fallthru
        _
      // Predicated region
      $region45: #{bottleneck_forward.4} parent=39 // pred_check
        %p449 = pneg %p112
      $region46: #{bottleneck_forward.4} parent=39 // pred_check_branch
        %451 = sbr.rel (%p449) target = $region48
      $region47: #{bottleneck_forward.4} parent=39 // pred_region
        %p452 = scmp.lt.s32.totalorder %s16, 3
        %s453 = scalar_select %p452, %s16, 3
        %s454 = smul.addr %s453, 2
        %s455 = scalar_lea.vmem %s3, %s454
      $region48: #{bottleneck_forward.4} parent=39 // pred_fallthru
        _
    $region40: #{bottleneck_forward.4} parent=5 // pred_fallthru
      _
  $region6: #{bottleneck_forward.4} parent=0 // loop_footer
    %s14 = sadd.s32 1, %s10
  $region7: #{bottleneck_forward.4} parent=0 // loop_footer_branch
    %9 = sbr.rel target = $region3
  $region8: #{bottleneck_forward.4} parent=0 // loop_exit
    _

// kernel: bottleneck_forward.7
$region0: #{bottleneck_forward.7}
  #allocation0 [shape = 'u32[]', space=smem, size = 0x4, offset = 0x4, fixed_abs, tag = 'smem constant byte address 0x4 - core index']
  #allocation1 [shape = 'u32[72,128]{1,0:T(1,128)}', space=vmem, size = 0x9000, scoped, tag = 'internal scratch']
  %s0 = inlined_call_operand.vmem [shape: bf16[512,16], index: 0, kind: input, shape index: {}]
  %s1 = inlined_call_operand.vmem [shape: f32[512,16], index: 1, kind: input, shape index: {}]
  %s2 = inlined_call_operand.vmem [shape: f32[1,16], index: 2, kind: input, shape index: {}]
  %s3 = inlined_call_operand.vmem [shape: f32[1,16], index: 3, kind: input, shape index: {}]
  %s4 = inlined_call_operand.vmem [shape: f32[512,16], index: 4, kind: output, shape index: {}]
  %s5 = sld [smem:[#allocation0]]
  $region49: #{bottleneck_forward.7} parent=0
    _
  %s7 = ssub.s32 1, %s5
  %s8 = scalar_select 0, %s7, %s5
  loop: start=0, step=1, limit=6
  $region2: #{bottleneck_forward.7} parent=0 // loop_pre_header
    _
  $region3: #{bottleneck_forward.7} parent=0 // loop_header
    %s10 = sphi 0, %s14
    %p11 = scmp.ge.s32.totalorder %s10, 6
    %s20 = sphi 0, %s22
    %s23 = sphi 0, %s20
    %s24 = sphi 0, %s23
    %s40 = sphi 0, %s24
    %s46 = sphi 0, %s48
    %s49 = sphi 0, %s46
    %s50 = sphi 0, %s49
    %s66 = sphi 0, %s50
    %s70 = sphi 0, %s70
    %s72 = sphi 0, %s70
    %s73 = sphi 0, %s72
    %s87 = sphi 0, %s73
    %s91 = sphi 0, %s91
    %s93 = sphi 0, %s91
    %s94 = sphi 0, %s93
    %s108 = sphi 0, %s94
    %s114 = sphi 0, %s116
    %s117 = sphi 0, %s114
    %s118 = sphi 0, %s117
    %s134 = sphi 0, %s118
  $region4: #{bottleneck_forward.7} parent=0 // loop_header_branch
    %13 = sbr.rel (%p11) target = $region8
  $region5: #{bottleneck_forward.7} parent=0 // loop_body
    %s15 = ssub.s32 %s10, 1
    %s16 = ssub.s32 %s10, 2
    %s17 = sadd.s32 %s10, 1
    %s18 = ssub.s32 %s10, %s17
    %p19 = scmp.eq.s32.totalorder %s18, 0
    %s21 = sadd.s32 %s20, 1
    %s22 = scalar_select %p19, %s20, %s21
    %p25 = pneg %p19
    %p26 = scmp.eq.s32.totalorder %s10, 3
    %p27 = por %p25, %p26
    %p28 = scmp.ne.s32.totalorder %s20, %s23
    %p29 = scmp.eq.s32.totalorder %s10, 0
    %p30 = por %p28, %p29
    %p31 = scmp.ne.s32.totalorder %s20, %s23
    %p32 = scmp.eq.s32.totalorder %s15, 3
    %p33 = por %p31, %p32
    %p34 = scmp.ne.s32.totalorder %s23, %s24
    %p35 = scmp.eq.s32.totalorder %s15, 0
    %p36 = por %p34, %p35
    %p37 = scmp.ne.s32.totalorder %s23, %s24
    %p38 = scmp.eq.s32.totalorder %s16, 3
    %p39 = por %p37, %p38
    %p41 = scmp.ne.s32.totalorder %s24, %s40
    %p42 = scmp.eq.s32.totalorder %s16, 0
    %p43 = por %p41, %p42
    %s44 = ssub.s32 %s10, %s17
    %p45 = scmp.eq.s32.totalorder %s44, 0
    %s47 = sadd.s32 %s46, 1
    %s48 = scalar_select %p45, %s46, %s47
    %p51 = pneg %p45
    %p52 = scmp.eq.s32.totalorder %s10, 3
    %p53 = por %p51, %p52
    %p54 = scmp.ne.s32.totalorder %s46, %s49
    %p55 = scmp.eq.s32.totalorder %s10, 0
    %p56 = por %p54, %p55
    %p57 = scmp.ne.s32.totalorder %s46, %s49
    %p58 = scmp.eq.s32.totalorder %s15, 3
    %p59 = por %p57, %p58
    %p60 = scmp.ne.s32.totalorder %s49, %s50
    %p61 = scmp.eq.s32.totalorder %s15, 0
    %p62 = por %p60, %p61
    %p63 = scmp.ne.s32.totalorder %s49, %s50
    %p64 = scmp.eq.s32.totalorder %s16, 3
    %p65 = por %p63, %p64
    %p67 = scmp.ne.s32.totalorder %s50, %s66
    %p68 = scmp.eq.s32.totalorder %s16, 0
    %p69 = por %p67, %p68
    %s71 = sadd.s32 %s70, 1
    %p74 = scmp.eq.s32.totalorder %s10, 3
    %p75 = scmp.ne.s32.totalorder %s70, %s72
    %p76 = scmp.eq.s32.totalorder %s10, 0
    %p77 = por %p75, %p76
    %p78 = scmp.ne.s32.totalorder %s70, %s72
    %p79 = scmp.eq.s32.totalorder %s15, 3
    %p80 = por %p78, %p79
    %p81 = scmp.ne.s32.totalorder %s72, %s73
    %p82 = scmp.eq.s32.totalorder %s15, 0
    %p83 = por %p81, %p82
    %p84 = scmp.ne.s32.totalorder %s72, %s73
    %p85 = scmp.eq.s32.totalorder %s16, 3
    %p86 = por %p84, %p85
    %p88 = scmp.ne.s32.totalorder %s73, %s87
    %p89 = scmp.eq.s32.totalorder %s16, 0
    %p90 = por %p88, %p89
    %s92 = sadd.s32 %s91, 1
    %p95 = scmp.eq.s32.totalorder %s10, 3
    %p96 = scmp.ne.s32.totalorder %s91, %s93
    %p97 = scmp.eq.s32.totalorder %s10, 0
    %p98 = por %p96, %p97
    %p99 = scmp.ne.s32.totalorder %s91, %s93
    %p100 = scmp.eq.s32.totalorder %s15, 3
    %p101 = por %p99, %p100
    %p102 = scmp.ne.s32.totalorder %s93, %s94
    %p103 = scmp.eq.s32.totalorder %s15, 0
    %p104 = por %p102, %p103
    %p105 = scmp.ne.s32.totalorder %s93, %s94
    %p106 = scmp.eq.s32.totalorder %s16, 3
    %p107 = por %p105, %p106
    %p109 = scmp.ne.s32.totalorder %s94, %s108
    %p110 = scmp.eq.s32.totalorder %s16, 0
    %p111 = por %p109, %p110
    %s112 = ssub.s32 %s10, %s17
    %p113 = scmp.eq.s32.totalorder %s112, 0
    %s115 = sadd.s32 %s114, 1
    %s116 = scalar_select %p113, %s114, %s115
    %p119 = pneg %p113
    %p120 = scmp.eq.s32.totalorder %s10, 3
    %p121 = por %p119, %p120
    %p122 = scmp.ne.s32.totalorder %s114, %s117
    %p123 = scmp.eq.s32.totalorder %s10, 0
    %p124 = por %p122, %p123
    %p125 = scmp.ne.s32.totalorder %s114, %s117
    %p126 = scmp.eq.s32.totalorder %s15, 3
    %p127 = por %p125, %p126
    %p128 = scmp.ne.s32.totalorder %s117, %s118
    %p129 = scmp.eq.s32.totalorder %s15, 0
    %p130 = por %p128, %p129
    %p131 = scmp.ne.s32.totalorder %s117, %s118
    %p132 = scmp.eq.s32.totalorder %s16, 3
    %p133 = por %p131, %p132
    %p135 = scmp.ne.s32.totalorder %s118, %s134
    %p136 = scmp.eq.s32.totalorder %s16, 0
    %p137 = por %p135, %p136
    %p138 = scmp.le.s32.totalorder 1, %s10
    %p139 = scmp.lt.s32.totalorder %s10, 5
    %p140 = pnand %p138, %p139
    %p141 = pneg %p140
    // Predicated region
    $region9: #{bottleneck_forward.7} parent=5 // pred_check
      _
    $region10: #{bottleneck_forward.7} parent=5 // pred_check_branch
      %143 = sbr.rel (%p140) target = $region12
    $region11: #{bottleneck_forward.7} parent=5 // pred_region
      %s144 = ssub.s32 %s10, 1
      // Predicated region
      $region13: #{bottleneck_forward.7} parent=11 // pred_check
        %p145 = pneg %p83
      $region14: #{bottleneck_forward.7} parent=11 // pred_check_branch
        %147 = sbr.rel (%p145) target = $region16
      $region15: #{bottleneck_forward.7} parent=11 // pred_region
        _
      $region16: #{bottleneck_forward.7} parent=11 // pred_fallthru
        _
      // Predicated region
      $region17: #{bottleneck_forward.7} parent=11 // pred_check
        %p148 = pneg %p104
      $region18: #{bottleneck_forward.7} parent=11 // pred_check_branch
        %150 = sbr.rel (%p148) target = $region20
      $region19: #{bottleneck_forward.7} parent=11 // pred_region
        _
      $region20: #{bottleneck_forward.7} parent=11 // pred_fallthru
        _
    $region12: #{bottleneck_forward.7} parent=5 // pred_fallthru
      _
    %p151 = scmp.lt.s32.totalorder %s10, 4
    // Predicated region
    $region21: #{bottleneck_forward.7} parent=5 // pred_check
      %p152 = pneg %p151
    $region22: #{bottleneck_forward.7} parent=5 // pred_check_branch
      %154 = sbr.rel (%p152) target = $region24
    $region23: #{bottleneck_forward.7} parent=5 // pred_region
      // Predicated region
      $region25: #{bottleneck_forward.7} parent=23 // pred_check
        %p155 = pneg %p30
      $region26: #{bottleneck_forward.7} parent=23 // pred_check_branch
        %157 = sbr.rel (%p155) target = $region28
      $region27: #{bottleneck_forward.7} parent=23 // pred_region
        %s158 = smul.u32 16, %s10
        %p159 = scmp.lt.s32.totalorder %s158, 63
        %s160 = scalar_select %p159, %s158, 63
        %s161 = smul.addr %s160, 4
        %s162 = scalar_lea.vmem %s0, %s161
        %s163 = smul.u32 16, %s10
      $region28: #{bottleneck_forward.7} parent=23 // pred_fallthru
        _
      // Predicated region
      $region29: #{bottleneck_forward.7} parent=23 // pred_check
        %p164 = pneg %p56
      $region30: #{bottleneck_forward.7} parent=23 // pred_check_branch
        %166 = sbr.rel (%p164) target = $region32
      $region31: #{bottleneck_forward.7} parent=23 // pred_region
        %s167 = smul.u32 16, %s10
        %p168 = scmp.lt.s32.totalorder %s167, 63
        %s169 = scalar_select %p168, %s167, 63
        %s170 = smul.addr %s169, 8
        %s171 = scalar_lea.vmem %s1, %s170
        %s172 = smul.u32 16, %s10
      $region32: #{bottleneck_forward.7} parent=23 // pred_fallthru
        _
    $region24: #{bottleneck_forward.7} parent=5 // pred_fallthru
      _
    %p173 = scmp.le.s32.totalorder 1, %s10
    %p174 = scmp.lt.s32.totalorder %s10, 5
    %p175 = pnand %p173, %p174
    %p176 = pneg %p175
    // Predicated region
    $region33: #{bottleneck_forward.7} parent=5 // pred_check
      _
    $region34: #{bottleneck_forward.7} parent=5 // pred_check_branch
      %178 = sbr.rel (%p175) target = $region36
    $region35: #{bottleneck_forward.7} parent=5 // pred_region
      %s179 = ssub.s32 %s10, 1
      %s180 = smul.u32 16, %s15
      %p181 = scmp.lt.s32.totalorder %s180, 63
      %s182 = scalar_select %p181, %s180, 63
      %s183 = smul.addr %s182, 4
      %s184 = scalar_lea.vmem %s0, %s183
      %p185 = pneg %p36
      %p186 = pneg %p33
      %s187 = smul.u32 16, %s15
      %p188 = scmp.lt.s32.totalorder %s187, 63
      %s189 = scalar_select %p188, %s187, 63
      %s190 = smul.addr %s189, 8
      %s191 = scalar_lea.vmem %s1, %s190
      %p192 = pneg %p62
      %p193 = pneg %p59
      %p194 = pneg %p83
      %p195 = pneg %p80
      %p196 = pneg %p104
      %p197 = pneg %p101
      %p198 = pneg %p130
      %p199 = pneg %p127
      %s200 = smul.u32 16, %s15
      %p201 = scmp.lt.s32.totalorder %s200, 63
      %s202 = scalar_select %p201, %s200, 63
      %s203 = smul.addr %s202, 8
      %s204 = scalar_lea.vmem %s4, %s203
      %s205 = smul.u32 16, %s15
      %p206 = scmp.lt.s32.totalorder %s205, 63
      %s207 = scalar_select %p206, %s205, 63
      %s208 = smul.addr %s207, 4
      %s209 = scalar_lea.vmem %s0, %s208
      %s210 = smul.u32 16, %s15
      %s211 = smul.u32 16, %s15
      %p212 = scmp.lt.s32.totalorder %s211, 63
      %s213 = scalar_select %p212, %s211, 63
      %s214 = smul.addr %s213, 8
      %s215 = scalar_lea.vmem %s1, %s214
      %s216 = smul.u32 16, %s15
      %s217 = smul.u32 16, %s15
      %p218 = scmp.lt.s32.totalorder %s217, 63
      %s219 = scalar_select %p218, %s217, 63
      %s220 = smul.addr %s219, 8
      %s221 = scalar_lea.vmem %s4, %s220
      %s222 = smul.u32 16, %s15
      %v223 = vld [vmem:[%s209] sm:$0xf]
      %v224 = vld [vmem:[%s209 + $0x4] sm:$0xf]
      %v225 = vld [vmem:[%s209 + $0x8] sm:$0xf]
      %v226 = vld [vmem:[%s209 + $0xc] sm:$0xf]
      %v227 = vld [vmem:[%s209 + $0x10] sm:$0xf]
      %v228 = vld [vmem:[%s209 + $0x14] sm:$0xf]
      %v229 = vld [vmem:[%s209 + $0x18] sm:$0xf]
      %v230 = vld [vmem:[%s209 + $0x1c] sm:$0xf]
      %v231 = vld [vmem:[%s209 + $0x20] sm:$0xf]
      %v232 = vld [vmem:[%s209 + $0x24] sm:$0xf]
      %v233 = vld [vmem:[%s209 + $0x28] sm:$0xf]
      %v234 = vld [vmem:[%s209 + $0x2c] sm:$0xf]
      %v235 = vld [vmem:[%s209 + $0x30] sm:$0xf]
      %v236 = vld [vmem:[%s209 + $0x34] sm:$0xf]
      %v237 = vld [vmem:[%s209 + $0x38] sm:$0xf]
      %v238 = vld [vmem:[%s209 + $0x3c] sm:$0xf]
      %v239 = vunpack.c.l.bf16 %v223
      %v240 = vunpack.c.l.bf16 %v224
      %v241 = vunpack.c.l.bf16 %v225
      %v242 = vunpack.c.l.bf16 %v226
      %v243 = vunpack.c.l.bf16 %v227
      %v244 = vunpack.c.l.bf16 %v228
      %v245 = vunpack.c.l.bf16 %v229
      %v246 = vunpack.c.l.bf16 %v230
      %v247 = vunpack.c.l.bf16 %v231
      %v248 = vunpack.c.l.bf16 %v232
      %v249 = vunpack.c.l.bf16 %v233
      %v250 = vunpack.c.l.bf16 %v234
      %v251 = vunpack.c.l.bf16 %v235
      %v252 = vunpack.c.l.bf16 %v236
      %v253 = vunpack.c.l.bf16 %v237
      %v254 = vunpack.c.l.bf16 %v238
      %v255 = vld [vmem:[%s2] sm:$0x1]
      %v257 = vperm.slane %v255, 0
      %v259 = vmul.f32 %v239, %v257
      %v260 = vmul.f32 %v240, %v257
      %v261 = vmul.f32 %v241, %v257
      %v262 = vmul.f32 %v242, %v257
      %v263 = vmul.f32 %v243, %v257
      %v264 = vmul.f32 %v244, %v257
      %v265 = vmul.f32 %v245, %v257
      %v266 = vmul.f32 %v246, %v257
      %v267 = vmul.f32 %v247, %v257
      %v268 = vmul.f32 %v248, %v257
      %v269 = vmul.f32 %v249, %v257
      %v270 = vmul.f32 %v250, %v257
      %v271 = vmul.f32 %v251, %v257
      %v272 = vmul.f32 %v252, %v257
      %v273 = vmul.f32 %v253, %v257
      %v274 = vmul.f32 %v254, %v257
      %v275 = vld [vmem:[%s3] sm:$0x1]
      %v277 = vperm.slane %v275, 0
      %v279 = vadd.f32 %v259, %v277
      %v280 = vadd.f32 %v260, %v277
      %v281 = vadd.f32 %v261, %v277
      %v282 = vadd.f32 %v262, %v277
      %v283 = vadd.f32 %v263, %v277
      %v284 = vadd.f32 %v264, %v277
      %v285 = vadd.f32 %v265, %v277
      %v286 = vadd.f32 %v266, %v277
      %v287 = vadd.f32 %v267, %v277
      %v288 = vadd.f32 %v268, %v277
      %v289 = vadd.f32 %v269, %v277
      %v290 = vadd.f32 %v270, %v277
      %v291 = vadd.f32 %v271, %v277
      %v292 = vadd.f32 %v272, %v277
      %v293 = vadd.f32 %v273, %v277
      %v294 = vadd.f32 %v274, %v277
      %v295 = vld [vmem:[%s215] sm:$0xff]
      %v296 = vld [vmem:[%s215 + $0x8] sm:$0xff]
      %v297 = vld [vmem:[%s215 + $0x10] sm:$0xff]
      %v298 = vld [vmem:[%s215 + $0x18] sm:$0xff]
      %v299 = vld [vmem:[%s215 + $0x20] sm:$0xff]
      %v300 = vld [vmem:[%s215 + $0x28] sm:$0xff]
      %v301 = vld [vmem:[%s215 + $0x30] sm:$0xff]
      %v302 = vld [vmem:[%s215 + $0x38] sm:$0xff]
      %v303 = vld [vmem:[%s215 + $0x40] sm:$0xff]
      %v304 = vld [vmem:[%s215 + $0x48] sm:$0xff]
      %v305 = vld [vmem:[%s215 + $0x50] sm:$0xff]
      %v306 = vld [vmem:[%s215 + $0x58] sm:$0xff]
      %v307 = vld [vmem:[%s215 + $0x60] sm:$0xff]
      %v308 = vld [vmem:[%s215 + $0x68] sm:$0xff]
      %v309 = vld [vmem:[%s215 + $0x70] sm:$0xff]
      %v310 = vld [vmem:[%s215 + $0x78] sm:$0xff]
      %v311 = vadd.f32 %v279, %v295
      %v312 = vadd.f32 %v280, %v296
      %v313 = vadd.f32 %v281, %v297
      %v314 = vadd.f32 %v282, %v298
      %v315 = vadd.f32 %v283, %v299
      %v316 = vadd.f32 %v284, %v300
      %v317 = vadd.f32 %v285, %v301
      %v318 = vadd.f32 %v286, %v302
      %v319 = vadd.f32 %v287, %v303
      %v320 = vadd.f32 %v288, %v304
      %v321 = vadd.f32 %v289, %v305
      %v322 = vadd.f32 %v290, %v306
      %v323 = vadd.f32 %v291, %v307
      %v324 = vadd.f32 %v292, %v308
      %v325 = vadd.f32 %v293, %v309
      %v326 = vadd.f32 %v294, %v310
      %v327 = vmax.f32 %v311, 0.0
      %v328 = vmax.f32 %v312, 0.0
      %v329 = vmax.f32 %v313, 0.0
      %v330 = vmax.f32 %v314, 0.0
      %v331 = vmax.f32 %v315, 0.0
      %v332 = vmax.f32 %v316, 0.0
      %v333 = vmax.f32 %v317, 0.0
      %v334 = vmax.f32 %v318, 0.0
      %v335 = vmax.f32 %v319, 0.0
      %v336 = vmax.f32 %v320, 0.0
      %v337 = vmax.f32 %v321, 0.0
      %v338 = vmax.f32 %v322, 0.0
      %v339 = vmax.f32 %v323, 0.0
      %v340 = vmax.f32 %v324, 0.0
      %v341 = vmax.f32 %v325, 0.0
      %v342 = vmax.f32 %v326, 0.0
      %vm343 = vcmask 130048
      %344 = vst.msk [vmem:[%s221] sm:$0xff] %vm343, %v327
      %345 = vst.msk [vmem:[%s221 + $0x8] sm:$0xff] %vm343, %v328
      %346 = vst.msk [vmem:[%s221 + $0x10] sm:$0xff] %vm343, %v329
      %347 = vst.msk [vmem:[%s221 + $0x18] sm:$0xff] %vm343, %v330
      %348 = vst.msk [vmem:[%s221 + $0x20] sm:$0xff] %vm343, %v331
      %349 = vst.msk [vmem:[%s221 + $0x28] sm:$0xff] %vm343, %v332
      %350 = vst.msk [vmem:[%s221 + $0x30] sm:$0xff] %vm343, %v333
      %351 = vst.msk [vmem:[%s221 + $0x38] sm:$0xff] %vm343, %v334
      %352 = vst.msk [vmem:[%s221 + $0x40] sm:$0xff] %vm343, %v335
      %353 = vst.msk [vmem:[%s221 + $0x48] sm:$0xff] %vm343, %v336
      %354 = vst.msk [vmem:[%s221 + $0x50] sm:$0xff] %vm343, %v337
      %355 = vst.msk [vmem:[%s221 + $0x58] sm:$0xff] %vm343, %v338
      %356 = vst.msk [vmem:[%s221 + $0x60] sm:$0xff] %vm343, %v339
      %357 = vst.msk [vmem:[%s221 + $0x68] sm:$0xff] %vm343, %v340
      %358 = vst.msk [vmem:[%s221 + $0x70] sm:$0xff] %vm343, %v341
      %359 = vst.msk [vmem:[%s221 + $0x78] sm:$0xff] %vm343, %v342
      %s360 = smul.u32 16, %s15
      %p361 = scmp.lt.s32.totalorder %s360, 63
      %s362 = scalar_select %p361, %s360, 63
      %s363 = smul.addr %s362, 8
      %s364 = scalar_lea.vmem %s4, %s363
      // Predicated region
      $region37: #{bottleneck_forward.7} parent=35 // pred_check
        %p365 = pneg %p127
      $region38: #{bottleneck_forward.7} parent=35 // pred_check_branch
        %367 = sbr.rel (%p365) target = $region40
      $region39: #{bottleneck_forward.7} parent=35 // pred_region
        %s368 = smul.u32 16, %s15
      $region40: #{bottleneck_forward.7} parent=35 // pred_fallthru
        _
    $region36: #{bottleneck_forward.7} parent=5 // pred_fallthru
      _
    %p369 = scmp.le.s32.totalorder 2, %s10
    // Predicated region
    $region41: #{bottleneck_forward.7} parent=5 // pred_check
      %p370 = pneg %p369
    $region42: #{bottleneck_forward.7} parent=5 // pred_check_branch
      %372 = sbr.rel (%p370) target = $region44
    $region43: #{bottleneck_forward.7} parent=5 // pred_region
      %s373 = ssub.s32 %s10, 2
      // Predicated region
      $region45: #{bottleneck_forward.7} parent=43 // pred_check
        %p374 = pneg %p133
      $region46: #{bottleneck_forward.7} parent=43 // pred_check_branch
        %376 = sbr.rel (%p374) target = $region48
      $region47: #{bottleneck_forward.7} parent=43 // pred_region
        %s377 = smul.u32 16, %s16
        %p378 = scmp.lt.s32.totalorder %s377, 63
        %s379 = scalar_select %p378, %s377, 63
        %s380 = smul.addr %s379, 8
        %s381 = scalar_lea.vmem %s4, %s380
      $region48: #{bottleneck_forward.7} parent=43 // pred_fallthru
        _
    $region44: #{bottleneck_forward.7} parent=5 // pred_fallthru
      _
  $region6: #{bottleneck_forward.7} parent=0 // loop_footer
    %s14 = sadd.s32 1, %s10
  $region7: #{bottleneck_forward.7} parent=0 // loop_footer_branch
    %9 = sbr.rel target = $region3
  $region8: #{bottleneck_forward.7} parent=0 // loop_exit
    _

// kernel: bottleneck_forward.5
$region0: #{bottleneck_forward.5}
  #allocation0 [shape = 'u32[]', space=smem, size = 0x4, offset = 0x4, fixed_abs, tag = 'smem constant byte address 0x4 - core index']
  #allocation1 [shape = 'u32[72,128]{1,0:T(1,128)}', space=vmem, size = 0x9000, scoped, tag = 'internal scratch']
  #allocation2 [shape = 'f32[10,18,4]{2,1,0:T(8,128)}', space=vmem, size = 0x1e000, scoped, tag = 'scratch operand']
  %s0 = inlined_call_operand.vmem [shape: bf16[2,16,16,4], index: 0, kind: input, shape index: {}, may-alias: {0,1,2}]
  %s1 = inlined_call_operand.vmem [shape: bf16[2,16,16,4], index: 1, kind: input, shape index: {}, may-alias: {0,1,2}]
  %s2 = inlined_call_operand.vmem [shape: bf16[2,16,16,4], index: 2, kind: input, shape index: {}, may-alias: {0,1,2}]
  %s3 = inlined_call_operand.vmem [shape: bf16[36,4], index: 3, kind: input, shape index: {}]
  %s4 = inlined_call_operand.vmem [shape: f32[1,4], index: 4, kind: input, shape index: {}]
  %s5 = inlined_call_operand.vmem [shape: f32[1,4], index: 5, kind: input, shape index: {}]
  %s6 = inlined_call_operand.vmem [shape: bf16[512,4], index: 6, kind: output, shape index: {0}]
  %s7 = inlined_call_operand.vmem [shape: f32[4,2,4], index: 7, kind: output, shape index: {1}]
  %8 = xla_tuple %s6, %s7
  %s9 = sld [smem:[#allocation0]]
  $region65: #{bottleneck_forward.5} parent=0
    _
  %s11 = ssub.s32 1, %s9
  %s12 = scalar_select 0, %s11, %s9
  loop: start=0, step=1, limit=6
  $region2: #{bottleneck_forward.5} parent=0 // loop_pre_header
    _
  $region3: #{bottleneck_forward.5} parent=0 // loop_header
    %s14 = sphi 0, %s18
    %p15 = scmp.ge.s32.totalorder %s14, 6
    %s21 = sphi 0, %s33
    %s22 = sphi 0, %s29
    %s23 = sphi 0, %s21
    %s24 = sphi 0, %s22
    %s25 = sphi 0, %s23
    %s26 = sphi 0, %s24
    %s46 = sphi 0, %s48
    %s49 = sphi 0, %s46
    %s50 = sphi 0, %s49
    %s66 = sphi 0, %s50
    %s74 = sphi 0, %s76
    %s77 = sphi 0, %s74
    %s78 = sphi 0, %s77
    %s94 = sphi 0, %s78
    %s110 = sphi 0, %s112
    %s113 = sphi 0, %s110
    %s114 = sphi 0, %s113
    %s130 = sphi 0, %s114
    %s134 = sphi 0, %s134
    %s136 = sphi 0, %s134
    %s137 = sphi 0, %s136
    %s151 = sphi 0, %s137
    %s155 = sphi 0, %s155
    %s157 = sphi 0, %s155
    %s158 = sphi 0, %s157
    %s172 = sphi 0, %s158
    %s176 = sphi 0, %s176
    %s178 = sphi 0, %s176
    %s179 = sphi 0, %s178
    %s193 = sphi 0, %s179
    %s203 = sphi 0, %s205
    %s206 = sphi 0, %s203
    %s207 = sphi 0, %s206
    %s223 = sphi 0, %s207
    %s233 = sphi 0, %s235
    %s236 = sphi 0, %s233
    %s237 = sphi 0, %s236
    %s253 = sphi 0, %s237
  $region4: #{bottleneck_forward.5} parent=0 // loop_header_branch
    %17 = sbr.rel (%p15) target = $region8
  $region5: #{bottleneck_forward.5} parent=0 // loop_body
    %s19 = ssub.s32 %s14, 1
    %s20 = ssub.s32 %s14, 2
    %s27 = sadd.s32 1, %s22
    %p28 = scmp.ge.s32.totalorder %s27, 2
    %s29 = scalar_select %p28, 0, %s27
    %s30 = sadd.s32 1, %s21
    %s31 = scalar_select %p28, %s30, %s21
    %p32 = scmp.ge.s32.totalorder %s31, 2
    %s33 = scalar_select %p32, 0, %s31
    %s34 = smul.u32 %s22, 8
    %s35 = ssub.s32 %s34, 1
    %p36 = scmp.gt.s32.totalorder %s35, 0
    %s37 = scalar_select %p36, %s35, 0
    %s38 = smul.u32 %s29, 8
    %s39 = ssub.s32 %s38, 1
    %p40 = scmp.gt.s32.totalorder %s39, 0
    %s41 = scalar_select %p40, %s39, 0
    %s42 = ssub.s32 %s21, %s33
    %s43 = ssub.s32 %s37, %s41
    %s44 = sor.u32 %s42, %s43
    %p45 = scmp.eq.s32.totalorder %s44, 0
    %s47 = sadd.s32 %s46, 1
    %s48 = scalar_select %p45, %s46, %s47
    %p51 = pneg %p45
    %p52 = scmp.eq.s32.totalorder %s14, 3
    %p53 = por %p51, %p52
    %p54 = scmp.ne.s32.totalorder %s46, %s49
    %p55 = scmp.eq.s32.totalorder %s14, 0
    %p56 = por %p54, %p55
    %p57 = scmp.ne.s32.totalorder %s46, %s49
    %p58 = scmp.eq.s32.totalorder %s19, 3
    %p59 = por %p57, %p58
    %p60 = scmp.ne.s32.totalorder %s49, %s50
    %p61 = scmp.eq.s32.totalorder %s19, 0
    %p62 = por %p60, %p61
    %p63 = scmp.ne.s32.totalorder %s49, %s50
    %p64 = scmp.eq.s32.totalorder %s20, 3
    %p65 = por %p63, %p64
    %p67 = scmp.ne.s32.totalorder %s50, %s66
    %p68 = scmp.eq.s32.totalorder %s20, 0
    %p69 = por %p67, %p68
    %s70 = ssub.s32 %s21, %s33
    %s71 = ssub.s32 %s22, %s29
    %s72 = sor.u32 %s70, %s71
    %p73 = scmp.eq.s32.totalorder %s72, 0
    %s75 = sadd.s32 %s74, 1
    %s76 = scalar_select %p73, %s74, %s75
    %p79 = pneg %p73
    %p80 = scmp.eq.s32.totalorder %s14, 3
    %p81 = por %p79, %p80
    %p82 = scmp.ne.s32.totalorder %s74, %s77
    %p83 = scmp.eq.s32.totalorder %s14, 0
    %p84 = por %p82, %p83
    %p85 = scmp.ne.s32.totalorder %s74, %s77
    %p86 = scmp.eq.s32.totalorder %s19, 3
    %p87 = por %p85, %p86
    %p88 = scmp.ne.s32.totalorder %s77, %s78
    %p89 = scmp.eq.s32.totalorder %s19, 0
    %p90 = por %p88, %p89
    %p91 = scmp.ne.s32.totalorder %s77, %s78
    %p92 = scmp.eq.s32.totalorder %s20, 3
    %p93 = por %p91, %p92
    %p95 = scmp.ne.s32.totalorder %s78, %s94
    %p96 = scmp.eq.s32.totalorder %s20, 0
    %p97 = por %p95, %p96
    %s98 = smul.u32 %s22, 8
    %s99 = sadd.s32 %s98, 8
    %p100 = scmp.lt.s32.totalorder %s99, 15
    %s101 = scalar_select %p100, %s99, 15
    %s102 = smul.u32 %s29, 8
    %s103 = sadd.s32 %s102, 8
    %p104 = scmp.lt.s32.totalorder %s103, 15
    %s105 = scalar_select %p104, %s103, 15
    %s106 = ssub.s32 %s21, %s33
    %s107 = ssub.s32 %s101, %s105
    %s108 = sor.u32 %s106, %s107
    %p109 = scmp.eq.s32.totalorder %s108, 0
    %s111 = sadd.s32 %s110, 1
    %s112 = scalar_select %p109, %s110, %s111
    %p115 = pneg %p109
    %p116 = scmp.eq.s32.totalorder %s14, 3
    %p117 = por %p115, %p116
    %p118 = scmp.ne.s32.totalorder %s110, %s113
    %p119 = scmp.eq.s32.totalorder %s14, 0
    %p120 = por %p118, %p119
    %p121 = scmp.ne.s32.totalorder %s110, %s113
    %p122 = scmp.eq.s32.totalorder %s19, 3
    %p123 = por %p121, %p122
    %p124 = scmp.ne.s32.totalorder %s113, %s114
    %p125 = scmp.eq.s32.totalorder %s19, 0
    %p126 = por %p124, %p125
    %p127 = scmp.ne.s32.totalorder %s113, %s114
    %p128 = scmp.eq.s32.totalorder %s20, 3
    %p129 = por %p127, %p128
    %p131 = scmp.ne.s32.totalorder %s114, %s130
    %p132 = scmp.eq.s32.totalorder %s20, 0
    %p133 = por %p131, %p132
    %s135 = sadd.s32 %s134, 1
    %p138 = scmp.eq.s32.totalorder %s14, 3
    %p139 = scmp.ne.s32.totalorder %s134, %s136
    %p140 = scmp.eq.s32.totalorder %s14, 0
    %p141 = por %p139, %p140
    %p142 = scmp.ne.s32.totalorder %s134, %s136
    %p143 = scmp.eq.s32.totalorder %s19, 3
    %p144 = por %p142, %p143
    %p145 = scmp.ne.s32.totalorder %s136, %s137
    %p146 = scmp.eq.s32.totalorder %s19, 0
    %p147 = por %p145, %p146
    %p148 = scmp.ne.s32.totalorder %s136, %s137
    %p149 = scmp.eq.s32.totalorder %s20, 3
    %p150 = por %p148, %p149
    %p152 = scmp.ne.s32.totalorder %s137, %s151
    %p153 = scmp.eq.s32.totalorder %s20, 0
    %p154 = por %p152, %p153
    %s156 = sadd.s32 %s155, 1
    %p159 = scmp.eq.s32.totalorder %s14, 3
    %p160 = scmp.ne.s32.totalorder %s155, %s157
    %p161 = scmp.eq.s32.totalorder %s14, 0
    %p162 = por %p160, %p161
    %p163 = scmp.ne.s32.totalorder %s155, %s157
    %p164 = scmp.eq.s32.totalorder %s19, 3
    %p165 = por %p163, %p164
    %p166 = scmp.ne.s32.totalorder %s157, %s158
    %p167 = scmp.eq.s32.totalorder %s19, 0
    %p168 = por %p166, %p167
    %p169 = scmp.ne.s32.totalorder %s157, %s158
    %p170 = scmp.eq.s32.totalorder %s20, 3
    %p171 = por %p169, %p170
    %p173 = scmp.ne.s32.totalorder %s158, %s172
    %p174 = scmp.eq.s32.totalorder %s20, 0
    %p175 = por %p173, %p174
    %s177 = sadd.s32 %s176, 1
    %p180 = scmp.eq.s32.totalorder %s14, 3
    %p181 = scmp.ne.s32.totalorder %s176, %s178
    %p182 = scmp.eq.s32.totalorder %s14, 0
    %p183 = por %p181, %p182
    %p184 = scmp.ne.s32.totalorder %s176, %s178
    %p185 = scmp.eq.s32.totalorder %s19, 3
    %p186 = por %p184, %p185
    %p187 = scmp.ne.s32.totalorder %s178, %s179
    %p188 = scmp.eq.s32.totalorder %s19, 0
    %p189 = por %p187, %p188
    %p190 = scmp.ne.s32.totalorder %s178, %s179
    %p191 = scmp.eq.s32.totalorder %s20, 3
    %p192 = por %p190, %p191
    %p194 = scmp.ne.s32.totalorder %s179, %s193
    %p195 = scmp.eq.s32.totalorder %s20, 0
    %p196 = por %p194, %p195
    %s197 = smul.u32 %s21, 2
    %s198 = sadd.s32 %s197, %s22
    %s199 = smul.u32 %s33, 2
    %s200 = sadd.s32 %s199, %s29
    %s201 = ssub.s32 %s198, %s200
    %p202 = scmp.eq.s32.totalorder %s201, 0
    %s204 = sadd.s32 %s203, 1
    %s205 = scalar_select %p202, %s203, %s204
    %p208 = pneg %p202
    %p209 = scmp.eq.s32.totalorder %s14, 3
    %p210 = por %p208, %p209
    %p211 = scmp.ne.s32.totalorder %s203, %s206
    %p212 = scmp.eq.s32.totalorder %s14, 0
    %p213 = por %p211, %p212
    %p214 = scmp.ne.s32.totalorder %s203, %s206
    %p215 = scmp.eq.s32.totalorder %s19, 3
    %p216 = por %p214, %p215
    %p217 = scmp.ne.s32.totalorder %s206, %s207
    %p218 = scmp.eq.s32.totalorder %s19, 0
    %p219 = por %p217, %p218
    %p220 = scmp.ne.s32.totalorder %s206, %s207
    %p221 = scmp.eq.s32.totalorder %s20, 3
    %p222 = por %p220, %p221
    %p224 = scmp.ne.s32.totalorder %s207, %s223
    %p225 = scmp.eq.s32.totalorder %s20, 0
    %p226 = por %p224, %p225
    %s227 = smul.u32 %s21, 2
    %s228 = sadd.s32 %s227, %s22
    %s229 = smul.u32 %s33, 2
    %s230 = sadd.s32 %s229, %s29
    %s231 = ssub.s32 %s228, %s230
    %p232 = scmp.eq.s32.totalorder %s231, 0
    %s234 = sadd.s32 %s233, 1
    %s235 = scalar_select %p232, %s233, %s234
    %p238 = pneg %p232
    %p239 = scmp.eq.s32.totalorder %s14, 3
    %p240 = por %p238, %p239
    %p241 = scmp.ne.s32.totalorder %s233, %s236
    %p242 = scmp.eq.s32.totalorder %s14, 0
    %p243 = por %p241, %p242
    %p244 = scmp.ne.s32.totalorder %s233, %s236
    %p245 = scmp.eq.s32.totalorder %s19, 3
    %p246 = por %p244, %p245
    %p247 = scmp.ne.s32.totalorder %s236, %s237
    %p248 = scmp.eq.s32.totalorder %s19, 0
    %p249 = por %p247, %p248
    %p250 = scmp.ne.s32.totalorder %s236, %s237
    %p251 = scmp.eq.s32.totalorder %s20, 3
    %p252 = por %p250, %p251
    %p254 = scmp.ne.s32.totalorder %s237, %s253
    %p255 = scmp.eq.s32.totalorder %s20, 0
    %p256 = por %p254, %p255
    %p257 = scmp.le.s32.totalorder 1, %s14
    %p258 = scmp.lt.s32.totalorder %s14, 5
    %p259 = pnand %p257, %p258
    %p260 = pneg %p259
    // Predicated region
    $region9: #{bottleneck_forward.5} parent=5 // pred_check
      _
    $region10: #{bottleneck_forward.5} parent=5 // pred_check_branch
      %262 = sbr.rel (%p259) target = $region12
    $region11: #{bottleneck_forward.5} parent=5 // pred_region
      %s263 = ssub.s32 %s14, 1
      // Predicated region
      $region13: #{bottleneck_forward.5} parent=11 // pred_check
        %p264 = pneg %p147
      $region14: #{bottleneck_forward.5} parent=11 // pred_check_branch
        %266 = sbr.rel (%p264) target = $region16
      $region15: #{bottleneck_forward.5} parent=11 // pred_region
        _
      $region16: #{bottleneck_forward.5} parent=11 // pred_fallthru
        _
      // Predicated region
      $region17: #{bottleneck_forward.5} parent=11 // pred_check
        %p267 = pneg %p168
      $region18: #{bottleneck_forward.5} parent=11 // pred_check_branch
        %269 = sbr.rel (%p267) target = $region20
      $region19: #{bottleneck_forward.5} parent=11 // pred_region
        _
      $region20: #{bottleneck_forward.5} parent=11 // pred_fallthru
        _
      // Predicated region
      $region21: #{bottleneck_forward.5} parent=11 // pred_check
        %p270 = pneg %p189
      $region22: #{bottleneck_forward.5} parent=11 // pred_check_branch
        %272 = sbr.rel (%p270) target = $region24
      $region23: #{bottleneck_forward.5} parent=11 // pred_region
        _
      $region24: #{bottleneck_forward.5} parent=11 // pred_fallthru
        _
    $region12: #{bottleneck_forward.5} parent=5 // pred_fallthru
      _
    %p273 = scmp.lt.s32.totalorder %s14, 4
    // Predicated region
    $region25: #{bottleneck_forward.5} parent=5 // pred_check
      %p274 = pneg %p273
    $region26: #{bottleneck_forward.5} parent=5 // pred_check_branch
      %276 = sbr.rel (%p274) target = $region28
    $region27: #{bottleneck_forward.5} parent=5 // pred_region
      // Predicated region
      $region29: #{bottleneck_forward.5} parent=27 // pred_check
        %p277 = pneg %p56
      $region30: #{bottleneck_forward.5} parent=27 // pred_check_branch
        %279 = sbr.rel (%p277) target = $region32
      $region31: #{bottleneck_forward.5} parent=27 // pred_region
        %s280 = smul.u32 %s22, 8
        %s281 = ssub.s32 %s280, 1
        %p282 = scmp.gt.s32.totalorder %s281, 0
        %s283 = scalar_select %p282, %s281, 0
        %p284 = scmp.lt.s32.totalorder %s21, 1
        %s285 = scalar_select %p284, %s21, 1
        %p286 = scmp.lt.s32.totalorder %s283, 15
        %s287 = scalar_select %p286, %s283, 15
        %s288 = smul.addr %s287, 2
        %s289 = smul.addr %s285, 32
        %s290 = sadd.s32 %s288, %s289
        %s291 = smul.addr %s290, 4
        %s292 = scalar_lea.vmem %s0, %s291
        %s293 = smul.u32 %s22, 8
        %s294 = ssub.s32 %s293, 1
        %p295 = scmp.gt.s32.totalorder %s294, 0
        %s296 = scalar_select %p295, %s294, 0
      $region32: #{bottleneck_forward.5} parent=27 // pred_fallthru
        _
      // Predicated region
      $region33: #{bottleneck_forward.5} parent=27 // pred_check
        %p297 = pneg %p84
      $region34: #{bottleneck_forward.5} parent=27 // pred_check_branch
        %299 = sbr.rel (%p297) target = $region36
      $region35: #{bottleneck_forward.5} parent=27 // pred_region
        %s300 = smul.u32 8, %s22
        %p301 = scmp.lt.s32.totalorder %s21, 1
        %s302 = scalar_select %p301, %s21, 1
        %p303 = scmp.lt.s32.totalorder %s300, 15
        %s304 = scalar_select %p303, %s300, 15
        %s305 = smul.addr %s304, 2
        %s306 = smul.addr %s302, 32
        %s307 = sadd.s32 %s305, %s306
        %s308 = smul.addr %s307, 4
        %s309 = scalar_lea.vmem %s1, %s308
        %s310 = smul.u32 8, %s22
      $region36: #{bottleneck_forward.5} parent=27 // pred_fallthru
        _
      // Predicated region
      $region37: #{bottleneck_forward.5} parent=27 // pred_check
        %p311 = pneg %p120
      $region38: #{bottleneck_forward.5} parent=27 // pred_check_branch
        %313 = sbr.rel (%p311) target = $region40
      $region39: #{bottleneck_forward.5} parent=27 // pred_region
        %s314 = smul.u32 %s22, 8
        %s315 = sadd.s32 %s314, 8
        %p316 = scmp.lt.s32.totalorder %s315, 15
        %s317 = scalar_select %p316, %s315, 15
        %p318 = scmp.lt.s32.totalorder %s21, 1
        %s319 = scalar_select %p318, %s21, 1
        %p320 = scmp.lt.s32.totalorder %s317, 15
        %s321 = scalar_select %p320, %s317, 15
        %s322 = smul.addr %s321, 2
        %s323 = smul.addr %s319, 32
        %s324 = sadd.s32 %s322, %s323
        %s325 = smul.addr %s324, 4
        %s326 = scalar_lea.vmem %s2, %s325
        %s327 = smul.u32 %s22, 8
        %s328 = sadd.s32 %s327, 8
        %p329 = scmp.lt.s32.totalorder %s328, 15
        %s330 = scalar_select %p329, %s328, 15
      $region40: #{bottleneck_forward.5} parent=27 // pred_fallthru
        _
    $region28: #{bottleneck_forward.5} parent=5 // pred_fallthru
      _
    %p331 = scmp.le.s32.totalorder 1, %s14
    %p332 = scmp.lt.s32.totalorder %s14, 5
    %p333 = pnand %p331, %p332
    %p334 = pneg %p333
    // Predicated region
    $region41: #{bottleneck_forward.5} parent=5 // pred_check
      _
    $region42: #{bottleneck_forward.5} parent=5 // pred_check_branch
      %336 = sbr.rel (%p333) target = $region44
    $region43: #{bottleneck_forward.5} parent=5 // pred_region
      %s337 = ssub.s32 %s14, 1
      %s338 = smul.u32 %s24, 8
      %s339 = ssub.s32 %s338, 1
      %p340 = scmp.gt.s32.totalorder %s339, 0
      %s341 = scalar_select %p340, %s339, 0
      %p342 = scmp.lt.s32.totalorder %s23, 1
      %s343 = scalar_select %p342, %s23, 1
      %p344 = scmp.lt.s32.totalorder %s341, 15
      %s345 = scalar_select %p344, %s341, 15
      %s346 = smul.addr %s345, 2
      %s347 = smul.addr %s343, 32
      %s348 = sadd.s32 %s346, %s347
      %s349 = smul.addr %s348, 4
      %s350 = scalar_lea.vmem %s0, %s349
      %p351 = pneg %p62
      %p352 = pneg %p59
      %s353 = smul.u32 8, %s24
      %p354 = scmp.lt.s32.totalorder %s23, 1
      %s355 = scalar_select %p354, %s23, 1
      %p356 = scmp.lt.s32.totalorder %s353, 15
      %s357 = scalar_select %p356, %s353, 15
      %s358 = smul.addr %s357, 2
      %s359 = smul.addr %s355, 32
      %s360 = sadd.s32 %s358, %s359
      %s361 = smul.addr %s360, 4
      %s362 = scalar_lea.vmem %s1, %s361
      %p363 = pneg %p90
      %p364 = pneg %p87
      %s365 = smul.u32 %s24, 8
      %s366 = sadd.s32 %s365, 8
      %p367 = scmp.lt.s32.totalorder %s366, 15
      %s368 = scalar_select %p367, %s366, 15
      %p369 = scmp.lt.s32.totalorder %s23, 1
      %s370 = scalar_select %p369, %s23, 1
      %p371 = scmp.lt.s32.totalorder %s368, 15
      %s372 = scalar_select %p371, %s368, 15
      %s373 = smul.addr %s372, 2
      %s374 = smul.addr %s370, 32
      %s375 = sadd.s32 %s373, %s374
      %s376 = smul.addr %s375, 4
      %s377 = scalar_lea.vmem %s2, %s376
      %p378 = pneg %p126
      %p379 = pneg %p123
      %p380 = pneg %p147
      %p381 = pneg %p144
      %p382 = pneg %p168
      %p383 = pneg %p165
      %p384 = pneg %p189
      %p385 = pneg %p186
      %p386 = pneg %p219
      %p387 = pneg %p216
      %s388 = smul.u32 %s23, 2
      %s389 = sadd.s32 %s388, %s24
      %s390 = smul.u32 16, %s389
      %p391 = scmp.lt.s32.totalorder %s390, 63
      %s392 = scalar_select %p391, %s390, 63
      %s393 = smul.addr %s392, 4
      %s394 = scalar_lea.vmem %s6, %s393
      %p395 = pneg %p249
      %p396 = pneg %p246
      %s397 = smul.u32 %s23, 2
      %s398 = sadd.s32 %s397, %s24
      %p399 = scmp.lt.s32.totalorder %s398, 3
      %s400 = scalar_select %p399, %s398, 3
      %s401 = smul.addr %s400, 2
      %s402 = scalar_lea.vmem %s7, %s401
      %s403 = smul.u32 %s24, 8
      %s404 = ssub.s32 %s403, 1
      %p405 = scmp.gt.s32.totalorder %s404, 0
      %s406 = scalar_select %p405, %s404, 0
      %p407 = scmp.lt.s32.totalorder %s23, 1
      %s408 = scalar_select %p407, %s23, 1
      %p409 = scmp.lt.s32.totalorder %s406, 15
      %s410 = scalar_select %p409, %s406, 15
      %s411 = smul.addr %s410, 2
      %s412 = smul.addr %s408, 32
      %s413 = sadd.s32 %s411, %s412
      %s414 = smul.addr %s413, 4
      %s415 = scalar_lea.vmem %s0, %s414
      %s416 = smul.u32 %s24, 8
      %s417 = ssub.s32 %s416, 1
      %p418 = scmp.gt.s32.totalorder %s417, 0
      %s419 = scalar_select %p418, %s417, 0
      %s420 = smul.u32 8, %s24
      %p421 = scmp.lt.s32.totalorder %s23, 1
      %s422 = scalar_select %p421, %s23, 1
      %p423 = scmp.lt.s32.totalorder %s420, 15
      %s424 = scalar_select %p423, %s420, 15
      %s425 = smul.addr %s424, 2
      %s426 = smul.addr %s422, 32
      %s427 = sadd.s32 %s425, %s426
      %s428 = smul.addr %s427, 4
      %s429 = scalar_lea.vmem %s1, %s428
      %s430 = smul.u32 8, %s24
      %s431 = smul.u32 %s24, 8
      %s432 = sadd.s32 %s431, 8
      %p433 = scmp.lt.s32.totalorder %s432, 15
      %s434 = scalar_select %p433, %s432, 15
      %p435 = scmp.lt.s32.totalorder %s23, 1
      %s436 = scalar_select %p435, %s23, 1
      %p437 = scmp.lt.s32.totalorder %s434, 15
      %s438 = scalar_select %p437, %s434, 15
      %s439 = smul.addr %s438, 2
      %s440 = smul.addr %s436, 32
      %s441 = sadd.s32 %s439, %s440
      %s442 = smul.addr %s441, 4
      %s443 = scalar_lea.vmem %s2, %s442
      %s444 = smul.u32 %s24, 8
      %s445 = sadd.s32 %s444, 8
      %p446 = scmp.lt.s32.totalorder %s445, 15
      %s447 = scalar_select %p446, %s445, 15
      %s448 = smul.u32 %s23, 2
      %s449 = sadd.s32 %s448, %s24
      %s450 = smul.u32 16, %s449
      %p451 = scmp.lt.s32.totalorder %s450, 63
      %s452 = scalar_select %p451, %s450, 63
      %s453 = smul.addr %s452, 4
      %s454 = scalar_lea.vmem %s6, %s453
      %s455 = smul.u32 %s23, 2
      %s456 = sadd.s32 %s455, %s24
      %s457 = smul.u32 16, %s456
      %s458 = smul.u32 %s23, 2
      %s459 = sadd.s32 %s458, %s24
      %p460 = scmp.lt.s32.totalorder %s459, 3
      %s461 = scalar_select %p460, %s459, 3
      %s462 = smul.addr %s461, 2
      %s463 = scalar_lea.vmem %s7, %s462
      %s464 = smul.u32 %s23, 2
      %s465 = sadd.s32 %s464, %s24
      %v467 = vld [vmem:[%s4] sm:$0x1]
      %v468 = vld [vmem:[%s5] sm:$0x1]
      %v469 = vld [vmem:[%s429] sm:$0xf]
      %v470 = vld [vmem:[%s429 + $0x4] sm:$0xf]
      %v471 = vld [vmem:[%s429 + $0x8] sm:$0xf]
      %v472 = vld [vmem:[%s429 + $0xc] sm:$0xf]
      %v473 = vld [vmem:[%s429 + $0x10] sm:$0xf]
      %v474 = vld [vmem:[%s429 + $0x14] sm:$0xf]
      %v475 = vld [vmem:[%s429 + $0x18] sm:$0xf]
      %v476 = vld [vmem:[%s429 + $0x1c] sm:$0xf]
      %v477 = vld [vmem:[%s429 + $0x20] sm:$0xf]
      %v478 = vld [vmem:[%s429 + $0x24] sm:$0xf]
      %v479 = vld [vmem:[%s429 + $0x28] sm:$0xf]
      %v480 = vld [vmem:[%s429 + $0x2c] sm:$0xf]
      %v481 = vld [vmem:[%s429 + $0x30] sm:$0xf]
      %v482 = vld [vmem:[%s429 + $0x34] sm:$0xf]
      %v483 = vld [vmem:[%s429 + $0x38] sm:$0xf]
      %v484 = vld [vmem:[%s429 + $0x3c] sm:$0xf]
      %v485 = vunpack.c.l.bf16 %v469
      %v486 = vunpack.c.l.bf16 %v470
      %v487 = vunpack.c.l.bf16 %v471
      %v488 = vunpack.c.l.bf16 %v472
      %v489 = vunpack.c.l.bf16 %v473
      %v490 = vunpack.c.l.bf16 %v474
      %v491 = vunpack.c.l.bf16 %v475
      %v492 = vunpack.c.l.bf16 %v476
      %v493 = vunpack.c.l.bf16 %v477
      %v494 = vunpack.c.l.bf16 %v478
      %v495 = vunpack.c.l.bf16 %v479
      %v496 = vunpack.c.l.bf16 %v480
      %v497 = vunpack.c.l.bf16 %v481
      %v498 = vunpack.c.l.bf16 %v482
      %v499 = vunpack.c.l.bf16 %v483
      %v500 = vunpack.c.l.bf16 %v484
      %v502 = vperm.slane %v467, 0
      %v504 = vmul.f32 %v485, %v502
      %v505 = vmul.f32 %v486, %v502
      %v506 = vmul.f32 %v487, %v502
      %v507 = vmul.f32 %v488, %v502
      %v508 = vmul.f32 %v489, %v502
      %v509 = vmul.f32 %v490, %v502
      %v510 = vmul.f32 %v491, %v502
      %v511 = vmul.f32 %v492, %v502
      %v512 = vmul.f32 %v493, %v502
      %v513 = vmul.f32 %v494, %v502
      %v514 = vmul.f32 %v495, %v502
      %v515 = vmul.f32 %v496, %v502
      %v516 = vmul.f32 %v497, %v502
      %v517 = vmul.f32 %v498, %v502
      %v518 = vmul.f32 %v499, %v502
      %v519 = vmul.f32 %v500, %v502
      %v521 = vperm.slane %v468, 0
      %v523 = vadd.f32 %v504, %v521
      %v524 = vadd.f32 %v505, %v521
      %v525 = vadd.f32 %v506, %v521
      %v526 = vadd.f32 %v507, %v521
      %v527 = vadd.f32 %v508, %v521
      %v528 = vadd.f32 %v509, %v521
      %v529 = vadd.f32 %v510, %v521
      %v530 = vadd.f32 %v511, %v521
      %v531 = vadd.f32 %v512, %v521
      %v532 = vadd.f32 %v513, %v521
      %v533 = vadd.f32 %v514, %v521
      %v534 = vadd.f32 %v515, %v521
      %v535 = vadd.f32 %v516, %v521
      %v536 = vadd.f32 %v517, %v521
      %v537 = vadd.f32 %v518, %v521
      %v538 = vadd.f32 %v519, %v521
      %v539 = vmax.f32 %v523, 0.0
      %v540 = vmax.f32 %v524, 0.0
      %v541 = vmax.f32 %v525, 0.0
      %v542 = vmax.f32 %v526, 0.0
      %v543 = vmax.f32 %v527, 0.0
      %v544 = vmax.f32 %v528, 0.0
      %v545 = vmax.f32 %v529, 0.0
      %v546 = vmax.f32 %v530, 0.0
      %v547 = vmax.f32 %v531, 0.0
      %v548 = vmax.f32 %v532, 0.0
      %v549 = vmax.f32 %v533, 0.0
      %v550 = vmax.f32 %v534, 0.0
      %v551 = vmax.f32 %v535, 0.0
      %v552 = vmax.f32 %v536, 0.0
      %v553 = vmax.f32 %v537, 0.0
      %v554 = vmax.f32 %v538, 0.0
      %v555 = vld [vmem:[%s415] sm:$0xf]
      %v556 = vld [vmem:[%s415 + $0x4] sm:$0xf]
      %v557 = vunpack.c.l.bf16 %v555
      %v558 = vunpack.c.l.bf16 %v556
      %v559 = vmul.f32 %v557, %v502
      %v560 = vmul.f32 %v558, %v502
      %v561 = vadd.f32 %v559, %v521
      %v562 = vadd.f32 %v560, %v521
      %v563 = vmax.f32 %v561, 0.0
      %v564 = vmax.f32 %v562, 0.0
      %v565 = vld [vmem:[%s443] sm:$0xf]
      %v566 = vld [vmem:[%s443 + $0x4] sm:$0xf]
      %v567 = vunpack.c.l.bf16 %v565
      %v568 = vunpack.c.l.bf16 %v566
      %v569 = vmul.f32 %v567, %v502
      %v570 = vmul.f32 %v568, %v502
      %v571 = vadd.f32 %v569, %v521
      %v572 = vadd.f32 %v570, %v521
      %v573 = vmax.f32 %v571, 0.0
      %v574 = vmax.f32 %v572, 0.0
      %p575 = scmp.eq.s32.totalorder %s24, 0
      %s576 = scalar_select %p575, 1, 0
      %v577 = vstv %s576
      %vm578 = vcmp.eq.s32.totalorder %v577, 1
      %v579 = vsel %vm578, 0.0, %v563
      %v580 = vsel %vm578, 0.0, %v564
      %p581 = scmp.eq.s32.totalorder %s24, 1
      %s582 = scalar_select %p581, 1, 0
      %v583 = vstv %s582
      %vm584 = vcmp.eq.s32.totalorder %v583, 1
      %v585 = vsel %vm584, 0.0, %v573
      %v586 = vsel %vm584, 0.0, %v574
      %vm587 = vcmask 24576
      %588 = vst.msk [vmem:[#allocation2] sm:$0x1] %vm587, 0.0
      %589 = vst.msk [vmem:[#allocation2 + $0x18] sm:$0x1] %vm587, 0.0
      %590 = vst.msk [vmem:[#allocation2 + $0x30] sm:$0x1] %vm587, 0.0
      %591 = vst.msk [vmem:[#allocation2 + $0x48] sm:$0x1] %vm587, 0.0
      %592 = vst.msk [vmem:[#allocation2 + $0x60] sm:$0x1] %vm587, 0.0
      %593 = vst.msk [vmem:[#allocation2 + $0x78] sm:$0x1] %vm587, 0.0
      %594 = vst.msk [vmem:[#allocation2 + $0x90] sm:$0x1] %vm587, 0.0
      %595 = vst.msk [vmem:[#allocation2 + $0xa8] sm:$0x1] %vm587, 0.0
      %596 = vst.msk [vmem:[#allocation2 + $0xc0] sm:$0x1] %vm587, 0.0
      %597 = vst.msk [vmem:[#allocation2 + $0xd8] sm:$0x1] %vm587, 0.0
      %598 = vst.msk [vmem:[#allocation2 + $0x11] sm:$0x1] %vm587, 0.0
      %599 = vst.msk [vmem:[#allocation2 + $0x29] sm:$0x1] %vm587, 0.0
      %600 = vst.msk [vmem:[#allocation2 + $0x41] sm:$0x1] %vm587, 0.0
      %601 = vst.msk [vmem:[#allocation2 + $0x59] sm:$0x1] %vm587, 0.0
      %602 = vst.msk [vmem:[#allocation2 + $0x71] sm:$0x1] %vm587, 0.0
      %603 = vst.msk [vmem:[#allocation2 + $0x89] sm:$0x1] %vm587, 0.0
      %604 = vst.msk [vmem:[#allocation2 + $0xa1] sm:$0x1] %vm587, 0.0
      %605 = vst.msk [vmem:[#allocation2 + $0xb9] sm:$0x1] %vm587, 0.0
      %606 = vst.msk [vmem:[#allocation2 + $0xd1] sm:$0x1] %vm587, 0.0
      %607 = vst.msk [vmem:[#allocation2 + $0xe9] sm:$0x1] %vm587, 0.0
      %vm608 = vcmask 31744
      %609 = vst.msk [vmem:[#allocation2 + $0x1] sm:$0xff] %vm608, %v579
      %610 = vst.msk [vmem:[#allocation2 + $0x9] sm:$0xff] %vm608, %v580
      %s611 = scalar_lea.vmem [#allocation2], 216
      %612 = vst.msk [vmem:[%s611 + $0x1] sm:$0xff] %vm608, %v585
      %613 = vst.msk [vmem:[%s611 + $0x9] sm:$0xff] %vm608, %v586
      %s614 = scalar_lea.vmem [#allocation2], 24
      %615 = vst.msk [vmem:[%s614 + $0x1] sm:$0xff] %vm608, %v539
      %616 = vst.msk [vmem:[%s614 + $0x9] sm:$0xff] %vm608, %v540
      %617 = vst.msk [vmem:[%s614 + $0x19] sm:$0xff] %vm608, %v541
      %618 = vst.msk [vmem:[%s614 + $0x21] sm:$0xff] %vm608, %v542
      %619 = vst.msk [vmem:[%s614 + $0x31] sm:$0xff] %vm608, %v543
      %620 = vst.msk [vmem:[%s614 + $0x39] sm:$0xff] %vm608, %v544
      %621 = vst.msk [vmem:[%s614 + $0x49] sm:$0xff] %vm608, %v545
      %622 = vst.msk [vmem:[%s614 + $0x51] sm:$0xff] %vm608, %v546
      %623 = vst.msk [vmem:[%s614 + $0x61] sm:$0xff] %vm608, %v547
      %624 = vst.msk [vmem:[%s614 + $0x69] sm:$0xff] %vm608, %v548
      %625 = vst.msk [vmem:[%s614 + $0x79] sm:$0xff] %vm608, %v549
      %626 = vst.msk [vmem:[%s614 + $0x81] sm:$0xff] %vm608, %v550
      %627 = vst.msk [vmem:[%s614 + $0x91] sm:$0xff] %vm608, %v551
      %628 = vst.msk [vmem:[%s614 + $0x99] sm:$0xff] %vm608, %v552
      %629 = vst.msk [vmem:[%s614 + $0xa9] sm:$0xff] %vm608, %v553
      %630 = vst.msk [vmem:[%s614 + $0xb1] sm:$0xff] %vm608, %v554
      %v631 = vld [vmem:[#allocation2] sm:$0xff]
      %v632 = vld [vmem:[#allocation2 + $0x8] sm:$0xff]
      %v633 = vld [vmem:[#allocation2 + $0x18] sm:$0xff]
      %v634 = vld [vmem:[#allocation2 + $0x20] sm:$0xff]
      %v635 = vld [vmem:[#allocation2 + $0x30] sm:$0xff]
      %v636 = vld [vmem:[#allocation2 + $0x38] sm:$0xff]
      %v637 = vld [vmem:[#allocation2 + $0x48] sm:$0xff]
      %v638 = vld [vmem:[#allocation2 + $0x50] sm:$0xff]
      %v639 = vld [vmem:[#allocation2 + $0x60] sm:$0xff]
      %v640 = vld [vmem:[#allocation2 + $0x68] sm:$0xff]
      %v641 = vld [vmem:[#allocation2 + $0x78] sm:$0xff]
      %v642 = vld [vmem:[#allocation2 + $0x80] sm:$0xff]
      %v643 = vld [vmem:[#allocation2 + $0x90] sm:$0xff]
      %v644 = vld [vmem:[#allocation2 + $0x98] sm:$0xff]
      %v645 = vld [vmem:[#allocation2 + $0xa8] sm:$0xff]
      %v646 = vld [vmem:[#allocation2 + $0xb0] sm:$0xff]
      %v647 = vpack.c.bf16 %v631, %v631
      %v648 = vpack.c.bf16 %v632, %v632
      %v649 = vpack.c.bf16 %v633, %v633
      %v650 = vpack.c.bf16 %v634, %v634
      %v651 = vpack.c.bf16 %v635, %v635
      %v652 = vpack.c.bf16 %v636, %v636
      %v653 = vpack.c.bf16 %v637, %v637
      %v654 = vpack.c.bf16 %v638, %v638
      %v655 = vpack.c.bf16 %v639, %v639
      %v656 = vpack.c.bf16 %v640, %v640
      %v657 = vpack.c.bf16 %v641, %v641
      %v658 = vpack.c.bf16 %v642, %v642
      %v659 = vpack.c.bf16 %v643, %v643
      %v660 = vpack.c.bf16 %v644, %v644
      %v661 = vpack.c.bf16 %v645, %v645
      %v662 = vpack.c.bf16 %v646, %v646
      %v663 = vld [vmem:[#allocation2 + $0x1] sm:$0xff]
      %v664 = vld [vmem:[#allocation2 + $0x9] sm:$0xff]
      %v665 = vld [vmem:[#allocation2 + $0x19] sm:$0xff]
      %v666 = vld [vmem:[#allocation2 + $0x21] sm:$0xff]
      %v667 = vld [vmem:[#allocation2 + $0x31] sm:$0xff]
      %v668 = vld [vmem:[#allocation2 + $0x39] sm:$0xff]
      %v669 = vld [vmem:[#allocation2 + $0x49] sm:$0xff]
      %v670 = vld [vmem:[#allocation2 + $0x51] sm:$0xff]
      %v671 = vld [vmem:[#allocation2 + $0x61] sm:$0xff]
      %v672 = vld [vmem:[#allocation2 + $0x69] sm:$0xff]
      %v673 = vld [vmem:[#allocation2 + $0x79] sm:$0xff]
      %v674 = vld [vmem:[#allocation2 + $0x81] sm:$0xff]
      %v675 = vld [vmem:[#allocation2 + $0x91] sm:$0xff]
      %v676 = vld [vmem:[#allocation2 + $0x99] sm:$0xff]
      %v677 = vld [vmem:[#allocation2 + $0xa9] sm:$0xff]
      %v678 = vld [vmem:[#allocation2 + $0xb1] sm:$0xff]
      %v679 = vpack.c.bf16 %v663, %v663
      %v680 = vpack.c.bf16 %v664, %v664
      %v681 = vpack.c.bf16 %v665, %v665
      %v682 = vpack.c.bf16 %v666, %v666
      %v683 = vpack.c.bf16 %v667, %v667
      %v684 = vpack.c.bf16 %v668, %v668
      %v685 = vpack.c.bf16 %v669, %v669
      %v686 = vpack.c.bf16 %v670, %v670
      %v687 = vpack.c.bf16 %v671, %v671
      %v688 = vpack.c.bf16 %v672, %v672
      %v689 = vpack.c.bf16 %v673, %v673
      %v690 = vpack.c.bf16 %v674, %v674
      %v691 = vpack.c.bf16 %v675, %v675
      %v692 = vpack.c.bf16 %v676, %v676
      %v693 = vpack.c.bf16 %v677, %v677
      %v694 = vpack.c.bf16 %v678, %v678
      %v695 = vld [vmem:[#allocation2 + $0x2] sm:$0xff]
      %v696 = vld [vmem:[#allocation2 + $0xa] sm:$0xff]
      %v697 = vld [vmem:[#allocation2 + $0x1a] sm:$0xff]
      %v698 = vld [vmem:[#allocation2 + $0x22] sm:$0xff]
      %v699 = vld [vmem:[#allocation2 + $0x32] sm:$0xff]
      %v700 = vld [vmem:[#allocation2 + $0x3a] sm:$0xff]
      %v701 = vld [vmem:[#allocation2 + $0x4a] sm:$0xff]
      %v702 = vld [vmem:[#allocation2 + $0x52] sm:$0xff]
      %v703 = vld [vmem:[#allocation2 + $0x62] sm:$0xff]
      %v704 = vld [vmem:[#allocation2 + $0x6a] sm:$0xff]
      %v705 = vld [vmem:[#allocation2 + $0x7a] sm:$0xff]
      %v706 = vld [vmem:[#allocation2 + $0x82] sm:$0xff]
      %v707 = vld [vmem:[#allocation2 + $0x92] sm:$0xff]
      %v708 = vld [vmem:[#allocation2 + $0x9a] sm:$0xff]
      %v709 = vld [vmem:[#allocation2 + $0xaa] sm:$0xff]
      %v710 = vld [vmem:[#allocation2 + $0xb2] sm:$0xff]
      %v711 = vpack.c.bf16 %v695, %v695
      %v712 = vpack.c.bf16 %v696, %v696
      %v713 = vpack.c.bf16 %v697, %v697
      %v714 = vpack.c.bf16 %v698, %v698
      %v715 = vpack.c.bf16 %v699, %v699
      %v716 = vpack.c.bf16 %v700, %v700
      %v717 = vpack.c.bf16 %v701, %v701
      %v718 = vpack.c.bf16 %v702, %v702
      %v719 = vpack.c.bf16 %v703, %v703
      %v720 = vpack.c.bf16 %v704, %v704
      %v721 = vpack.c.bf16 %v705, %v705
      %v722 = vpack.c.bf16 %v706, %v706
      %v723 = vpack.c.bf16 %v707, %v707
      %v724 = vpack.c.bf16 %v708, %v708
      %v725 = vpack.c.bf16 %v709, %v709
      %v726 = vpack.c.bf16 %v710, %v710
      %v727 = vld [vmem:[%s614] sm:$0xff]
      %v728 = vld [vmem:[%s614 + $0x8] sm:$0xff]
      %v729 = vld [vmem:[%s614 + $0x18] sm:$0xff]
      %v730 = vld [vmem:[%s614 + $0x20] sm:$0xff]
      %v731 = vld [vmem:[%s614 + $0x30] sm:$0xff]
      %v732 = vld [vmem:[%s614 + $0x38] sm:$0xff]
      %v733 = vld [vmem:[%s614 + $0x48] sm:$0xff]
      %v734 = vld [vmem:[%s614 + $0x50] sm:$0xff]
      %v735 = vld [vmem:[%s614 + $0x60] sm:$0xff]
      %v736 = vld [vmem:[%s614 + $0x68] sm:$0xff]
      %v737 = vld [vmem:[%s614 + $0x78] sm:$0xff]
      %v738 = vld [vmem:[%s614 + $0x80] sm:$0xff]
      %v739 = vld [vmem:[%s614 + $0x90] sm:$0xff]
      %v740 = vld [vmem:[%s614 + $0x98] sm:$0xff]
      %v741 = vld [vmem:[%s614 + $0xa8] sm:$0xff]
      %v742 = vld [vmem:[%s614 + $0xb0] sm:$0xff]
      %v743 = vpack.c.bf16 %v727, %v727
      %v744 = vpack.c.bf16 %v728, %v728
      %v745 = vpack.c.bf16 %v729, %v729
      %v746 = vpack.c.bf16 %v730, %v730
      %v747 = vpack.c.bf16 %v731, %v731
      %v748 = vpack.c.bf16 %v732, %v732
      %v749 = vpack.c.bf16 %v733, %v733
      %v750 = vpack.c.bf16 %v734, %v734
      %v751 = vpack.c.bf16 %v735, %v735
      %v752 = vpack.c.bf16 %v736, %v736
      %v753 = vpack.c.bf16 %v737, %v737
      %v754 = vpack.c.bf16 %v738, %v738
      %v755 = vpack.c.bf16 %v739, %v739
      %v756 = vpack.c.bf16 %v740, %v740
      %v757 = vpack.c.bf16 %v741, %v741
      %v758 = vpack.c.bf16 %v742, %v742
      %v759 = vld [vmem:[%s614 + $0x1] sm:$0xff]
      %v760 = vld [vmem:[%s614 + $0x9] sm:$0xff]
      %v761 = vld [vmem:[%s614 + $0x19] sm:$0xff]
      %v762 = vld [vmem:[%s614 + $0x21] sm:$0xff]
      %v763 = vld [vmem:[%s614 + $0x31] sm:$0xff]
      %v764 = vld [vmem:[%s614 + $0x39] sm:$0xff]
      %v765 = vld [vmem:[%s614 + $0x49] sm:$0xff]
      %v766 = vld [vmem:[%s614 + $0x51] sm:$0xff]
      %v767 = vld [vmem:[%s614 + $0x61] sm:$0xff]
      %v768 = vld [vmem:[%s614 + $0x69] sm:$0xff]
      %v769 = vld [vmem:[%s614 + $0x79] sm:$0xff]
      %v770 = vld [vmem:[%s614 + $0x81] sm:$0xff]
      %v771 = vld [vmem:[%s614 + $0x91] sm:$0xff]
      %v772 = vld [vmem:[%s614 + $0x99] sm:$0xff]
      %v773 = vld [vmem:[%s614 + $0xa9] sm:$0xff]
      %v774 = vld [vmem:[%s614 + $0xb1] sm:$0xff]
      %v775 = vpack.c.bf16 %v759, %v759
      %v776 = vpack.c.bf16 %v760, %v760
      %v777 = vpack.c.bf16 %v761, %v761
      %v778 = vpack.c.bf16 %v762, %v762
      %v779 = vpack.c.bf16 %v763, %v763
      %v780 = vpack.c.bf16 %v764, %v764
      %v781 = vpack.c.bf16 %v765, %v765
      %v782 = vpack.c.bf16 %v766, %v766
      %v783 = vpack.c.bf16 %v767, %v767
      %v784 = vpack.c.bf16 %v768, %v768
      %v785 = vpack.c.bf16 %v769, %v769
      %v786 = vpack.c.bf16 %v770, %v770
      %v787 = vpack.c.bf16 %v771, %v771
      %v788 = vpack.c.bf16 %v772, %v772
      %v789 = vpack.c.bf16 %v773, %v773
      %v790 = vpack.c.bf16 %v774, %v774
      %v791 = vld [vmem:[%s614 + $0x2] sm:$0xff]
      %v792 = vld [vmem:[%s614 + $0xa] sm:$0xff]
      %v793 = vld [vmem:[%s614 + $0x1a] sm:$0xff]
      %v794 = vld [vmem:[%s614 + $0x22] sm:$0xff]
      %v795 = vld [vmem:[%s614 + $0x32] sm:$0xff]
      %v796 = vld [vmem:[%s614 + $0x3a] sm:$0xff]
      %v797 = vld [vmem:[%s614 + $0x4a] sm:$0xff]
      %v798 = vld [vmem:[%s614 + $0x52] sm:$0xff]
      %v799 = vld [vmem:[%s614 + $0x62] sm:$0xff]
      %v800 = vld [vmem:[%s614 + $0x6a] sm:$0xff]
      %v801 = vld [vmem:[%s614 + $0x7a] sm:$0xff]
      %v802 = vld [vmem:[%s614 + $0x82] sm:$0xff]
      %v803 = vld [vmem:[%s614 + $0x92] sm:$0xff]
      %v804 = vld [vmem:[%s614 + $0x9a] sm:$0xff]
      %v805 = vld [vmem:[%s614 + $0xaa] sm:$0xff]
      %v806 = vld [vmem:[%s614 + $0xb2] sm:$0xff]
      %v807 = vpack.c.bf16 %v791, %v791
      %v808 = vpack.c.bf16 %v792, %v792
      %v809 = vpack.c.bf16 %v793, %v793
      %v810 = vpack.c.bf16 %v794, %v794
      %v811 = vpack.c.bf16 %v795, %v795
      %v812 = vpack.c.bf16 %v796, %v796
      %v813 = vpack.c.bf16 %v797, %v797
      %v814 = vpack.c.bf16 %v798, %v798
      %v815 = vpack.c.bf16 %v799, %v799
      %v816 = vpack.c.bf16 %v800, %v800
      %v817 = vpack.c.bf16 %v801, %v801
      %v818 = vpack.c.bf16 %v802, %v802
      %v819 = vpack.c.bf16 %v803, %v803
      %v820 = vpack.c.bf16 %v804, %v804
      %v821 = vpack.c.bf16 %v805, %v805
      %v822 = vpack.c.bf16 %v806, %v806
      %s823 = scalar_lea.vmem [#allocation2], 48
      %v824 = vld [vmem:[%s823] sm:$0xff]
      %v825 = vld [vmem:[%s823 + $0x8] sm:$0xff]
      %v826 = vld [vmem:[%s823 + $0x18] sm:$0xff]
      %v827 = vld [vmem:[%s823 + $0x20] sm:$0xff]
      %v828 = vld [vmem:[%s823 + $0x30] sm:$0xff]
      %v829 = vld [vmem:[%s823 + $0x38] sm:$0xff]
      %v830 = vld [vmem:[%s823 + $0x48] sm:$0xff]
      %v831 = vld [vmem:[%s823 + $0x50] sm:$0xff]
      %v832 = vld [vmem:[%s823 + $0x60] sm:$0xff]
      %v833 = vld [vmem:[%s823 + $0x68] sm:$0xff]
      %v834 = vld [vmem:[%s823 + $0x78] sm:$0xff]
      %v835 = vld [vmem:[%s823 + $0x80] sm:$0xff]
      %v836 = vld [vmem:[%s823 + $0x90] sm:$0xff]
      %v837 = vld [vmem:[%s823 + $0x98] sm:$0xff]
      %v838 = vld [vmem:[%s823 + $0xa8] sm:$0xff]
      %v839 = vld [vmem:[%s823 + $0xb0] sm:$0xff]
      %v840 = vpack.c.bf16 %v824, %v824
      %v841 = vpack.c.bf16 %v825, %v825
      %v842 = vpack.c.bf16 %v826, %v826
      %v843 = vpack.c.bf16 %v827, %v827
      %v844 = vpack.c.bf16 %v828, %v828
      %v845 = vpack.c.bf16 %v829, %v829
      %v846 = vpack.c.bf16 %v830, %v830
      %v847 = vpack.c.bf16 %v831, %v831
      %v848 = vpack.c.bf16 %v832, %v832
      %v849 = vpack.c.bf16 %v833, %v833
      %v850 = vpack.c.bf16 %v834, %v834
      %v851 = vpack.c.bf16 %v835, %v835
      %v852 = vpack.c.bf16 %v836, %v836
      %v853 = vpack.c.bf16 %v837, %v837
      %v854 = vpack.c.bf16 %v838, %v838
      %v855 = vpack.c.bf16 %v839, %v839
      %v856 = vld [vmem:[%s823 + $0x1] sm:$0xff]
      %v857 = vld [vmem:[%s823 + $0x9] sm:$0xff]
      %v858 = vld [vmem:[%s823 + $0x19] sm:$0xff]
      %v859 = vld [vmem:[%s823 + $0x21] sm:$0xff]
      %v860 = vld [vmem:[%s823 + $0x31] sm:$0xff]
      %v861 = vld [vmem:[%s823 + $0x39] sm:$0xff]
      %v862 = vld [vmem:[%s823 + $0x49] sm:$0xff]
      %v863 = vld [vmem:[%s823 + $0x51] sm:$0xff]
      %v864 = vld [vmem:[%s823 + $0x61] sm:$0xff]
      %v865 = vld [vmem:[%s823 + $0x69] sm:$0xff]
      %v866 = vld [vmem:[%s823 + $0x79] sm:$0xff]
      %v867 = vld [vmem:[%s823 + $0x81] sm:$0xff]
      %v868 = vld [vmem:[%s823 + $0x91] sm:$0xff]
      %v869 = vld [vmem:[%s823 + $0x99] sm:$0xff]
      %v870 = vld [vmem:[%s823 + $0xa9] sm:$0xff]
      %v871 = vld [vmem:[%s823 + $0xb1] sm:$0xff]
      %v872 = vpack.c.bf16 %v856, %v856
      %v873 = vpack.c.bf16 %v857, %v857
      %v874 = vpack.c.bf16 %v858, %v858
      %v875 = vpack.c.bf16 %v859, %v859
      %v876 = vpack.c.bf16 %v860, %v860
      %v877 = vpack.c.bf16 %v861, %v861
      %v878 = vpack.c.bf16 %v862, %v862
      %v879 = vpack.c.bf16 %v863, %v863
      %v880 = vpack.c.bf16 %v864, %v864
      %v881 = vpack.c.bf16 %v865, %v865
      %v882 = vpack.c.bf16 %v866, %v866
      %v883 = vpack.c.bf16 %v867, %v867
      %v884 = vpack.c.bf16 %v868, %v868
      %v885 = vpack.c.bf16 %v869, %v869
      %v886 = vpack.c.bf16 %v870, %v870
      %v887 = vpack.c.bf16 %v871, %v871
      %v888 = vld [vmem:[%s823 + $0x2] sm:$0xff]
      %v889 = vld [vmem:[%s823 + $0xa] sm:$0xff]
      %v890 = vld [vmem:[%s823 + $0x1a] sm:$0xff]
      %v891 = vld [vmem:[%s823 + $0x22] sm:$0xff]
      %v892 = vld [vmem:[%s823 + $0x32] sm:$0xff]
      %v893 = vld [vmem:[%s823 + $0x3a] sm:$0xff]
      %v894 = vld [vmem:[%s823 + $0x4a] sm:$0xff]
      %v895 = vld [vmem:[%s823 + $0x52] sm:$0xff]
      %v896 = vld [vmem:[%s823 + $0x62] sm:$0xff]
      %v897 = vld [vmem:[%s823 + $0x6a] sm:$0xff]
      %v898 = vld [vmem:[%s823 + $0x7a] sm:$0xff]
      %v899 = vld [vmem:[%s823 + $0x82] sm:$0xff]
      %v900 = vld [vmem:[%s823 + $0x92] sm:$0xff]
      %v901 = vld [vmem:[%s823 + $0x9a] sm:$0xff]
      %v902 = vld [vmem:[%s823 + $0xaa] sm:$0xff]
      %v903 = vld [vmem:[%s823 + $0xb2] sm:$0xff]
      %v904 = vpack.c.bf16 %v888, %v888
      %v905 = vpack.c.bf16 %v889, %v889
      %v906 = vpack.c.bf16 %v890, %v890
      %v907 = vpack.c.bf16 %v891, %v891
      %v908 = vpack.c.bf16 %v892, %v892
      %v909 = vpack.c.bf16 %v893, %v893
      %v910 = vpack.c.bf16 %v894, %v894
      %v911 = vpack.c.bf16 %v895, %v895
      %v912 = vpack.c.bf16 %v896, %v896
      %v913 = vpack.c.bf16 %v897, %v897
      %v914 = vpack.c.bf16 %v898, %v898
      %v915 = vpack.c.bf16 %v899, %v899
      %v916 = vpack.c.bf16 %v900, %v900
      %v917 = vpack.c.bf16 %v901, %v901
      %v918 = vpack.c.bf16 %v902, %v902
      %v919 = vpack.c.bf16 %v903, %v903
      %v936 = vunpack.c.l.b16 %v647
      %v937 = vunpack.c.l.b16 %v648
      %v938 = vunpack.c.l.b16 %v649
      %v939 = vunpack.c.l.b16 %v650
      %v940 = vunpack.c.l.b16 %v651
      %v941 = vunpack.c.l.b16 %v652
      %v942 = vunpack.c.l.b16 %v653
      %v943 = vunpack.c.l.b16 %v654
      %v944 = vunpack.c.l.b16 %v655
      %v945 = vunpack.c.l.b16 %v656
      %v946 = vunpack.c.l.b16 %v657
      %v947 = vunpack.c.l.b16 %v658
      %v948 = vunpack.c.l.b16 %v659
      %v949 = vunpack.c.l.b16 %v660
      %v950 = vunpack.c.l.b16 %v661
      %v951 = vunpack.c.l.b16 %v662
      %v952 = vpack.c.b16 %v937, %v936
      %v953 = vpack.c.b16 %v939, %v938
      %v954 = vpack.c.b16 %v941, %v940
      %v955 = vpack.c.b16 %v943, %v942
      %v956 = vpack.c.b16 %v945, %v944
      %v957 = vpack.c.b16 %v947, %v946
      %v958 = vpack.c.b16 %v949, %v948
      %v959 = vpack.c.b16 %v951, %v950
      %v976 = vunpack.c.l.b16 %v679
      %v977 = vunpack.c.l.b16 %v680
      %v978 = vunpack.c.l.b16 %v681
      %v979 = vunpack.c.l.b16 %v682
      %v980 = vunpack.c.l.b16 %v683
      %v981 = vunpack.c.l.b16 %v684
      %v982 = vunpack.c.l.b16 %v685
      %v983 = vunpack.c.l.b16 %v686
      %v984 = vunpack.c.l.b16 %v687
      %v985 = vunpack.c.l.b16 %v688
      %v986 = vunpack.c.l.b16 %v689
      %v987 = vunpack.c.l.b16 %v690
      %v988 = vunpack.c.l.b16 %v691
      %v989 = vunpack.c.l.b16 %v692
      %v990 = vunpack.c.l.b16 %v693
      %v991 = vunpack.c.l.b16 %v694
      %v992 = vpack.c.b16 %v977, %v976
      %v993 = vpack.c.b16 %v979, %v978
      %v994 = vpack.c.b16 %v981, %v980
      %v995 = vpack.c.b16 %v983, %v982
      %v996 = vpack.c.b16 %v985, %v984
      %v997 = vpack.c.b16 %v987, %v986
      %v998 = vpack.c.b16 %v989, %v988
      %v999 = vpack.c.b16 %v991, %v990
      %1000 = vrot.lane.b32.xlu0 %v992, 4
      %v1001 = vpop.permute.xlu0 %1000
      %1002 = vrot.lane.b32.xlu0 %v993, 4
      %v1003 = vpop.permute.xlu0 %1002
      %1004 = vrot.lane.b32.xlu0 %v994, 4
      %v1005 = vpop.permute.xlu0 %1004
      %1006 = vrot.lane.b32.xlu0 %v995, 4
      %v1007 = vpop.permute.xlu0 %1006
      %1008 = vrot.lane.b32.xlu0 %v996, 4
      %v1009 = vpop.permute.xlu0 %1008
      %1010 = vrot.lane.b32.xlu0 %v997, 4
      %v1011 = vpop.permute.xlu0 %1010
      %1012 = vrot.lane.b32.xlu0 %v998, 4
      %v1013 = vpop.permute.xlu0 %1012
      %1014 = vrot.lane.b32.xlu0 %v999, 4
      %v1015 = vpop.permute.xlu0 %1014
      %v1032 = vunpack.c.l.b16 %v711
      %v1033 = vunpack.c.l.b16 %v712
      %v1034 = vunpack.c.l.b16 %v713
      %v1035 = vunpack.c.l.b16 %v714
      %v1036 = vunpack.c.l.b16 %v715
      %v1037 = vunpack.c.l.b16 %v716
      %v1038 = vunpack.c.l.b16 %v717
      %v1039 = vunpack.c.l.b16 %v718
      %v1040 = vunpack.c.l.b16 %v719
      %v1041 = vunpack.c.l.b16 %v720
      %v1042 = vunpack.c.l.b16 %v721
      %v1043 = vunpack.c.l.b16 %v722
      %v1044 = vunpack.c.l.b16 %v723
      %v1045 = vunpack.c.l.b16 %v724
      %v1046 = vunpack.c.l.b16 %v725
      %v1047 = vunpack.c.l.b16 %v726
      %v1048 = vpack.c.b16 %v1033, %v1032
      %v1049 = vpack.c.b16 %v1035, %v1034
      %v1050 = vpack.c.b16 %v1037, %v1036
      %v1051 = vpack.c.b16 %v1039, %v1038
      %v1052 = vpack.c.b16 %v1041, %v1040
      %v1053 = vpack.c.b16 %v1043, %v1042
      %v1054 = vpack.c.b16 %v1045, %v1044
      %v1055 = vpack.c.b16 %v1047, %v1046
      %1056 = vrot.lane.b32.xlu0 %v1048, 8
      %v1057 = vpop.permute.xlu0 %1056
      %1058 = vrot.lane.b32.xlu0 %v1049, 8
      %v1059 = vpop.permute.xlu0 %1058
      %1060 = vrot.lane.b32.xlu0 %v1050, 8
      %v1061 = vpop.permute.xlu0 %1060
      %1062 = vrot.lane.b32.xlu0 %v1051, 8
      %v1063 = vpop.permute.xlu0 %1062
      %1064 = vrot.lane.b32.xlu0 %v1052, 8
      %v1065 = vpop.permute.xlu0 %1064
      %1066 = vrot.lane.b32.xlu0 %v1053, 8
      %v1067 = vpop.permute.xlu0 %1066
      %1068 = vrot.lane.b32.xlu0 %v1054, 8
      %v1069 = vpop.permute.xlu0 %1068
      %1070 = vrot.lane.b32.xlu0 %v1055, 8
      %v1071 = vpop.permute.xlu0 %1070
      %v1088 = vunpack.c.l.b16 %v743
      %v1089 = vunpack.c.l.b16 %v744
      %v1090 = vunpack.c.l.b16 %v745
      %v1091 = vunpack.c.l.b16 %v746
      %v1092 = vunpack.c.l.b16 %v747
      %v1093 = vunpack.c.l.b16 %v748
      %v1094 = vunpack.c.l.b16 %v749
      %v1095 = vunpack.c.l.b16 %v750
      %v1096 = vunpack.c.l.b16 %v751
      %v1097 = vunpack.c.l.b16 %v752
      %v1098 = vunpack.c.l.b16 %v753
      %v1099 = vunpack.c.l.b16 %v754
      %v1100 = vunpack.c.l.b16 %v755
      %v1101 = vunpack.c.l.b16 %v756
      %v1102 = vunpack.c.l.b16 %v757
      %v1103 = vunpack.c.l.b16 %v758
      %v1104 = vpack.c.b16 %v1089, %v1088
      %v1105 = vpack.c.b16 %v1091, %v1090
      %v1106 = vpack.c.b16 %v1093, %v1092
      %v1107 = vpack.c.b16 %v1095, %v1094
      %v1108 = vpack.c.b16 %v1097, %v1096
      %v1109 = vpack.c.b16 %v1099, %v1098
      %v1110 = vpack.c.b16 %v1101, %v1100
      %v1111 = vpack.c.b16 %v1103, %v1102
      %1112 = vrot.lane.b32.xlu0 %v1104, 12
      %v1113 = vpop.permute.xlu0 %1112
      %1114 = vrot.lane.b32.xlu0 %v1105, 12
      %v1115 = vpop.permute.xlu0 %1114
      %1116 = vrot.lane.b32.xlu0 %v1106, 12
      %v1117 = vpop.permute.xlu0 %1116
      %1118 = vrot.lane.b32.xlu0 %v1107, 12
      %v1119 = vpop.permute.xlu0 %1118
      %1120 = vrot.lane.b32.xlu0 %v1108, 12
      %v1121 = vpop.permute.xlu0 %1120
      %1122 = vrot.lane.b32.xlu0 %v1109, 12
      %v1123 = vpop.permute.xlu0 %1122
      %1124 = vrot.lane.b32.xlu0 %v1110, 12
      %v1125 = vpop.permute.xlu0 %1124
      %1126 = vrot.lane.b32.xlu0 %v1111, 12
      %v1127 = vpop.permute.xlu0 %1126
      %v1144 = vunpack.c.l.b16 %v775
      %v1145 = vunpack.c.l.b16 %v776
      %v1146 = vunpack.c.l.b16 %v777
      %v1147 = vunpack.c.l.b16 %v778
      %v1148 = vunpack.c.l.b16 %v779
      %v1149 = vunpack.c.l.b16 %v780
      %v1150 = vunpack.c.l.b16 %v781
      %v1151 = vunpack.c.l.b16 %v782
      %v1152 = vunpack.c.l.b16 %v783
      %v1153 = vunpack.c.l.b16 %v784
      %v1154 = vunpack.c.l.b16 %v785
      %v1155 = vunpack.c.l.b16 %v786
      %v1156 = vunpack.c.l.b16 %v787
      %v1157 = vunpack.c.l.b16 %v788
      %v1158 = vunpack.c.l.b16 %v789
      %v1159 = vunpack.c.l.b16 %v790
      %v1160 = vpack.c.b16 %v1145, %v1144
      %v1161 = vpack.c.b16 %v1147, %v1146
      %v1162 = vpack.c.b16 %v1149, %v1148
      %v1163 = vpack.c.b16 %v1151, %v1150
      %v1164 = vpack.c.b16 %v1153, %v1152
      %v1165 = vpack.c.b16 %v1155, %v1154
      %v1166 = vpack.c.b16 %v1157, %v1156
      %v1167 = vpack.c.b16 %v1159, %v1158
      %1168 = vrot.lane.b32.xlu0 %v1160, 16
      %v1169 = vpop.permute.xlu0 %1168
      %1170 = vrot.lane.b32.xlu0 %v1161, 16
      %v1171 = vpop.permute.xlu0 %1170
      %1172 = vrot.lane.b32.xlu0 %v1162, 16
      %v1173 = vpop.permute.xlu0 %1172
      %1174 = vrot.lane.b32.xlu0 %v1163, 16
      %v1175 = vpop.permute.xlu0 %1174
      %1176 = vrot.lane.b32.xlu0 %v1164, 16
      %v1177 = vpop.permute.xlu0 %1176
      %1178 = vrot.lane.b32.xlu0 %v1165, 16
      %v1179 = vpop.permute.xlu0 %1178
      %1180 = vrot.lane.b32.xlu0 %v1166, 16
      %v1181 = vpop.permute.xlu0 %1180
      %1182 = vrot.lane.b32.xlu0 %v1167, 16
      %v1183 = vpop.permute.xlu0 %1182
      %v1200 = vunpack.c.l.b16 %v807
      %v1201 = vunpack.c.l.b16 %v808
      %v1202 = vunpack.c.l.b16 %v809
      %v1203 = vunpack.c.l.b16 %v810
      %v1204 = vunpack.c.l.b16 %v811
      %v1205 = vunpack.c.l.b16 %v812
      %v1206 = vunpack.c.l.b16 %v813
      %v1207 = vunpack.c.l.b16 %v814
      %v1208 = vunpack.c.l.b16 %v815
      %v1209 = vunpack.c.l.b16 %v816
      %v1210 = vunpack.c.l.b16 %v817
      %v1211 = vunpack.c.l.b16 %v818
      %v1212 = vunpack.c.l.b16 %v819
      %v1213 = vunpack.c.l.b16 %v820
      %v1214 = vunpack.c.l.b16 %v821
      %v1215 = vunpack.c.l.b16 %v822
      %v1216 = vpack.c.b16 %v1201, %v1200
      %v1217 = vpack.c.b16 %v1203, %v1202
      %v1218 = vpack.c.b16 %v1205, %v1204
      %v1219 = vpack.c.b16 %v1207, %v1206
      %v1220 = vpack.c.b16 %v1209, %v1208
      %v1221 = vpack.c.b16 %v1211, %v1210
      %v1222 = vpack.c.b16 %v1213, %v1212
      %v1223 = vpack.c.b16 %v1215, %v1214
      %1224 = vrot.lane.b32.xlu0 %v1216, 20
      %v1225 = vpop.permute.xlu0 %1224
      %1226 = vrot.lane.b32.xlu0 %v1217, 20
      %v1227 = vpop.permute.xlu0 %1226
      %1228 = vrot.lane.b32.xlu0 %v1218, 20
      %v1229 = vpop.permute.xlu0 %1228
      %1230 = vrot.lane.b32.xlu0 %v1219, 20
      %v1231 = vpop.permute.xlu0 %1230
      %1232 = vrot.lane.b32.xlu0 %v1220, 20
      %v1233 = vpop.permute.xlu0 %1232
      %1234 = vrot.lane.b32.xlu0 %v1221, 20
      %v1235 = vpop.permute.xlu0 %1234
      %1236 = vrot.lane.b32.xlu0 %v1222, 20
      %v1237 = vpop.permute.xlu0 %1236
      %1238 = vrot.lane.b32.xlu0 %v1223, 20
      %v1239 = vpop.permute.xlu0 %1238
      %v1256 = vunpack.c.l.b16 %v840
      %v1257 = vunpack.c.l.b16 %v841
      %v1258 = vunpack.c.l.b16 %v842
      %v1259 = vunpack.c.l.b16 %v843
      %v1260 = vunpack.c.l.b16 %v844
      %v1261 = vunpack.c.l.b16 %v845
      %v1262 = vunpack.c.l.b16 %v846
      %v1263 = vunpack.c.l.b16 %v847
      %v1264 = vunpack.c.l.b16 %v848
      %v1265 = vunpack.c.l.b16 %v849
      %v1266 = vunpack.c.l.b16 %v850
      %v1267 = vunpack.c.l.b16 %v851
      %v1268 = vunpack.c.l.b16 %v852
      %v1269 = vunpack.c.l.b16 %v853
      %v1270 = vunpack.c.l.b16 %v854
      %v1271 = vunpack.c.l.b16 %v855
      %v1272 = vpack.c.b16 %v1257, %v1256
      %v1273 = vpack.c.b16 %v1259, %v1258
      %v1274 = vpack.c.b16 %v1261, %v1260
      %v1275 = vpack.c.b16 %v1263, %v1262
      %v1276 = vpack.c.b16 %v1265, %v1264
      %v1277 = vpack.c.b16 %v1267, %v1266
      %v1278 = vpack.c.b16 %v1269, %v1268
      %v1279 = vpack.c.b16 %v1271, %v1270
      %1280 = vrot.lane.b32.xlu0 %v1272, 24
      %v1281 = vpop.permute.xlu0 %1280
      %1282 = vrot.lane.b32.xlu0 %v1273, 24
      %v1283 = vpop.permute.xlu0 %1282
      %1284 = vrot.lane.b32.xlu0 %v1274, 24
      %v1285 = vpop.permute.xlu0 %1284
      %1286 = vrot.lane.b32.xlu0 %v1275, 24
      %v1287 = vpop.permute.xlu0 %1286
      %1288 = vrot.lane.b32.xlu0 %v1276, 24
      %v1289 = vpop.permute.xlu0 %1288
      %1290 = vrot.lane.b32.xlu0 %v1277, 24
      %v1291 = vpop.permute.xlu0 %1290
      %1292 = vrot.lane.b32.xlu0 %v1278, 24
      %v1293 = vpop.permute.xlu0 %1292
      %1294 = vrot.lane.b32.xlu0 %v1279, 24
      %v1295 = vpop.permute.xlu0 %1294
      %v1312 = vunpack.c.l.b16 %v872
      %v1313 = vunpack.c.l.b16 %v873
      %v1314 = vunpack.c.l.b16 %v874
      %v1315 = vunpack.c.l.b16 %v875
      %v1316 = vunpack.c.l.b16 %v876
      %v1317 = vunpack.c.l.b16 %v877
      %v1318 = vunpack.c.l.b16 %v878
      %v1319 = vunpack.c.l.b16 %v879
      %v1320 = vunpack.c.l.b16 %v880
      %v1321 = vunpack.c.l.b16 %v881
      %v1322 = vunpack.c.l.b16 %v882
      %v1323 = vunpack.c.l.b16 %v883
      %v1324 = vunpack.c.l.b16 %v884
      %v1325 = vunpack.c.l.b16 %v885
      %v1326 = vunpack.c.l.b16 %v886
      %v1327 = vunpack.c.l.b16 %v887
      %v1328 = vpack.c.b16 %v1313, %v1312
      %v1329 = vpack.c.b16 %v1315, %v1314
      %v1330 = vpack.c.b16 %v1317, %v1316
      %v1331 = vpack.c.b16 %v1319, %v1318
      %v1332 = vpack.c.b16 %v1321, %v1320
      %v1333 = vpack.c.b16 %v1323, %v1322
      %v1334 = vpack.c.b16 %v1325, %v1324
      %v1335 = vpack.c.b16 %v1327, %v1326
      %1336 = vrot.lane.b32.xlu0 %v1328, 28
      %v1337 = vpop.permute.xlu0 %1336
      %1338 = vrot.lane.b32.xlu0 %v1329, 28
      %v1339 = vpop.permute.xlu0 %1338
      %1340 = vrot.lane.b32.xlu0 %v1330, 28
      %v1341 = vpop.permute.xlu0 %1340
      %1342 = vrot.lane.b32.xlu0 %v1331, 28
      %v1343 = vpop.permute.xlu0 %1342
      %1344 = vrot.lane.b32.xlu0 %v1332, 28
      %v1345 = vpop.permute.xlu0 %1344
      %1346 = vrot.lane.b32.xlu0 %v1333, 28
      %v1347 = vpop.permute.xlu0 %1346
      %1348 = vrot.lane.b32.xlu0 %v1334, 28
      %v1349 = vpop.permute.xlu0 %1348
      %1350 = vrot.lane.b32.xlu0 %v1335, 28
      %v1351 = vpop.permute.xlu0 %1350
      %v1368 = vunpack.c.l.b16 %v904
      %v1369 = vunpack.c.l.b16 %v905
      %v1370 = vunpack.c.l.b16 %v906
      %v1371 = vunpack.c.l.b16 %v907
      %v1372 = vunpack.c.l.b16 %v908
      %v1373 = vunpack.c.l.b16 %v909
      %v1374 = vunpack.c.l.b16 %v910
      %v1375 = vunpack.c.l.b16 %v911
      %v1376 = vunpack.c.l.b16 %v912
      %v1377 = vunpack.c.l.b16 %v913
      %v1378 = vunpack.c.l.b16 %v914
      %v1379 = vunpack.c.l.b16 %v915
      %v1380 = vunpack.c.l.b16 %v916
      %v1381 = vunpack.c.l.b16 %v917
      %v1382 = vunpack.c.l.b16 %v918
      %v1383 = vunpack.c.l.b16 %v919
      %v1384 = vpack.c.b16 %v1369, %v1368
      %v1385 = vpack.c.b16 %v1371, %v1370
      %v1386 = vpack.c.b16 %v1373, %v1372
      %v1387 = vpack.c.b16 %v1375, %v1374
      %v1388 = vpack.c.b16 %v1377, %v1376
      %v1389 = vpack.c.b16 %v1379, %v1378
      %v1390 = vpack.c.b16 %v1381, %v1380
      %v1391 = vpack.c.b16 %v1383, %v1382
      %1392 = vrot.lane.b32.xlu0 %v1384, 32
      %v1393 = vpop.permute.xlu0 %1392
      %1394 = vrot.lane.b32.xlu0 %v1385, 32
      %v1395 = vpop.permute.xlu0 %1394
      %1396 = vrot.lane.b32.xlu0 %v1386, 32
      %v1397 = vpop.permute.xlu0 %1396
      %1398 = vrot.lane.b32.xlu0 %v1387, 32
      %v1399 = vpop.permute.xlu0 %1398
      %1400 = vrot.lane.b32.xlu0 %v1388, 32
      %v1401 = vpop.permute.xlu0 %1400
      %1402 = vrot.lane.b32.xlu0 %v1389, 32
      %v1403 = vpop.permute.xlu0 %1402
      %1404 = vrot.lane.b32.xlu0 %v1390, 32
      %v1405 = vpop.permute.xlu0 %1404
      %1406 = vrot.lane.b32.xlu0 %v1391, 32
      %v1407 = vpop.permute.xlu0 %1406
      %v1410 = vsel %vm608, %v952, %v1001
      %v1413 = vsel %vm608, %v953, %v1003
      %v1416 = vsel %vm608, %v954, %v1005
      %v1419 = vsel %vm608, %v955, %v1007
      %v1422 = vsel %vm608, %v956, %v1009
      %v1425 = vsel %vm608, %v957, %v1011
      %v1428 = vsel %vm608, %v958, %v1013
      %v1431 = vsel %vm608, %v959, %v1015
      %vm1432 = vcmask 64512
      %v1434 = vsel %vm1432, %v1410, %v1057
      %v1436 = vsel %vm1432, %v1413, %v1059
      %v1438 = vsel %vm1432, %v1416, %v1061
      %v1440 = vsel %vm1432, %v1419, %v1063
      %v1442 = vsel %vm1432, %v1422, %v1065
      %v1444 = vsel %vm1432, %v1425, %v1067
      %v1446 = vsel %vm1432, %v1428, %v1069
      %v1448 = vsel %vm1432, %v1431, %v1071
      %vm1449 = vcmask 97280
      %v1451 = vsel %vm1449, %v1434, %v1113
      %v1453 = vsel %vm1449, %v1436, %v1115
      %v1455 = vsel %vm1449, %v1438, %v1117
      %v1457 = vsel %vm1449, %v1440, %v1119
      %v1459 = vsel %vm1449, %v1442, %v1121
      %v1461 = vsel %vm1449, %v1444, %v1123
      %v1463 = vsel %vm1449, %v1446, %v1125
      %v1465 = vsel %vm1449, %v1448, %v1127
      %vm1466 = vcmask 130048
      %v1468 = vsel %vm1466, %v1451, %v1169
      %v1470 = vsel %vm1466, %v1453, %v1171
      %v1472 = vsel %vm1466, %v1455, %v1173
      %v1474 = vsel %vm1466, %v1457, %v1175
      %v1476 = vsel %vm1466, %v1459, %v1177
      %v1478 = vsel %vm1466, %v1461, %v1179
      %v1480 = vsel %vm1466, %v1463, %v1181
      %v1482 = vsel %vm1466, %v1465, %v1183
      %vm1483 = vcmask 162816
      %v1485 = vsel %vm1483, %v1468, %v1225
      %v1487 = vsel %vm1483, %v1470, %v1227
      %v1489 = vsel %vm1483, %v1472, %v1229
      %v1491 = vsel %vm1483, %v1474, %v1231
      %v1493 = vsel %vm1483, %v1476, %v1233
      %v1495 = vsel %vm1483, %v1478, %v1235
      %v1497 = vsel %vm1483, %v1480, %v1237
      %v1499 = vsel %vm1483, %v1482, %v1239
      %vm1500 = vcmask 195584
      %v1502 = vsel %vm1500, %v1485, %v1281
      %v1504 = vsel %vm1500, %v1487, %v1283
      %v1506 = vsel %vm1500, %v1489, %v1285
      %v1508 = vsel %vm1500, %v1491, %v1287
      %v1510 = vsel %vm1500, %v1493, %v1289
      %v1512 = vsel %vm1500, %v1495, %v1291
      %v1514 = vsel %vm1500, %v1497, %v1293
      %v1516 = vsel %vm1500, %v1499, %v1295
      %vm1517 = vcmask 228352
      %v1519 = vsel %vm1517, %v1502, %v1337
      %v1521 = vsel %vm1517, %v1504, %v1339
      %v1523 = vsel %vm1517, %v1506, %v1341
      %v1525 = vsel %vm1517, %v1508, %v1343
      %v1527 = vsel %vm1517, %v1510, %v1345
      %v1529 = vsel %vm1517, %v1512, %v1347
      %v1531 = vsel %vm1517, %v1514, %v1349
      %v1533 = vsel %vm1517, %v1516, %v1351
      %vm1534 = vcmask 261120
      %v1536 = vsel %vm1534, %v1519, %v1393
      %v1538 = vsel %vm1534, %v1521, %v1395
      %v1540 = vsel %vm1534, %v1523, %v1397
      %v1542 = vsel %vm1534, %v1525, %v1399
      %v1544 = vsel %vm1534, %v1527, %v1401
      %v1546 = vsel %vm1534, %v1529, %v1403
      %v1548 = vsel %vm1534, %v1531, %v1405
      %v1550 = vsel %vm1534, %v1533, %v1407
      %v1551 = vld [vmem:[%s3] sm:$0xf]
      %v1552 = vld [vmem:[%s3 + $0x4] sm:$0xf]
      %v1553 = vld [vmem:[%s3 + $0x8] sm:$0xf]
      %v1554 = vld [vmem:[%s3 + $0xc] sm:$0xf]
      %v1555 = vld [vmem:[%s3 + $0x10] sm:$0x3]
      %v1561 = vunpack.c.l.b16 %v1551
      %v1562 = vunpack.c.l.b16 %v1552
      %v1563 = vunpack.c.l.b16 %v1553
      %v1564 = vunpack.c.l.b16 %v1554
      %v1565 = vunpack.c.l.b16 %v1555
      %v1566 = vpack.c.b16 %v1562, %v1561
      %v1567 = vpack.c.b16 %v1564, %v1563
      %v1568 = vpack.c.b16 %v1565, %v1565
      %vm1571 = vcmask 293888
      %v1572 = vsel %vm1571, %v1536, 0
      %v1574 = vsel %vm1571, %v1538, 0
      %v1576 = vsel %vm1571, %v1540, 0
      %v1578 = vsel %vm1571, %v1542, 0
      %v1580 = vsel %vm1571, %v1544, 0
      %v1582 = vsel %vm1571, %v1546, 0
      %v1584 = vsel %vm1571, %v1548, 0
      %v1586 = vsel %vm1571, %v1550, 0
      %vm1588 = vcmask 1041408
      %v1590 = vsel %vm1588, %v1568, 0
      %1592 = vmatpush.bf16.msra.mxu0 0
      %1593 = vmatpush.bf16.msra.mxu0 0
      %1594 = vmatpush.bf16.msra.mxu0 0
      %1595 = vmatpush.bf16.msra.mxu0 0
      %1596 = vmatpush.bf16.msra.mxu0 0
      %1597 = vmatpush.bf16.msra.mxu0 %v1590
      %1598 = vmatpush.bf16.msra.mxu0 %v1567
      %1599 = vmatpush.bf16.msra.mxu0 %v1566
      %1600 = vmatmul.bf16.gmra.mxu0 %v1572
      %v1601 = vpop.f32.mrf.mxu0
      %v1602 = vadd.f32 0.0, %v1601
      %v1603 = vpop.f32.mrf.mxu0
      %v1604 = vadd.f32 0.0, %v1603
      %1605 = vmatmul.bf16.gmra.mxu0 %v1574
      %v1606 = vpop.f32.mrf.mxu0
      %v1607 = vadd.f32 0.0, %v1606
      %v1608 = vpop.f32.mrf.mxu0
      %v1609 = vadd.f32 0.0, %v1608
      %1610 = vmatmul.bf16.gmra.mxu0 %v1576
      %v1611 = vpop.f32.mrf.mxu0
      %v1612 = vadd.f32 0.0, %v1611
      %v1613 = vpop.f32.mrf.mxu0
      %v1614 = vadd.f32 0.0, %v1613
      %1615 = vmatmul.bf16.gmra.mxu0 %v1578
      %v1616 = vpop.f32.mrf.mxu0
      %v1617 = vadd.f32 0.0, %v1616
      %v1618 = vpop.f32.mrf.mxu0
      %v1619 = vadd.f32 0.0, %v1618
      %1620 = vmatmul.bf16.gmra.mxu0 %v1580
      %v1621 = vpop.f32.mrf.mxu0
      %v1622 = vadd.f32 0.0, %v1621
      %v1623 = vpop.f32.mrf.mxu0
      %v1624 = vadd.f32 0.0, %v1623
      %1625 = vmatmul.bf16.gmra.mxu0 %v1582
      %v1626 = vpop.f32.mrf.mxu0
      %v1627 = vadd.f32 0.0, %v1626
      %v1628 = vpop.f32.mrf.mxu0
      %v1629 = vadd.f32 0.0, %v1628
      %1630 = vmatmul.bf16.gmra.mxu0 %v1584
      %v1631 = vpop.f32.mrf.mxu0
      %v1632 = vadd.f32 0.0, %v1631
      %v1633 = vpop.f32.mrf.mxu0
      %v1634 = vadd.f32 0.0, %v1633
      %1635 = vmatmul.bf16.gmra.mxu0 %v1586
      %v1636 = vpop.f32.mrf.mxu0
      %v1637 = vadd.f32 0.0, %v1636
      %v1638 = vpop.f32.mrf.mxu0
      %v1639 = vadd.f32 0.0, %v1638
      %1640 = vdwg.mxu0
      %v1641 = vpack.c.bf16 %v1602, %v1602
      %v1642 = vpack.c.bf16 %v1604, %v1604
      %v1643 = vpack.c.bf16 %v1607, %v1607
      %v1644 = vpack.c.bf16 %v1609, %v1609
      %v1645 = vpack.c.bf16 %v1612, %v1612
      %v1646 = vpack.c.bf16 %v1614, %v1614
      %v1647 = vpack.c.bf16 %v1617, %v1617
      %v1648 = vpack.c.bf16 %v1619, %v1619
      %v1649 = vpack.c.bf16 %v1622, %v1622
      %v1650 = vpack.c.bf16 %v1624, %v1624
      %v1651 = vpack.c.bf16 %v1627, %v1627
      %v1652 = vpack.c.bf16 %v1629, %v1629
      %v1653 = vpack.c.bf16 %v1632, %v1632
      %v1654 = vpack.c.bf16 %v1634, %v1634
      %v1655 = vpack.c.bf16 %v1637, %v1637
      %v1656 = vpack.c.bf16 %v1639, %v1639
      %vm1657 = vcmask 27648
      %1658 = vst.msk [vmem:[%s454] sm:$0xf] %vm1657, %v1641
      %1659 = vst.msk [vmem:[%s454 + $0x4] sm:$0xf] %vm1657, %v1642
      %1660 = vst.msk [vmem:[%s454 + $0x8] sm:$0xf] %vm1657, %v1643
      %1661 = vst.msk [vmem:[%s454 + $0xc] sm:$0xf] %vm1657, %v1644
      %1662 = vst.msk [vmem:[%s454 + $0x10] sm:$0xf] %vm1657, %v1645
      %1663 = vst.msk [vmem:[%s454 + $0x14] sm:$0xf] %vm1657, %v1646
      %1664 = vst.msk [vmem:[%s454 + $0x18] sm:$0xf] %vm1657, %v1647
      %1665 = vst.msk [vmem:[%s454 + $0x1c] sm:$0xf] %vm1657, %v1648
      %1666 = vst.msk [vmem:[%s454 + $0x20] sm:$0xf] %vm1657, %v1649
      %1667 = vst.msk [vmem:[%s454 + $0x24] sm:$0xf] %vm1657, %v1650
      %1668 = vst.msk [vmem:[%s454 + $0x28] sm:$0xf] %vm1657, %v1651
      %1669 = vst.msk [vmem:[%s454 + $0x2c] sm:$0xf] %vm1657, %v1652
      %1670 = vst.msk [vmem:[%s454 + $0x30] sm:$0xf] %vm1657, %v1653
      %1671 = vst.msk [vmem:[%s454 + $0x34] sm:$0xf] %vm1657, %v1654
      %1672 = vst.msk [vmem:[%s454 + $0x38] sm:$0xf] %vm1657, %v1655
      %1673 = vst.msk [vmem:[%s454 + $0x3c] sm:$0xf] %vm1657, %v1656
      %v1674 = vsel %vm608, %v1602, 0.0
      %v1675 = vsel %vm608, %v1604, 0.0
      %v1676 = vadd.f32 %v1674, %v1675
      %v1677 = vsel %vm608, %v1607, 0.0
      %v1678 = vadd.f32 %v1676, %v1677
      %v1679 = vsel %vm608, %v1609, 0.0
      %v1680 = vadd.f32 %v1678, %v1679
      %v1681 = vsel %vm608, %v1612, 0.0
      %v1682 = vadd.f32 %v1680, %v1681
      %v1683 = vsel %vm608, %v1614, 0.0
      %v1684 = vadd.f32 %v1682, %v1683
      %v1685 = vsel %vm608, %v1617, 0.0
      %v1686 = vadd.f32 %v1684, %v1685
      %v1687 = vsel %vm608, %v1619, 0.0
      %v1688 = vadd.f32 %v1686, %v1687
      %v1689 = vsel %vm608, %v1622, 0.0
      %v1690 = vadd.f32 %v1688, %v1689
      %v1691 = vsel %vm608, %v1624, 0.0
      %v1692 = vadd.f32 %v1690, %v1691
      %v1693 = vsel %vm608, %v1627, 0.0
      %v1694 = vadd.f32 %v1692, %v1693
      %v1695 = vsel %vm608, %v1629, 0.0
      %v1696 = vadd.f32 %v1694, %v1695
      %v1697 = vsel %vm608, %v1632, 0.0
      %v1698 = vadd.f32 %v1696, %v1697
      %v1699 = vsel %vm608, %v1634, 0.0
      %v1700 = vadd.f32 %v1698, %v1699
      %v1701 = vsel %vm608, %v1637, 0.0
      %v1702 = vadd.f32 %v1700, %v1701
      %v1703 = vsel %vm608, %v1639, 0.0
      %v1704 = vadd.f32 %v1702, %v1703
      %v1705 = vrot.slane %v1704, 4
      %v1706 = vadd.f32 %v1704, %v1705
      %v1707 = vrot.slane %v1706, 2
      %v1708 = vadd.f32 %v1706, %v1707
      %v1709 = vrot.slane %v1708, 1
      %v1710 = vadd.f32 %v1708, %v1709
      %v1711 = vmul.f32 %v1602, %v1602
      %v1712 = vmul.f32 %v1604, %v1604
      %v1713 = vmul.f32 %v1607, %v1607
      %v1714 = vmul.f32 %v1609, %v1609
      %v1715 = vmul.f32 %v1612, %v1612
      %v1716 = vmul.f32 %v1614, %v1614
      %v1717 = vmul.f32 %v1617, %v1617
      %v1718 = vmul.f32 %v1619, %v1619
      %v1719 = vmul.f32 %v1622, %v1622
      %v1720 = vmul.f32 %v1624, %v1624
      %v1721 = vmul.f32 %v1627, %v1627
      %v1722 = vmul.f32 %v1629, %v1629
      %v1723 = vmul.f32 %v1632, %v1632
      %v1724 = vmul.f32 %v1634, %v1634
      %v1725 = vmul.f32 %v1637, %v1637
      %v1726 = vmul.f32 %v1639, %v1639
      %v1727 = vsel %vm608, %v1711, 0.0
      %v1728 = vsel %vm608, %v1712, 0.0
      %v1729 = vadd.f32 %v1727, %v1728
      %v1730 = vsel %vm608, %v1713, 0.0
      %v1731 = vadd.f32 %v1729, %v1730
      %v1732 = vsel %vm608, %v1714, 0.0
      %v1733 = vadd.f32 %v1731, %v1732
      %v1734 = vsel %vm608, %v1715, 0.0
      %v1735 = vadd.f32 %v1733, %v1734
      %v1736 = vsel %vm608, %v1716, 0.0
      %v1737 = vadd.f32 %v1735, %v1736
      %v1738 = vsel %vm608, %v1717, 0.0
      %v1739 = vadd.f32 %v1737, %v1738
      %v1740 = vsel %vm608, %v1718, 0.0
      %v1741 = vadd.f32 %v1739, %v1740
      %v1742 = vsel %vm608, %v1719, 0.0
      %v1743 = vadd.f32 %v1741, %v1742
      %v1744 = vsel %vm608, %v1720, 0.0
      %v1745 = vadd.f32 %v1743, %v1744
      %v1746 = vsel %vm608, %v1721, 0.0
      %v1747 = vadd.f32 %v1745, %v1746
      %v1748 = vsel %vm608, %v1722, 0.0
      %v1749 = vadd.f32 %v1747, %v1748
      %v1750 = vsel %vm608, %v1723, 0.0
      %v1751 = vadd.f32 %v1749, %v1750
      %v1752 = vsel %vm608, %v1724, 0.0
      %v1753 = vadd.f32 %v1751, %v1752
      %v1754 = vsel %vm608, %v1725, 0.0
      %v1755 = vadd.f32 %v1753, %v1754
      %v1756 = vsel %vm608, %v1726, 0.0
      %v1757 = vadd.f32 %v1755, %v1756
      %v1758 = vrot.slane %v1757, 4
      %v1759 = vadd.f32 %v1757, %v1758
      %v1760 = vrot.slane %v1759, 2
      %v1761 = vadd.f32 %v1759, %v1760
      %v1762 = vrot.slane %v1761, 1
      %v1763 = vadd.f32 %v1761, %v1762
      %vm1764 = vcmask 1040384
      %v1765 = vsel %vm1764, %v1710, %v1763
      %vm1766 = vcmask 25600
      %1767 = vst.msk [vmem:[%s463] sm:$0x3] %vm1766, %v1765
      %s1768 = smul.u32 %s23, 2
      %s1769 = sadd.s32 %s1768, %s24
      %s1770 = smul.u32 16, %s1769
      %p1771 = scmp.lt.s32.totalorder %s1770, 63
      %s1772 = scalar_select %p1771, %s1770, 63
      %s1773 = smul.addr %s1772, 4
      %s1774 = scalar_lea.vmem %s6, %s1773
      %s1775 = smul.u32 %s23, 2
      %s1776 = sadd.s32 %s1775, %s24
      %p1777 = scmp.lt.s32.totalorder %s1776, 3
      %s1778 = scalar_select %p1777, %s1776, 3
      %s1779 = smul.addr %s1778, 2
      %s1780 = scalar_lea.vmem %s7, %s1779
      // Predicated region
      $region45: #{bottleneck_forward.5} parent=43 // pred_check
        %p1781 = pneg %p216
      $region46: #{bottleneck_forward.5} parent=43 // pred_check_branch
        %1783 = sbr.rel (%p1781) target = $region48
      $region47: #{bottleneck_forward.5} parent=43 // pred_region
        %s1784 = smul.u32 %s23, 2
        %s1785 = sadd.s32 %s1784, %s24
        %s1786 = smul.u32 16, %s1785
      $region48: #{bottleneck_forward.5} parent=43 // pred_fallthru
        _
      // Predicated region
      $region49: #{bottleneck_forward.5} parent=43 // pred_check
        %p1787 = pneg %p246
      $region50: #{bottleneck_forward.5} parent=43 // pred_check_branch
        %1789 = sbr.rel (%p1787) target = $region52
      $region51: #{bottleneck_forward.5} parent=43 // pred_region
        %s1790 = smul.u32 %s23, 2
        %s1791 = sadd.s32 %s1790, %s24
      $region52: #{bottleneck_forward.5} parent=43 // pred_fallthru
        _
    $region44: #{bottleneck_forward.5} parent=5 // pred_fallthru
      _
    %p1792 = scmp.le.s32.totalorder 2, %s14
    // Predicated region
    $region53: #{bottleneck_forward.5} parent=5 // pred_check
      %p1793 = pneg %p1792
    $region54: #{bottleneck_forward.5} parent=5 // pred_check_branch
      %1795 = sbr.rel (%p1793) target = $region56
    $region55: #{bottleneck_forward.5} parent=5 // pred_region
      %s1796 = ssub.s32 %s14, 2
      // Predicated region
      $region57: #{bottleneck_forward.5} parent=55 // pred_check
        %p1797 = pneg %p222
      $region58: #{bottleneck_forward.5} parent=55 // pred_check_branch
        %1799 = sbr.rel (%p1797) target = $region60
      $region59: #{bottleneck_forward.5} parent=55 // pred_region
        %s1800 = smul.u32 %s25, 2
        %s1801 = sadd.s32 %s1800, %s26
        %s1802 = smul.u32 16, %s1801
        %p1803 = scmp.lt.s32.totalorder %s1802, 63
        %s1804 = scalar_select %p1803, %s1802, 63
        %s1805 = smul.addr %s1804, 4
        %s1806 = scalar_lea.vmem %s6, %s1805
      $region60: #{bottleneck_forward.5} parent=55 // pred_fallthru
        _
      // Predicated region
      $region61: #{bottleneck_forward.5} parent=55 // pred_check
        %p1807 = pneg %p252
      $region62: #{bottleneck_forward.5} parent=55 // pred_check_branch
        %1809 = sbr.rel (%p1807) target = $region64
      $region63: #{bottleneck_forward.5} parent=55 // pred_region
        %s1810 = smul.u32 %s25, 2
        %s1811 = sadd.s32 %s1810, %s26
        %p1812 = scmp.lt.s32.totalorder %s1811, 3
        %s1813 = scalar_select %p1812, %s1811, 3
        %s1814 = smul.addr %s1813, 2
        %s1815 = scalar_lea.vmem %s7, %s1814
      $region64: #{bottleneck_forward.5} parent=55 // pred_fallthru
        _
    $region56: #{bottleneck_forward.5} parent=5 // pred_fallthru
      _
  $region6: #{bottleneck_forward.5} parent=0 // loop_footer
    %s18 = sadd.s32 1, %s14
  $region7: #{bottleneck_forward.5} parent=0 // loop_footer_branch
    %13 = sbr.rel target = $region3
  $region8: #{bottleneck_forward.5} parent=0 // loop_exit
    _

</llo_original>
